<compile_context>
chip_gen: v7x
topology: tpu7x:2x2x1
jax: 0.10.0
libtpu: 0.0.40
codegen_flags: <defaults>
</compile_context>

<pallas_src>
import math
from functools import partial

import jax
import jax.numpy as jnp
from jax import lax
from jax.experimental import pallas as pl
from jax.experimental.pallas import tpu as pltpu


# ----------------------------- kernel ---------------------------------------


def _layernorm(x, gamma, beta, eps=1e-5):
    mu = jnp.mean(x, axis=-1, keepdims=True)
    xc = x - mu
    var = jnp.mean(xc * xc, axis=-1, keepdims=True)
    return xc * lax.rsqrt(var + eps) * gamma + beta


def fused_encoder_kernel(num_layers, heads, head_dim, batch, seq_len,
                         emb_ref,
                         wqkv_ref, wo_ref, bo_ref,
                         g1_ref, b1_ref,
                         w1_ref, bf1_ref, w2_ref, bf2_ref,
                         g2_ref, b2_ref,
                         wf_ref, bfc_ref,
                         out_ref):
    embed = heads * head_dim
    rows = batch * seq_len

    x = emb_ref[...]                                            # (N*L, E) f32

    for l in range(num_layers):                                 # static unroll
        # ---- fused Q|K|V projection: one (rows, E) @ (E, 3E) MXU pass.
        #      attention scale 1/sqrt(embed_size) is folded into the Q columns.
        qkv = jnp.dot(x.astype(jnp.bfloat16), wqkv_ref[l],
                      preferred_element_type=jnp.float32)       # (rows, 3E)
        q3 = qkv[:, :embed].reshape(batch, seq_len, embed)
        k3 = qkv[:, embed:2 * embed].reshape(batch, seq_len, embed)
        v3 = qkv[:, 2 * embed:].reshape(batch, seq_len, embed)

        # Per-head attention, batched over N with single-batch-dim 3-D einsums.
        heads_out = []
        for h in range(heads):                                  # static
            sl = slice(h * head_dim, (h + 1) * head_dim)
            qh = q3[:, :, sl].astype(jnp.bfloat16)              # (N, L, D)
            kh = k3[:, :, sl].astype(jnp.bfloat16)
            vh = v3[:, :, sl].astype(jnp.bfloat16)
            e = jnp.einsum('nqd,nkd->nqk', qh, kh,
                           preferred_element_type=jnp.float32)  # (N, L, L)
            e = e - jnp.max(e, axis=-1, keepdims=True)
            p = jnp.exp(e)
            att = p * pl.reciprocal(jnp.sum(p, axis=-1, keepdims=True), approx=True)
            heads_out.append(
                jnp.einsum('nqk,nkd->nqd', att.astype(jnp.bfloat16), vh,
                           preferred_element_type=jnp.float32))  # (N, L, D)
        att_cat = jnp.concatenate(heads_out, axis=-1).reshape(rows, embed)

        # single full-K output projection (fc_out) + bias
        att_out = jnp.dot(att_cat.astype(jnp.bfloat16), wo_ref[l],
                          preferred_element_type=jnp.float32) + bo_ref[l]

        # residual + norm1 (dropout == identity at inference)
        x1 = _layernorm(att_out + x, g1_ref[l], b1_ref[l])

        # feed-forward: Linear -> ReLU -> Linear
        h1 = jnp.dot(x1.astype(jnp.bfloat16), w1_ref[l],
                     preferred_element_type=jnp.float32) + bf1_ref[l]
        h1 = jnp.maximum(h1, 0.0)
        ff = jnp.dot(h1.astype(jnp.bfloat16), w2_ref[l],
                     preferred_element_type=jnp.float32) + bf2_ref[l]

        # residual + norm2 (dropout == identity)
        x = _layernorm(ff + x1, g2_ref[l], b2_ref[l])

    # ---- classifier head: mean-pool over seq, fc_out1, exact softmax
    pooled = jnp.sum(x.reshape(batch, seq_len, embed), axis=1) * (1.0 / seq_len)
    logits = jnp.dot(pooled.astype(jnp.bfloat16), wf_ref[...],
                     preferred_element_type=jnp.float32) + bfc_ref[...]
    z = logits - jnp.max(logits, axis=-1, keepdims=True)
    pz = jnp.exp(z)
    out_ref[...] = pz / jnp.sum(pz, axis=-1, keepdims=True)     # rows sum to 1


# ----------------------------- wrapper ---------------------------------------


def _block_diag(w, heads):
    """Expand the shared (D, D) per-head projection into a block-diagonal (E, E)."""
    d = w.shape[0]
    e = d * heads
    bd = jnp.zeros((e, e), jnp.float32)
    for h in range(heads):
        bd = bd.at[h * d:(h + 1) * d, h * d:(h + 1) * d].set(w)
    return bd


def _prepare_stacked_weights(params, heads):
    """Stack per-layer weights along a leading layer axis (built once, trace-time)."""
    embed = params["word_emb"].shape[1]
    scale = 1.0 / math.sqrt(embed)          # reference scales scores by sqrt(embed_size)
    layers = params["layers"]

    # Fused Q|K|V block-diagonal weight (num_layers, E, 3E), scale folded into Q.
    # TODO(synk): at scale this expansion ships heads^2 x more attention-weight bytes
    # per layer (matters on bandwidth-poor v5e); ship the shared (D, D) weight instead.
    wqkv = jnp.stack([
        jnp.concatenate([_block_diag(lp["wqT"], heads) * scale,
                         _block_diag(lp["wkT"], heads),
                         _block_diag(lp["wvT"], heads)], axis=1)
        for lp in layers]).astype(jnp.bfloat16)

    def stack(name, dtype=jnp.float32):
        return jnp.stack([lp[name] for lp in layers]).astype(dtype)

    return (wqkv,
            stack("woT", jnp.bfloat16), stack("bo"),
            stack("g1"), stack("b1"),
            stack("w1T", jnp.bfloat16), stack("bf1"),
            stack("w2T", jnp.bfloat16), stack("bf2"),
            stack("g2"), stack("b2"))


def encoder_forward(tokens, params, heads):
    """Full EncoderMulticlass.forward (returned value only)."""
    n, seq_len = tokens.shape
    embed = params["word_emb"].shape[1]
    head_dim = embed // heads
    num_layers = len(params["layers"])
    n_classes = params["wfT"].shape[1]

    # embedding lookups are plain-JAX glue (gathers); dropout == identity
    word = jnp.take(params["word_emb"], tokens, axis=0)                   # (N, L, E)
    pos = jnp.take(params["pos_emb"], jnp.arange(seq_len, dtype=jnp.int32), axis=0)
    emb = (word + pos[None, :, :]).astype(jnp.float32).reshape(n * seq_len, embed)

    stacked = _prepare_stacked_weights(params, heads)

    kern = partial(fused_encoder_kernel, num_layers, heads, head_dim, n, seq_len)

    # Grid-less call: all weights (~100 KB) + the (N*L, E) activation slab are
    # VMEM-resident; layers are unrolled inside the kernel.
    # TODO(synk): once stacked weights approach the VMEM budget (v7x: 64 MiB),
    # reintroduce grid=(num_layers,) weight pipelining and add a "parallel" batch
    # grid axis to use both v7x TensorCores.
    return pl.pallas_call(
        kern,
        out_shape=jax.ShapeDtypeStruct((n, n_classes), jnp.float32),
        compiler_params=pltpu.CompilerParams(vmem_limit_bytes=32 * 1024 * 1024),
    )(emb, *stacked, params["wfT"].astype(jnp.bfloat16), params["bf"])


# ----------------------------- init ------------------------------------------


def init_params(key, vocab_size, embed_size, num_layers, heads,
                forward_expansion, max_length):
    d = embed_size // heads
    fe = forward_expansion * embed_size

    counter = [0]

    def rnd(shape, scale=0.1):
        k = jax.random.fold_in(key, counter[0])
        counter[0] += 1
        return (scale * jax.random.normal(k, shape)).astype(jnp.float32)

    # nn.Embedding(padding_idx=0) -> row 0 zeroed
    word_emb = rnd((vocab_size, embed_size)).at[0].set(0.0)
    pos_emb = rnd((max_length, embed_size)).at[0].set(0.0)

    layers = []
    for _ in range(num_layers):
        layers.append(dict(
            wvT=rnd((d, d)),
            wkT=rnd((d, d)),
            wqT=rnd((d, d)),
            woT=rnd((embed_size, embed_size)),
            bo=rnd((1, embed_size)),
            g1=jnp.ones((1, embed_size), jnp.float32),
            b1=jnp.zeros((1, embed_size), jnp.float32),
            w1T=rnd((embed_size, fe)),
            bf1=rnd((1, fe)),
            w2T=rnd((fe, embed_size)),
            bf2=rnd((1, embed_size)),
            g2=jnp.ones((1, embed_size), jnp.float32),
            b2=jnp.zeros((1, embed_size), jnp.float32),
        ))

    wfT = rnd((embed_size, 128))   # fc_out1 weight, pre-transposed
    bf = rnd((1, 128))             # fc_out1 bias

    return dict(word_emb=word_emb, pos_emb=pos_emb, layers=layers, wfT=wfT, bf=bf)


# ----------------------------- main ------------------------------------------


if __name__ == "__main__":
    vocab_size = 50
    embed_size = 32
    num_layers = 2
    heads = 4
    forward_expansion = 4
    max_length = 16
    N, seq_len = 2, 8

    key = jax.random.PRNGKey(0)
    kp, kx = jax.random.split(key)
    params = init_params(kp, vocab_size, embed_size, num_layers, heads,
                         forward_expansion, max_length)
    tokens = jax.random.randint(kx, (N, seq_len), 0, vocab_size, dtype=jnp.int32)

    out = encoder_forward(tokens, params, heads)
    out = jax.block_until_ready(out)

    assert out.shape == (N, 128)
    assert bool(jnp.all(jnp.isfinite(out)))
    row_sums = jnp.sum(out, axis=1)
    assert bool(jnp.all(jnp.abs(row_sums - 1.0) < 1e-4))
    print("KERNEL_OK")
</pallas_src>

<mosaic_0001>
module attributes {stable_mosaic.version = 11 : i64} {
  func.func @fused_encoder_kernel(%arg0: memref<16x32xf32, #tpu.memory_space<vmem>>, %arg1: memref<2x32x96xbf16, #tpu.memory_space<vmem>>, %arg2: memref<2x32x32xbf16, #tpu.memory_space<vmem>>, %arg3: memref<2x1x32xf32, #tpu.memory_space<vmem>>, %arg4: memref<2x1x32xf32, #tpu.memory_space<vmem>>, %arg5: memref<2x1x32xf32, #tpu.memory_space<vmem>>, %arg6: memref<2x32x128xbf16, #tpu.memory_space<vmem>>, %arg7: memref<2x1x128xf32, #tpu.memory_space<vmem>>, %arg8: memref<2x128x32xbf16, #tpu.memory_space<vmem>>, %arg9: memref<2x1x32xf32, #tpu.memory_space<vmem>>, %arg10: memref<2x1x32xf32, #tpu.memory_space<vmem>>, %arg11: memref<2x1x32xf32, #tpu.memory_space<vmem>>, %arg12: memref<32x128xbf16, #tpu.memory_space<vmem>>, %arg13: memref<1x128xf32, #tpu.memory_space<vmem>>, %arg14: memref<2x128xf32, #tpu.memory_space<vmem>>) attributes {dimension_semantics = [], scalar_prefetch = 0 : i64, scratch_operands = 0 : i64, tpu.core_type = #tpu.core_type<tc>} {
    %c0 = arith.constant 0 : index
    %c0_0 = arith.constant 0 : index
    %0 = vector.load %arg0[%c0, %c0_0] : memref<16x32xf32, #tpu.memory_space<vmem>>, vector<16x32xf32>
    %1 = arith.truncf %0 : vector<16x32xf32> to vector<16x32xbf16>
    %c0_1 = arith.constant 0 : index
    %c0_2 = arith.constant 0 : index
    %c0_3 = arith.constant 0 : index
    %2 = vector.load %arg1[%c0_1, %c0_2, %c0_3] : memref<2x32x96xbf16, #tpu.memory_space<vmem>>, vector<1x32x96xbf16>
    %3 = vector.shape_cast %2 : vector<1x32x96xbf16> to vector<32x96xbf16>
    %cst = arith.constant dense<0.000000e+00> : vector<16x96xf32>
    %4 = tpu.matmul %1, %3, %cst {dimension_numbers = #tpu.dot_dimension_numbers<[1], [0], [0], [1], [0, 0, 1, 1], [], []>} : vector<16x32xbf16>, vector<32x96xbf16>, vector<16x96xf32> -> vector<16x96xf32>
    %5 = vector.extract_strided_slice %4 {offsets = [0, 0], sizes = [16, 32], strides = [1, 1]} : vector<16x96xf32> to vector<16x32xf32>
    %6 = vector.shape_cast %5 : vector<16x32xf32> to vector<2x8x32xf32>
    %7 = vector.extract_strided_slice %4 {offsets = [0, 32], sizes = [16, 32], strides = [1, 1]} : vector<16x96xf32> to vector<16x32xf32>
    %8 = vector.shape_cast %7 : vector<16x32xf32> to vector<2x8x32xf32>
    %9 = vector.extract_strided_slice %4 {offsets = [0, 64], sizes = [16, 32], strides = [1, 1]} : vector<16x96xf32> to vector<16x32xf32>
    %10 = vector.shape_cast %9 : vector<16x32xf32> to vector<2x8x32xf32>
    %11 = vector.extract_strided_slice %6 {offsets = [0, 0, 0], sizes = [2, 8, 8], strides = [1, 1, 1]} : vector<2x8x32xf32> to vector<2x8x8xf32>
    %12 = arith.truncf %11 : vector<2x8x8xf32> to vector<2x8x8xbf16>
    %13 = vector.extract_strided_slice %8 {offsets = [0, 0, 0], sizes = [2, 8, 8], strides = [1, 1, 1]} : vector<2x8x32xf32> to vector<2x8x8xf32>
    %14 = arith.truncf %13 : vector<2x8x8xf32> to vector<2x8x8xbf16>
    %15 = vector.extract_strided_slice %10 {offsets = [0, 0, 0], sizes = [2, 8, 8], strides = [1, 1, 1]} : vector<2x8x32xf32> to vector<2x8x8xf32>
    %16 = arith.truncf %15 : vector<2x8x8xf32> to vector<2x8x8xbf16>
    "tpu.trace_start"() <{level = 10 : i32, message = "nqd,nkd->nqk"}> : () -> ()
    %cst_4 = arith.constant dense<0.000000e+00> : vector<2x8x8xf32>
    %17 = tpu.matmul %12, %14, %cst_4 {dimension_numbers = #tpu.dot_dimension_numbers<[2], [2], [1], [1], [0, 0, 0, 1, 1, 1], [0], [0]>} : vector<2x8x8xbf16>, vector<2x8x8xbf16>, vector<2x8x8xf32> -> vector<2x8x8xf32>
    "tpu.trace_stop"() : () -> ()
    %cst_5 = arith.constant dense<0xFF800000> : vector<2x8xf32>
    %18 = vector.multi_reduction <maximumf>, %17, %cst_5 [2] : vector<2x8x8xf32> to vector<2x8xf32>
    %19 = vector.shape_cast %18 : vector<2x8xf32> to vector<2x8x1xf32>
    %20 = vector.broadcast %19 : vector<2x8x1xf32> to vector<2x8x8xf32>
    %21 = arith.subf %17, %20 : vector<2x8x8xf32>
    %22 = math.exp %21 : vector<2x8x8xf32>
    %cst_6 = arith.constant dense<0.000000e+00> : vector<2x8xf32>
    %23 = vector.multi_reduction <add>, %22, %cst_6 [2] : vector<2x8x8xf32> to vector<2x8xf32>
    %24 = vector.shape_cast %23 : vector<2x8xf32> to vector<2x8x1xf32>
    %25 = tpu.reciprocal %24 {approx = true} : vector<2x8x1xf32> -> vector<2x8x1xf32>
    %26 = vector.broadcast %25 : vector<2x8x1xf32> to vector<2x8x8xf32>
    %27 = arith.mulf %22, %26 : vector<2x8x8xf32>
    %28 = arith.truncf %27 : vector<2x8x8xf32> to vector<2x8x8xbf16>
    "tpu.trace_start"() <{level = 10 : i32, message = "nqk,nkd->nqd"}> : () -> ()
    %cst_7 = arith.constant dense<0.000000e+00> : vector<2x8x8xf32>
    %29 = tpu.matmul %28, %16, %cst_7 {dimension_numbers = #tpu.dot_dimension_numbers<[2], [1], [1], [2], [0, 0, 0, 1, 1, 2], [0], [0]>} : vector<2x8x8xbf16>, vector<2x8x8xbf16>, vector<2x8x8xf32> -> vector<2x8x8xf32>
    "tpu.trace_stop"() : () -> ()
    %30 = vector.extract_strided_slice %6 {offsets = [0, 0, 8], sizes = [2, 8, 8], strides = [1, 1, 1]} : vector<2x8x32xf32> to vector<2x8x8xf32>
    %31 = arith.truncf %30 : vector<2x8x8xf32> to vector<2x8x8xbf16>
    %32 = vector.extract_strided_slice %8 {offsets = [0, 0, 8], sizes = [2, 8, 8], strides = [1, 1, 1]} : vector<2x8x32xf32> to vector<2x8x8xf32>
    %33 = arith.truncf %32 : vector<2x8x8xf32> to vector<2x8x8xbf16>
    %34 = vector.extract_strided_slice %10 {offsets = [0, 0, 8], sizes = [2, 8, 8], strides = [1, 1, 1]} : vector<2x8x32xf32> to vector<2x8x8xf32>
    %35 = arith.truncf %34 : vector<2x8x8xf32> to vector<2x8x8xbf16>
    "tpu.trace_start"() <{level = 10 : i32, message = "nqd,nkd->nqk"}> : () -> ()
    %cst_8 = arith.constant dense<0.000000e+00> : vector<2x8x8xf32>
    %36 = tpu.matmul %31, %33, %cst_8 {dimension_numbers = #tpu.dot_dimension_numbers<[2], [2], [1], [1], [0, 0, 0, 1, 1, 1], [0], [0]>} : vector<2x8x8xbf16>, vector<2x8x8xbf16>, vector<2x8x8xf32> -> vector<2x8x8xf32>
    "tpu.trace_stop"() : () -> ()
    %cst_9 = arith.constant dense<0xFF800000> : vector<2x8xf32>
    %37 = vector.multi_reduction <maximumf>, %36, %cst_9 [2] : vector<2x8x8xf32> to vector<2x8xf32>
    %38 = vector.shape_cast %37 : vector<2x8xf32> to vector<2x8x1xf32>
    %39 = vector.broadcast %38 : vector<2x8x1xf32> to vector<2x8x8xf32>
    %40 = arith.subf %36, %39 : vector<2x8x8xf32>
    %41 = math.exp %40 : vector<2x8x8xf32>
    %cst_10 = arith.constant dense<0.000000e+00> : vector<2x8xf32>
    %42 = vector.multi_reduction <add>, %41, %cst_10 [2] : vector<2x8x8xf32> to vector<2x8xf32>
    %43 = vector.shape_cast %42 : vector<2x8xf32> to vector<2x8x1xf32>
    %44 = tpu.reciprocal %43 {approx = true} : vector<2x8x1xf32> -> vector<2x8x1xf32>
    %45 = vector.broadcast %44 : vector<2x8x1xf32> to vector<2x8x8xf32>
    %46 = arith.mulf %41, %45 : vector<2x8x8xf32>
    %47 = arith.truncf %46 : vector<2x8x8xf32> to vector<2x8x8xbf16>
    "tpu.trace_start"() <{level = 10 : i32, message = "nqk,nkd->nqd"}> : () -> ()
    %cst_11 = arith.constant dense<0.000000e+00> : vector<2x8x8xf32>
    %48 = tpu.matmul %47, %35, %cst_11 {dimension_numbers = #tpu.dot_dimension_numbers<[2], [1], [1], [2], [0, 0, 0, 1, 1, 2], [0], [0]>} : vector<2x8x8xbf16>, vector<2x8x8xbf16>, vector<2x8x8xf32> -> vector<2x8x8xf32>
    "tpu.trace_stop"() : () -> ()
    %49 = vector.extract_strided_slice %6 {offsets = [0, 0, 16], sizes = [2, 8, 8], strides = [1, 1, 1]} : vector<2x8x32xf32> to vector<2x8x8xf32>
    %50 = arith.truncf %49 : vector<2x8x8xf32> to vector<2x8x8xbf16>
    %51 = vector.extract_strided_slice %8 {offsets = [0, 0, 16], sizes = [2, 8, 8], strides = [1, 1, 1]} : vector<2x8x32xf32> to vector<2x8x8xf32>
    %52 = arith.truncf %51 : vector<2x8x8xf32> to vector<2x8x8xbf16>
    %53 = vector.extract_strided_slice %10 {offsets = [0, 0, 16], sizes = [2, 8, 8], strides = [1, 1, 1]} : vector<2x8x32xf32> to vector<2x8x8xf32>
    %54 = arith.truncf %53 : vector<2x8x8xf32> to vector<2x8x8xbf16>
    "tpu.trace_start"() <{level = 10 : i32, message = "nqd,nkd->nqk"}> : () -> ()
    %cst_12 = arith.constant dense<0.000000e+00> : vector<2x8x8xf32>
    %55 = tpu.matmul %50, %52, %cst_12 {dimension_numbers = #tpu.dot_dimension_numbers<[2], [2], [1], [1], [0, 0, 0, 1, 1, 1], [0], [0]>} : vector<2x8x8xbf16>, vector<2x8x8xbf16>, vector<2x8x8xf32> -> vector<2x8x8xf32>
    "tpu.trace_stop"() : () -> ()
    %cst_13 = arith.constant dense<0xFF800000> : vector<2x8xf32>
    %56 = vector.multi_reduction <maximumf>, %55, %cst_13 [2] : vector<2x8x8xf32> to vector<2x8xf32>
    %57 = vector.shape_cast %56 : vector<2x8xf32> to vector<2x8x1xf32>
    %58 = vector.broadcast %57 : vector<2x8x1xf32> to vector<2x8x8xf32>
    %59 = arith.subf %55, %58 : vector<2x8x8xf32>
    %60 = math.exp %59 : vector<2x8x8xf32>
    %cst_14 = arith.constant dense<0.000000e+00> : vector<2x8xf32>
    %61 = vector.multi_reduction <add>, %60, %cst_14 [2] : vector<2x8x8xf32> to vector<2x8xf32>
    %62 = vector.shape_cast %61 : vector<2x8xf32> to vector<2x8x1xf32>
    %63 = tpu.reciprocal %62 {approx = true} : vector<2x8x1xf32> -> vector<2x8x1xf32>
    %64 = vector.broadcast %63 : vector<2x8x1xf32> to vector<2x8x8xf32>
    %65 = arith.mulf %60, %64 : vector<2x8x8xf32>
    %66 = arith.truncf %65 : vector<2x8x8xf32> to vector<2x8x8xbf16>
    "tpu.trace_start"() <{level = 10 : i32, message = "nqk,nkd->nqd"}> : () -> ()
    %cst_15 = arith.constant dense<0.000000e+00> : vector<2x8x8xf32>
    %67 = tpu.matmul %66, %54, %cst_15 {dimension_numbers = #tpu.dot_dimension_numbers<[2], [1], [1], [2], [0, 0, 0, 1, 1, 2], [0], [0]>} : vector<2x8x8xbf16>, vector<2x8x8xbf16>, vector<2x8x8xf32> -> vector<2x8x8xf32>
    "tpu.trace_stop"() : () -> ()
    %68 = vector.extract_strided_slice %6 {offsets = [0, 0, 24], sizes = [2, 8, 8], strides = [1, 1, 1]} : vector<2x8x32xf32> to vector<2x8x8xf32>
    %69 = arith.truncf %68 : vector<2x8x8xf32> to vector<2x8x8xbf16>
    %70 = vector.extract_strided_slice %8 {offsets = [0, 0, 24], sizes = [2, 8, 8], strides = [1, 1, 1]} : vector<2x8x32xf32> to vector<2x8x8xf32>
    %71 = arith.truncf %70 : vector<2x8x8xf32> to vector<2x8x8xbf16>
    %72 = vector.extract_strided_slice %10 {offsets = [0, 0, 24], sizes = [2, 8, 8], strides = [1, 1, 1]} : vector<2x8x32xf32> to vector<2x8x8xf32>
    %73 = arith.truncf %72 : vector<2x8x8xf32> to vector<2x8x8xbf16>
    "tpu.trace_start"() <{level = 10 : i32, message = "nqd,nkd->nqk"}> : () -> ()
    %cst_16 = arith.constant dense<0.000000e+00> : vector<2x8x8xf32>
    %74 = tpu.matmul %69, %71, %cst_16 {dimension_numbers = #tpu.dot_dimension_numbers<[2], [2], [1], [1], [0, 0, 0, 1, 1, 1], [0], [0]>} : vector<2x8x8xbf16>, vector<2x8x8xbf16>, vector<2x8x8xf32> -> vector<2x8x8xf32>
    "tpu.trace_stop"() : () -> ()
    %cst_17 = arith.constant dense<0xFF800000> : vector<2x8xf32>
    %75 = vector.multi_reduction <maximumf>, %74, %cst_17 [2] : vector<2x8x8xf32> to vector<2x8xf32>
    %76 = vector.shape_cast %75 : vector<2x8xf32> to vector<2x8x1xf32>
    %77 = vector.broadcast %76 : vector<2x8x1xf32> to vector<2x8x8xf32>
    %78 = arith.subf %74, %77 : vector<2x8x8xf32>
    %79 = math.exp %78 : vector<2x8x8xf32>
    %cst_18 = arith.constant dense<0.000000e+00> : vector<2x8xf32>
    %80 = vector.multi_reduction <add>, %79, %cst_18 [2] : vector<2x8x8xf32> to vector<2x8xf32>
    %81 = vector.shape_cast %80 : vector<2x8xf32> to vector<2x8x1xf32>
    %82 = tpu.reciprocal %81 {approx = true} : vector<2x8x1xf32> -> vector<2x8x1xf32>
    %83 = vector.broadcast %82 : vector<2x8x1xf32> to vector<2x8x8xf32>
    %84 = arith.mulf %79, %83 : vector<2x8x8xf32>
    %85 = arith.truncf %84 : vector<2x8x8xf32> to vector<2x8x8xbf16>
    "tpu.trace_start"() <{level = 10 : i32, message = "nqk,nkd->nqd"}> : () -> ()
    %cst_19 = arith.constant dense<0.000000e+00> : vector<2x8x8xf32>
    %86 = tpu.matmul %85, %73, %cst_19 {dimension_numbers = #tpu.dot_dimension_numbers<[2], [1], [1], [2], [0, 0, 0, 1, 1, 2], [0], [0]>} : vector<2x8x8xbf16>, vector<2x8x8xbf16>, vector<2x8x8xf32> -> vector<2x8x8xf32>
    "tpu.trace_stop"() : () -> ()
    %87 = tpu.concatenate %29, %48, %67, %86 in 2 : vector<2x8x8xf32>, vector<2x8x8xf32>, vector<2x8x8xf32>, vector<2x8x8xf32> -> vector<2x8x32xf32>
    %88 = vector.shape_cast %87 : vector<2x8x32xf32> to vector<16x32xf32>
    %89 = arith.truncf %88 : vector<16x32xf32> to vector<16x32xbf16>
    %c0_20 = arith.constant 0 : index
    %c0_21 = arith.constant 0 : index
    %c0_22 = arith.constant 0 : index
    %90 = vector.load %arg2[%c0_20, %c0_21, %c0_22] : memref<2x32x32xbf16, #tpu.memory_space<vmem>>, vector<1x32x32xbf16>
    %91 = vector.shape_cast %90 : vector<1x32x32xbf16> to vector<32x32xbf16>
    %cst_23 = arith.constant dense<0.000000e+00> : vector<16x32xf32>
    %92 = tpu.matmul %89, %91, %cst_23 {dimension_numbers = #tpu.dot_dimension_numbers<[1], [0], [0], [1], [0, 0, 1, 1], [], []>} : vector<16x32xbf16>, vector<32x32xbf16>, vector<16x32xf32> -> vector<16x32xf32>
    %c0_24 = arith.constant 0 : index
    %c0_25 = arith.constant 0 : index
    %c0_26 = arith.constant 0 : index
    %93 = vector.load %arg3[%c0_24, %c0_25, %c0_26] : memref<2x1x32xf32, #tpu.memory_space<vmem>>, vector<1x1x32xf32>
    %94 = vector.shape_cast %93 : vector<1x1x32xf32> to vector<1x32xf32>
    %95 = vector.broadcast %94 : vector<1x32xf32> to vector<16x32xf32>
    %96 = arith.addf %92, %95 : vector<16x32xf32>
    %97 = arith.addf %96, %0 : vector<16x32xf32>
    %c0_27 = arith.constant 0 : index
    %c0_28 = arith.constant 0 : index
    %c0_29 = arith.constant 0 : index
    %98 = vector.load %arg4[%c0_27, %c0_28, %c0_29] : memref<2x1x32xf32, #tpu.memory_space<vmem>>, vector<1x1x32xf32>
    %99 = vector.shape_cast %98 : vector<1x1x32xf32> to vector<1x32xf32>
    %c0_30 = arith.constant 0 : index
    %c0_31 = arith.constant 0 : index
    %c0_32 = arith.constant 0 : index
    %100 = vector.load %arg5[%c0_30, %c0_31, %c0_32] : memref<2x1x32xf32, #tpu.memory_space<vmem>>, vector<1x1x32xf32>
    %101 = vector.shape_cast %100 : vector<1x1x32xf32> to vector<1x32xf32>
    %cst_33 = arith.constant dense<0.000000e+00> : vector<16xf32>
    %102 = vector.multi_reduction <add>, %97, %cst_33 [1] : vector<16x32xf32> to vector<16xf32>
    %103 = vector.shape_cast %102 : vector<16xf32> to vector<16x1xf32>
    %cst_34 = arith.constant 3.200000e+01 : f32
    %104 = vector.broadcast %cst_34 : f32 to vector<16x1xf32>
    %105 = arith.divf %103, %104 : vector<16x1xf32>
    %106 = vector.broadcast %105 : vector<16x1xf32> to vector<16x32xf32>
    %107 = arith.subf %97, %106 : vector<16x32xf32>
    %108 = arith.mulf %107, %107 : vector<16x32xf32>
    %cst_35 = arith.constant dense<0.000000e+00> : vector<16xf32>
    %109 = vector.multi_reduction <add>, %108, %cst_35 [1] : vector<16x32xf32> to vector<16xf32>
    %110 = vector.shape_cast %109 : vector<16xf32> to vector<16x1xf32>
    %cst_36 = arith.constant 3.200000e+01 : f32
    %111 = vector.broadcast %cst_36 : f32 to vector<16x1xf32>
    %112 = arith.divf %110, %111 : vector<16x1xf32>
    %cst_37 = arith.constant 9.99999974E-6 : f32
    %113 = vector.broadcast %cst_37 : f32 to vector<16x1xf32>
    %114 = arith.addf %112, %113 : vector<16x1xf32>
    %115 = math.rsqrt %114 : vector<16x1xf32>
    %116 = vector.broadcast %115 : vector<16x1xf32> to vector<16x32xf32>
    %117 = arith.mulf %107, %116 : vector<16x32xf32>
    %118 = vector.broadcast %99 : vector<1x32xf32> to vector<16x32xf32>
    %119 = arith.mulf %117, %118 : vector<16x32xf32>
    %120 = vector.broadcast %101 : vector<1x32xf32> to vector<16x32xf32>
    %121 = arith.addf %119, %120 : vector<16x32xf32>
    %122 = arith.truncf %121 : vector<16x32xf32> to vector<16x32xbf16>
    %c0_38 = arith.constant 0 : index
    %c0_39 = arith.constant 0 : index
    %c0_40 = arith.constant 0 : index
    %123 = vector.load %arg6[%c0_38, %c0_39, %c0_40] : memref<2x32x128xbf16, #tpu.memory_space<vmem>>, vector<1x32x128xbf16>
    %124 = vector.shape_cast %123 : vector<1x32x128xbf16> to vector<32x128xbf16>
    %cst_41 = arith.constant dense<0.000000e+00> : vector<16x128xf32>
    %125 = tpu.matmul %122, %124, %cst_41 {dimension_numbers = #tpu.dot_dimension_numbers<[1], [0], [0], [1], [0, 0, 1, 1], [], []>} : vector<16x32xbf16>, vector<32x128xbf16>, vector<16x128xf32> -> vector<16x128xf32>
    %c0_42 = arith.constant 0 : index
    %c0_43 = arith.constant 0 : index
    %c0_44 = arith.constant 0 : index
    %126 = vector.load %arg7[%c0_42, %c0_43, %c0_44] : memref<2x1x128xf32, #tpu.memory_space<vmem>>, vector<1x1x128xf32>
    %127 = vector.shape_cast %126 : vector<1x1x128xf32> to vector<1x128xf32>
    %128 = vector.broadcast %127 : vector<1x128xf32> to vector<16x128xf32>
    %129 = arith.addf %125, %128 : vector<16x128xf32>
    %cst_45 = arith.constant 0.000000e+00 : f32
    %130 = vector.broadcast %cst_45 : f32 to vector<16x128xf32>
    %131 = arith.maximumf %129, %130 : vector<16x128xf32>
    %132 = arith.truncf %131 : vector<16x128xf32> to vector<16x128xbf16>
    %c0_46 = arith.constant 0 : index
    %c0_47 = arith.constant 0 : index
    %c0_48 = arith.constant 0 : index
    %133 = vector.load %arg8[%c0_46, %c0_47, %c0_48] : memref<2x128x32xbf16, #tpu.memory_space<vmem>>, vector<1x128x32xbf16>
    %134 = vector.shape_cast %133 : vector<1x128x32xbf16> to vector<128x32xbf16>
    %cst_49 = arith.constant dense<0.000000e+00> : vector<16x32xf32>
    %135 = tpu.matmul %132, %134, %cst_49 {dimension_numbers = #tpu.dot_dimension_numbers<[1], [0], [0], [1], [0, 0, 1, 1], [], []>} : vector<16x128xbf16>, vector<128x32xbf16>, vector<16x32xf32> -> vector<16x32xf32>
    %c0_50 = arith.constant 0 : index
    %c0_51 = arith.constant 0 : index
    %c0_52 = arith.constant 0 : index
    %136 = vector.load %arg9[%c0_50, %c0_51, %c0_52] : memref<2x1x32xf32, #tpu.memory_space<vmem>>, vector<1x1x32xf32>
    %137 = vector.shape_cast %136 : vector<1x1x32xf32> to vector<1x32xf32>
    %138 = vector.broadcast %137 : vector<1x32xf32> to vector<16x32xf32>
    %139 = arith.addf %135, %138 : vector<16x32xf32>
    %140 = arith.addf %139, %121 : vector<16x32xf32>
    %c0_53 = arith.constant 0 : index
    %c0_54 = arith.constant 0 : index
    %c0_55 = arith.constant 0 : index
    %141 = vector.load %arg10[%c0_53, %c0_54, %c0_55] : memref<2x1x32xf32, #tpu.memory_space<vmem>>, vector<1x1x32xf32>
    %142 = vector.shape_cast %141 : vector<1x1x32xf32> to vector<1x32xf32>
    %c0_56 = arith.constant 0 : index
    %c0_57 = arith.constant 0 : index
    %c0_58 = arith.constant 0 : index
    %143 = vector.load %arg11[%c0_56, %c0_57, %c0_58] : memref<2x1x32xf32, #tpu.memory_space<vmem>>, vector<1x1x32xf32>
    %144 = vector.shape_cast %143 : vector<1x1x32xf32> to vector<1x32xf32>
    %cst_59 = arith.constant dense<0.000000e+00> : vector<16xf32>
    %145 = vector.multi_reduction <add>, %140, %cst_59 [1] : vector<16x32xf32> to vector<16xf32>
    %146 = vector.shape_cast %145 : vector<16xf32> to vector<16x1xf32>
    %cst_60 = arith.constant 3.200000e+01 : f32
    %147 = vector.broadcast %cst_60 : f32 to vector<16x1xf32>
    %148 = arith.divf %146, %147 : vector<16x1xf32>
    %149 = vector.broadcast %148 : vector<16x1xf32> to vector<16x32xf32>
    %150 = arith.subf %140, %149 : vector<16x32xf32>
    %151 = arith.mulf %150, %150 : vector<16x32xf32>
    %cst_61 = arith.constant dense<0.000000e+00> : vector<16xf32>
    %152 = vector.multi_reduction <add>, %151, %cst_61 [1] : vector<16x32xf32> to vector<16xf32>
    %153 = vector.shape_cast %152 : vector<16xf32> to vector<16x1xf32>
    %cst_62 = arith.constant 3.200000e+01 : f32
    %154 = vector.broadcast %cst_62 : f32 to vector<16x1xf32>
    %155 = arith.divf %153, %154 : vector<16x1xf32>
    %cst_63 = arith.constant 9.99999974E-6 : f32
    %156 = vector.broadcast %cst_63 : f32 to vector<16x1xf32>
    %157 = arith.addf %155, %156 : vector<16x1xf32>
    %158 = math.rsqrt %157 : vector<16x1xf32>
    %159 = vector.broadcast %158 : vector<16x1xf32> to vector<16x32xf32>
    %160 = arith.mulf %150, %159 : vector<16x32xf32>
    %161 = vector.broadcast %142 : vector<1x32xf32> to vector<16x32xf32>
    %162 = arith.mulf %160, %161 : vector<16x32xf32>
    %163 = vector.broadcast %144 : vector<1x32xf32> to vector<16x32xf32>
    %164 = arith.addf %162, %163 : vector<16x32xf32>
    %165 = arith.truncf %164 : vector<16x32xf32> to vector<16x32xbf16>
    %c1 = arith.constant 1 : index
    %c0_64 = arith.constant 0 : index
    %c0_65 = arith.constant 0 : index
    %166 = vector.load %arg1[%c1, %c0_64, %c0_65] : memref<2x32x96xbf16, #tpu.memory_space<vmem>>, vector<1x32x96xbf16>
    %167 = vector.shape_cast %166 : vector<1x32x96xbf16> to vector<32x96xbf16>
    %cst_66 = arith.constant dense<0.000000e+00> : vector<16x96xf32>
    %168 = tpu.matmul %165, %167, %cst_66 {dimension_numbers = #tpu.dot_dimension_numbers<[1], [0], [0], [1], [0, 0, 1, 1], [], []>} : vector<16x32xbf16>, vector<32x96xbf16>, vector<16x96xf32> -> vector<16x96xf32>
    %169 = vector.extract_strided_slice %168 {offsets = [0, 0], sizes = [16, 32], strides = [1, 1]} : vector<16x96xf32> to vector<16x32xf32>
    %170 = vector.shape_cast %169 : vector<16x32xf32> to vector<2x8x32xf32>
    %171 = vector.extract_strided_slice %168 {offsets = [0, 32], sizes = [16, 32], strides = [1, 1]} : vector<16x96xf32> to vector<16x32xf32>
    %172 = vector.shape_cast %171 : vector<16x32xf32> to vector<2x8x32xf32>
    %173 = vector.extract_strided_slice %168 {offsets = [0, 64], sizes = [16, 32], strides = [1, 1]} : vector<16x96xf32> to vector<16x32xf32>
    %174 = vector.shape_cast %173 : vector<16x32xf32> to vector<2x8x32xf32>
    %175 = vector.extract_strided_slice %170 {offsets = [0, 0, 0], sizes = [2, 8, 8], strides = [1, 1, 1]} : vector<2x8x32xf32> to vector<2x8x8xf32>
    %176 = arith.truncf %175 : vector<2x8x8xf32> to vector<2x8x8xbf16>
    %177 = vector.extract_strided_slice %172 {offsets = [0, 0, 0], sizes = [2, 8, 8], strides = [1, 1, 1]} : vector<2x8x32xf32> to vector<2x8x8xf32>
    %178 = arith.truncf %177 : vector<2x8x8xf32> to vector<2x8x8xbf16>
    %179 = vector.extract_strided_slice %174 {offsets = [0, 0, 0], sizes = [2, 8, 8], strides = [1, 1, 1]} : vector<2x8x32xf32> to vector<2x8x8xf32>
    %180 = arith.truncf %179 : vector<2x8x8xf32> to vector<2x8x8xbf16>
    "tpu.trace_start"() <{level = 10 : i32, message = "nqd,nkd->nqk"}> : () -> ()
    %cst_67 = arith.constant dense<0.000000e+00> : vector<2x8x8xf32>
    %181 = tpu.matmul %176, %178, %cst_67 {dimension_numbers = #tpu.dot_dimension_numbers<[2], [2], [1], [1], [0, 0, 0, 1, 1, 1], [0], [0]>} : vector<2x8x8xbf16>, vector<2x8x8xbf16>, vector<2x8x8xf32> -> vector<2x8x8xf32>
    "tpu.trace_stop"() : () -> ()
    %cst_68 = arith.constant dense<0xFF800000> : vector<2x8xf32>
    %182 = vector.multi_reduction <maximumf>, %181, %cst_68 [2] : vector<2x8x8xf32> to vector<2x8xf32>
    %183 = vector.shape_cast %182 : vector<2x8xf32> to vector<2x8x1xf32>
    %184 = vector.broadcast %183 : vector<2x8x1xf32> to vector<2x8x8xf32>
    %185 = arith.subf %181, %184 : vector<2x8x8xf32>
    %186 = math.exp %185 : vector<2x8x8xf32>
    %cst_69 = arith.constant dense<0.000000e+00> : vector<2x8xf32>
    %187 = vector.multi_reduction <add>, %186, %cst_69 [2] : vector<2x8x8xf32> to vector<2x8xf32>
    %188 = vector.shape_cast %187 : vector<2x8xf32> to vector<2x8x1xf32>
    %189 = tpu.reciprocal %188 {approx = true} : vector<2x8x1xf32> -> vector<2x8x1xf32>
    %190 = vector.broadcast %189 : vector<2x8x1xf32> to vector<2x8x8xf32>
    %191 = arith.mulf %186, %190 : vector<2x8x8xf32>
    %192 = arith.truncf %191 : vector<2x8x8xf32> to vector<2x8x8xbf16>
    "tpu.trace_start"() <{level = 10 : i32, message = "nqk,nkd->nqd"}> : () -> ()
    %cst_70 = arith.constant dense<0.000000e+00> : vector<2x8x8xf32>
    %193 = tpu.matmul %192, %180, %cst_70 {dimension_numbers = #tpu.dot_dimension_numbers<[2], [1], [1], [2], [0, 0, 0, 1, 1, 2], [0], [0]>} : vector<2x8x8xbf16>, vector<2x8x8xbf16>, vector<2x8x8xf32> -> vector<2x8x8xf32>
    "tpu.trace_stop"() : () -> ()
    %194 = vector.extract_strided_slice %170 {offsets = [0, 0, 8], sizes = [2, 8, 8], strides = [1, 1, 1]} : vector<2x8x32xf32> to vector<2x8x8xf32>
    %195 = arith.truncf %194 : vector<2x8x8xf32> to vector<2x8x8xbf16>
    %196 = vector.extract_strided_slice %172 {offsets = [0, 0, 8], sizes = [2, 8, 8], strides = [1, 1, 1]} : vector<2x8x32xf32> to vector<2x8x8xf32>
    %197 = arith.truncf %196 : vector<2x8x8xf32> to vector<2x8x8xbf16>
    %198 = vector.extract_strided_slice %174 {offsets = [0, 0, 8], sizes = [2, 8, 8], strides = [1, 1, 1]} : vector<2x8x32xf32> to vector<2x8x8xf32>
    %199 = arith.truncf %198 : vector<2x8x8xf32> to vector<2x8x8xbf16>
    "tpu.trace_start"() <{level = 10 : i32, message = "nqd,nkd->nqk"}> : () -> ()
    %cst_71 = arith.constant dense<0.000000e+00> : vector<2x8x8xf32>
    %200 = tpu.matmul %195, %197, %cst_71 {dimension_numbers = #tpu.dot_dimension_numbers<[2], [2], [1], [1], [0, 0, 0, 1, 1, 1], [0], [0]>} : vector<2x8x8xbf16>, vector<2x8x8xbf16>, vector<2x8x8xf32> -> vector<2x8x8xf32>
    "tpu.trace_stop"() : () -> ()
    %cst_72 = arith.constant dense<0xFF800000> : vector<2x8xf32>
    %201 = vector.multi_reduction <maximumf>, %200, %cst_72 [2] : vector<2x8x8xf32> to vector<2x8xf32>
    %202 = vector.shape_cast %201 : vector<2x8xf32> to vector<2x8x1xf32>
    %203 = vector.broadcast %202 : vector<2x8x1xf32> to vector<2x8x8xf32>
    %204 = arith.subf %200, %203 : vector<2x8x8xf32>
    %205 = math.exp %204 : vector<2x8x8xf32>
    %cst_73 = arith.constant dense<0.000000e+00> : vector<2x8xf32>
    %206 = vector.multi_reduction <add>, %205, %cst_73 [2] : vector<2x8x8xf32> to vector<2x8xf32>
    %207 = vector.shape_cast %206 : vector<2x8xf32> to vector<2x8x1xf32>
    %208 = tpu.reciprocal %207 {approx = true} : vector<2x8x1xf32> -> vector<2x8x1xf32>
    %209 = vector.broadcast %208 : vector<2x8x1xf32> to vector<2x8x8xf32>
    %210 = arith.mulf %205, %209 : vector<2x8x8xf32>
    %211 = arith.truncf %210 : vector<2x8x8xf32> to vector<2x8x8xbf16>
    "tpu.trace_start"() <{level = 10 : i32, message = "nqk,nkd->nqd"}> : () -> ()
    %cst_74 = arith.constant dense<0.000000e+00> : vector<2x8x8xf32>
    %212 = tpu.matmul %211, %199, %cst_74 {dimension_numbers = #tpu.dot_dimension_numbers<[2], [1], [1], [2], [0, 0, 0, 1, 1, 2], [0], [0]>} : vector<2x8x8xbf16>, vector<2x8x8xbf16>, vector<2x8x8xf32> -> vector<2x8x8xf32>
    "tpu.trace_stop"() : () -> ()
    %213 = vector.extract_strided_slice %170 {offsets = [0, 0, 16], sizes = [2, 8, 8], strides = [1, 1, 1]} : vector<2x8x32xf32> to vector<2x8x8xf32>
    %214 = arith.truncf %213 : vector<2x8x8xf32> to vector<2x8x8xbf16>
    %215 = vector.extract_strided_slice %172 {offsets = [0, 0, 16], sizes = [2, 8, 8], strides = [1, 1, 1]} : vector<2x8x32xf32> to vector<2x8x8xf32>
    %216 = arith.truncf %215 : vector<2x8x8xf32> to vector<2x8x8xbf16>
    %217 = vector.extract_strided_slice %174 {offsets = [0, 0, 16], sizes = [2, 8, 8], strides = [1, 1, 1]} : vector<2x8x32xf32> to vector<2x8x8xf32>
    %218 = arith.truncf %217 : vector<2x8x8xf32> to vector<2x8x8xbf16>
    "tpu.trace_start"() <{level = 10 : i32, message = "nqd,nkd->nqk"}> : () -> ()
    %cst_75 = arith.constant dense<0.000000e+00> : vector<2x8x8xf32>
    %219 = tpu.matmul %214, %216, %cst_75 {dimension_numbers = #tpu.dot_dimension_numbers<[2], [2], [1], [1], [0, 0, 0, 1, 1, 1], [0], [0]>} : vector<2x8x8xbf16>, vector<2x8x8xbf16>, vector<2x8x8xf32> -> vector<2x8x8xf32>
    "tpu.trace_stop"() : () -> ()
    %cst_76 = arith.constant dense<0xFF800000> : vector<2x8xf32>
    %220 = vector.multi_reduction <maximumf>, %219, %cst_76 [2] : vector<2x8x8xf32> to vector<2x8xf32>
    %221 = vector.shape_cast %220 : vector<2x8xf32> to vector<2x8x1xf32>
    %222 = vector.broadcast %221 : vector<2x8x1xf32> to vector<2x8x8xf32>
    %223 = arith.subf %219, %222 : vector<2x8x8xf32>
    %224 = math.exp %223 : vector<2x8x8xf32>
    %cst_77 = arith.constant dense<0.000000e+00> : vector<2x8xf32>
    %225 = vector.multi_reduction <add>, %224, %cst_77 [2] : vector<2x8x8xf32> to vector<2x8xf32>
    %226 = vector.shape_cast %225 : vector<2x8xf32> to vector<2x8x1xf32>
    %227 = tpu.reciprocal %226 {approx = true} : vector<2x8x1xf32> -> vector<2x8x1xf32>
    %228 = vector.broadcast %227 : vector<2x8x1xf32> to vector<2x8x8xf32>
    %229 = arith.mulf %224, %228 : vector<2x8x8xf32>
    %230 = arith.truncf %229 : vector<2x8x8xf32> to vector<2x8x8xbf16>
    "tpu.trace_start"() <{level = 10 : i32, message = "nqk,nkd->nqd"}> : () -> ()
    %cst_78 = arith.constant dense<0.000000e+00> : vector<2x8x8xf32>
    %231 = tpu.matmul %230, %218, %cst_78 {dimension_numbers = #tpu.dot_dimension_numbers<[2], [1], [1], [2], [0, 0, 0, 1, 1, 2], [0], [0]>} : vector<2x8x8xbf16>, vector<2x8x8xbf16>, vector<2x8x8xf32> -> vector<2x8x8xf32>
    "tpu.trace_stop"() : () -> ()
    %232 = vector.extract_strided_slice %170 {offsets = [0, 0, 24], sizes = [2, 8, 8], strides = [1, 1, 1]} : vector<2x8x32xf32> to vector<2x8x8xf32>
    %233 = arith.truncf %232 : vector<2x8x8xf32> to vector<2x8x8xbf16>
    %234 = vector.extract_strided_slice %172 {offsets = [0, 0, 24], sizes = [2, 8, 8], strides = [1, 1, 1]} : vector<2x8x32xf32> to vector<2x8x8xf32>
    %235 = arith.truncf %234 : vector<2x8x8xf32> to vector<2x8x8xbf16>
    %236 = vector.extract_strided_slice %174 {offsets = [0, 0, 24], sizes = [2, 8, 8], strides = [1, 1, 1]} : vector<2x8x32xf32> to vector<2x8x8xf32>
    %237 = arith.truncf %236 : vector<2x8x8xf32> to vector<2x8x8xbf16>
    "tpu.trace_start"() <{level = 10 : i32, message = "nqd,nkd->nqk"}> : () -> ()
    %cst_79 = arith.constant dense<0.000000e+00> : vector<2x8x8xf32>
    %238 = tpu.matmul %233, %235, %cst_79 {dimension_numbers = #tpu.dot_dimension_numbers<[2], [2], [1], [1], [0, 0, 0, 1, 1, 1], [0], [0]>} : vector<2x8x8xbf16>, vector<2x8x8xbf16>, vector<2x8x8xf32> -> vector<2x8x8xf32>
    "tpu.trace_stop"() : () -> ()
    %cst_80 = arith.constant dense<0xFF800000> : vector<2x8xf32>
    %239 = vector.multi_reduction <maximumf>, %238, %cst_80 [2] : vector<2x8x8xf32> to vector<2x8xf32>
    %240 = vector.shape_cast %239 : vector<2x8xf32> to vector<2x8x1xf32>
    %241 = vector.broadcast %240 : vector<2x8x1xf32> to vector<2x8x8xf32>
    %242 = arith.subf %238, %241 : vector<2x8x8xf32>
    %243 = math.exp %242 : vector<2x8x8xf32>
    %cst_81 = arith.constant dense<0.000000e+00> : vector<2x8xf32>
    %244 = vector.multi_reduction <add>, %243, %cst_81 [2] : vector<2x8x8xf32> to vector<2x8xf32>
    %245 = vector.shape_cast %244 : vector<2x8xf32> to vector<2x8x1xf32>
    %246 = tpu.reciprocal %245 {approx = true} : vector<2x8x1xf32> -> vector<2x8x1xf32>
    %247 = vector.broadcast %246 : vector<2x8x1xf32> to vector<2x8x8xf32>
    %248 = arith.mulf %243, %247 : vector<2x8x8xf32>
    %249 = arith.truncf %248 : vector<2x8x8xf32> to vector<2x8x8xbf16>
    "tpu.trace_start"() <{level = 10 : i32, message = "nqk,nkd->nqd"}> : () -> ()
    %cst_82 = arith.constant dense<0.000000e+00> : vector<2x8x8xf32>
    %250 = tpu.matmul %249, %237, %cst_82 {dimension_numbers = #tpu.dot_dimension_numbers<[2], [1], [1], [2], [0, 0, 0, 1, 1, 2], [0], [0]>} : vector<2x8x8xbf16>, vector<2x8x8xbf16>, vector<2x8x8xf32> -> vector<2x8x8xf32>
    "tpu.trace_stop"() : () -> ()
    %251 = tpu.concatenate %193, %212, %231, %250 in 2 : vector<2x8x8xf32>, vector<2x8x8xf32>, vector<2x8x8xf32>, vector<2x8x8xf32> -> vector<2x8x32xf32>
    %252 = vector.shape_cast %251 : vector<2x8x32xf32> to vector<16x32xf32>
    %253 = arith.truncf %252 : vector<16x32xf32> to vector<16x32xbf16>
    %c1_83 = arith.constant 1 : index
    %c0_84 = arith.constant 0 : index
    %c0_85 = arith.constant 0 : index
    %254 = vector.load %arg2[%c1_83, %c0_84, %c0_85] : memref<2x32x32xbf16, #tpu.memory_space<vmem>>, vector<1x32x32xbf16>
    %255 = vector.shape_cast %254 : vector<1x32x32xbf16> to vector<32x32xbf16>
    %cst_86 = arith.constant dense<0.000000e+00> : vector<16x32xf32>
    %256 = tpu.matmul %253, %255, %cst_86 {dimension_numbers = #tpu.dot_dimension_numbers<[1], [0], [0], [1], [0, 0, 1, 1], [], []>} : vector<16x32xbf16>, vector<32x32xbf16>, vector<16x32xf32> -> vector<16x32xf32>
    %c1_87 = arith.constant 1 : index
    %c0_88 = arith.constant 0 : index
    %c0_89 = arith.constant 0 : index
    %257 = vector.load %arg3[%c1_87, %c0_88, %c0_89] : memref<2x1x32xf32, #tpu.memory_space<vmem>>, vector<1x1x32xf32>
    %258 = vector.shape_cast %257 : vector<1x1x32xf32> to vector<1x32xf32>
    %259 = vector.broadcast %258 : vector<1x32xf32> to vector<16x32xf32>
    %260 = arith.addf %256, %259 : vector<16x32xf32>
    %261 = arith.addf %260, %164 : vector<16x32xf32>
    %c1_90 = arith.constant 1 : index
    %c0_91 = arith.constant 0 : index
    %c0_92 = arith.constant 0 : index
    %262 = vector.load %arg4[%c1_90, %c0_91, %c0_92] : memref<2x1x32xf32, #tpu.memory_space<vmem>>, vector<1x1x32xf32>
    %263 = vector.shape_cast %262 : vector<1x1x32xf32> to vector<1x32xf32>
    %c1_93 = arith.constant 1 : index
    %c0_94 = arith.constant 0 : index
    %c0_95 = arith.constant 0 : index
    %264 = vector.load %arg5[%c1_93, %c0_94, %c0_95] : memref<2x1x32xf32, #tpu.memory_space<vmem>>, vector<1x1x32xf32>
    %265 = vector.shape_cast %264 : vector<1x1x32xf32> to vector<1x32xf32>
    %cst_96 = arith.constant dense<0.000000e+00> : vector<16xf32>
    %266 = vector.multi_reduction <add>, %261, %cst_96 [1] : vector<16x32xf32> to vector<16xf32>
    %267 = vector.shape_cast %266 : vector<16xf32> to vector<16x1xf32>
    %cst_97 = arith.constant 3.200000e+01 : f32
    %268 = vector.broadcast %cst_97 : f32 to vector<16x1xf32>
    %269 = arith.divf %267, %268 : vector<16x1xf32>
    %270 = vector.broadcast %269 : vector<16x1xf32> to vector<16x32xf32>
    %271 = arith.subf %261, %270 : vector<16x32xf32>
    %272 = arith.mulf %271, %271 : vector<16x32xf32>
    %cst_98 = arith.constant dense<0.000000e+00> : vector<16xf32>
    %273 = vector.multi_reduction <add>, %272, %cst_98 [1] : vector<16x32xf32> to vector<16xf32>
    %274 = vector.shape_cast %273 : vector<16xf32> to vector<16x1xf32>
    %cst_99 = arith.constant 3.200000e+01 : f32
    %275 = vector.broadcast %cst_99 : f32 to vector<16x1xf32>
    %276 = arith.divf %274, %275 : vector<16x1xf32>
    %cst_100 = arith.constant 9.99999974E-6 : f32
    %277 = vector.broadcast %cst_100 : f32 to vector<16x1xf32>
    %278 = arith.addf %276, %277 : vector<16x1xf32>
    %279 = math.rsqrt %278 : vector<16x1xf32>
    %280 = vector.broadcast %279 : vector<16x1xf32> to vector<16x32xf32>
    %281 = arith.mulf %271, %280 : vector<16x32xf32>
    %282 = vector.broadcast %263 : vector<1x32xf32> to vector<16x32xf32>
    %283 = arith.mulf %281, %282 : vector<16x32xf32>
    %284 = vector.broadcast %265 : vector<1x32xf32> to vector<16x32xf32>
    %285 = arith.addf %283, %284 : vector<16x32xf32>
    %286 = arith.truncf %285 : vector<16x32xf32> to vector<16x32xbf16>
    %c1_101 = arith.constant 1 : index
    %c0_102 = arith.constant 0 : index
    %c0_103 = arith.constant 0 : index
    %287 = vector.load %arg6[%c1_101, %c0_102, %c0_103] : memref<2x32x128xbf16, #tpu.memory_space<vmem>>, vector<1x32x128xbf16>
    %288 = vector.shape_cast %287 : vector<1x32x128xbf16> to vector<32x128xbf16>
    %cst_104 = arith.constant dense<0.000000e+00> : vector<16x128xf32>
    %289 = tpu.matmul %286, %288, %cst_104 {dimension_numbers = #tpu.dot_dimension_numbers<[1], [0], [0], [1], [0, 0, 1, 1], [], []>} : vector<16x32xbf16>, vector<32x128xbf16>, vector<16x128xf32> -> vector<16x128xf32>
    %c1_105 = arith.constant 1 : index
    %c0_106 = arith.constant 0 : index
    %c0_107 = arith.constant 0 : index
    %290 = vector.load %arg7[%c1_105, %c0_106, %c0_107] : memref<2x1x128xf32, #tpu.memory_space<vmem>>, vector<1x1x128xf32>
    %291 = vector.shape_cast %290 : vector<1x1x128xf32> to vector<1x128xf32>
    %292 = vector.broadcast %291 : vector<1x128xf32> to vector<16x128xf32>
    %293 = arith.addf %289, %292 : vector<16x128xf32>
    %cst_108 = arith.constant 0.000000e+00 : f32
    %294 = vector.broadcast %cst_108 : f32 to vector<16x128xf32>
    %295 = arith.maximumf %293, %294 : vector<16x128xf32>
    %296 = arith.truncf %295 : vector<16x128xf32> to vector<16x128xbf16>
    %c1_109 = arith.constant 1 : index
    %c0_110 = arith.constant 0 : index
    %c0_111 = arith.constant 0 : index
    %297 = vector.load %arg8[%c1_109, %c0_110, %c0_111] : memref<2x128x32xbf16, #tpu.memory_space<vmem>>, vector<1x128x32xbf16>
    %298 = vector.shape_cast %297 : vector<1x128x32xbf16> to vector<128x32xbf16>
    %cst_112 = arith.constant dense<0.000000e+00> : vector<16x32xf32>
    %299 = tpu.matmul %296, %298, %cst_112 {dimension_numbers = #tpu.dot_dimension_numbers<[1], [0], [0], [1], [0, 0, 1, 1], [], []>} : vector<16x128xbf16>, vector<128x32xbf16>, vector<16x32xf32> -> vector<16x32xf32>
    %c1_113 = arith.constant 1 : index
    %c0_114 = arith.constant 0 : index
    %c0_115 = arith.constant 0 : index
    %300 = vector.load %arg9[%c1_113, %c0_114, %c0_115] : memref<2x1x32xf32, #tpu.memory_space<vmem>>, vector<1x1x32xf32>
    %301 = vector.shape_cast %300 : vector<1x1x32xf32> to vector<1x32xf32>
    %302 = vector.broadcast %301 : vector<1x32xf32> to vector<16x32xf32>
    %303 = arith.addf %299, %302 : vector<16x32xf32>
    %304 = arith.addf %303, %285 : vector<16x32xf32>
    %c1_116 = arith.constant 1 : index
    %c0_117 = arith.constant 0 : index
    %c0_118 = arith.constant 0 : index
    %305 = vector.load %arg10[%c1_116, %c0_117, %c0_118] : memref<2x1x32xf32, #tpu.memory_space<vmem>>, vector<1x1x32xf32>
    %306 = vector.shape_cast %305 : vector<1x1x32xf32> to vector<1x32xf32>
    %c1_119 = arith.constant 1 : index
    %c0_120 = arith.constant 0 : index
    %c0_121 = arith.constant 0 : index
    %307 = vector.load %arg11[%c1_119, %c0_120, %c0_121] : memref<2x1x32xf32, #tpu.memory_space<vmem>>, vector<1x1x32xf32>
    %308 = vector.shape_cast %307 : vector<1x1x32xf32> to vector<1x32xf32>
    %cst_122 = arith.constant dense<0.000000e+00> : vector<16xf32>
    %309 = vector.multi_reduction <add>, %304, %cst_122 [1] : vector<16x32xf32> to vector<16xf32>
    %310 = vector.shape_cast %309 : vector<16xf32> to vector<16x1xf32>
    %cst_123 = arith.constant 3.200000e+01 : f32
    %311 = vector.broadcast %cst_123 : f32 to vector<16x1xf32>
    %312 = arith.divf %310, %311 : vector<16x1xf32>
    %313 = vector.broadcast %312 : vector<16x1xf32> to vector<16x32xf32>
    %314 = arith.subf %304, %313 : vector<16x32xf32>
    %315 = arith.mulf %314, %314 : vector<16x32xf32>
    %cst_124 = arith.constant dense<0.000000e+00> : vector<16xf32>
    %316 = vector.multi_reduction <add>, %315, %cst_124 [1] : vector<16x32xf32> to vector<16xf32>
    %317 = vector.shape_cast %316 : vector<16xf32> to vector<16x1xf32>
    %cst_125 = arith.constant 3.200000e+01 : f32
    %318 = vector.broadcast %cst_125 : f32 to vector<16x1xf32>
    %319 = arith.divf %317, %318 : vector<16x1xf32>
    %cst_126 = arith.constant 9.99999974E-6 : f32
    %320 = vector.broadcast %cst_126 : f32 to vector<16x1xf32>
    %321 = arith.addf %319, %320 : vector<16x1xf32>
    %322 = math.rsqrt %321 : vector<16x1xf32>
    %323 = vector.broadcast %322 : vector<16x1xf32> to vector<16x32xf32>
    %324 = arith.mulf %314, %323 : vector<16x32xf32>
    %325 = vector.broadcast %306 : vector<1x32xf32> to vector<16x32xf32>
    %326 = arith.mulf %324, %325 : vector<16x32xf32>
    %327 = vector.broadcast %308 : vector<1x32xf32> to vector<16x32xf32>
    %328 = arith.addf %326, %327 : vector<16x32xf32>
    %329 = vector.shape_cast %328 : vector<16x32xf32> to vector<2x8x32xf32>
    %cst_127 = arith.constant dense<0.000000e+00> : vector<2x32xf32>
    %330 = vector.multi_reduction <add>, %329, %cst_127 [1] : vector<2x8x32xf32> to vector<2x32xf32>
    %cst_128 = arith.constant 1.250000e-01 : f32
    %331 = vector.broadcast %cst_128 : f32 to vector<2x32xf32>
    %332 = arith.mulf %330, %331 : vector<2x32xf32>
    %333 = arith.truncf %332 : vector<2x32xf32> to vector<2x32xbf16>
    %c0_129 = arith.constant 0 : index
    %c0_130 = arith.constant 0 : index
    %334 = vector.load %arg12[%c0_129, %c0_130] : memref<32x128xbf16, #tpu.memory_space<vmem>>, vector<32x128xbf16>
    %cst_131 = arith.constant dense<0.000000e+00> : vector<2x128xf32>
    %335 = tpu.matmul %333, %334, %cst_131 {dimension_numbers = #tpu.dot_dimension_numbers<[1], [0], [0], [1], [0, 0, 1, 1], [], []>} : vector<2x32xbf16>, vector<32x128xbf16>, vector<2x128xf32> -> vector<2x128xf32>
    %c0_132 = arith.constant 0 : index
    %c0_133 = arith.constant 0 : index
    %336 = vector.load %arg13[%c0_132, %c0_133] : memref<1x128xf32, #tpu.memory_space<vmem>>, vector<1x128xf32>
    %337 = vector.broadcast %336 : vector<1x128xf32> to vector<2x128xf32>
    %338 = arith.addf %335, %337 : vector<2x128xf32>
    %cst_134 = arith.constant dense<0xFF800000> : vector<2xf32>
    %339 = vector.multi_reduction <maximumf>, %338, %cst_134 [1] : vector<2x128xf32> to vector<2xf32>
    %340 = vector.shape_cast %339 : vector<2xf32> to vector<2x1xf32>
    %341 = vector.broadcast %340 : vector<2x1xf32> to vector<2x128xf32>
    %342 = arith.subf %338, %341 : vector<2x128xf32>
    %343 = math.exp %342 : vector<2x128xf32>
    %cst_135 = arith.constant dense<0.000000e+00> : vector<2xf32>
    %344 = vector.multi_reduction <add>, %343, %cst_135 [1] : vector<2x128xf32> to vector<2xf32>
    %345 = vector.shape_cast %344 : vector<2xf32> to vector<2x1xf32>
    %346 = vector.broadcast %345 : vector<2x1xf32> to vector<2x128xf32>
    %347 = arith.divf %343, %346 : vector<2x128xf32>
    %c0_136 = arith.constant 0 : index
    %c0_137 = arith.constant 0 : index
    %348 = vector.load %arg14[%c0_136, %c0_137] : memref<2x128xf32, #tpu.memory_space<vmem>>, vector<2x128xf32>
    tpu.vector_store %arg14[%c0_136, %c0_137], %347 {strides = array<i32>} : memref<2x128xf32, #tpu.memory_space<vmem>>, vector<2x128xf32>,
    return
  }
}

</mosaic_0001>

<llo_original>
// kernel: tpu_custom_call.1
$region0: #{tpu_custom_call.1}
  #allocation0 [shape = 'u32[]', space=smem, size = 0x4, offset = 0x4, fixed_abs, tag = 'smem constant byte address 0x4 - core index']
  #allocation1 [shape = 'u32[144,128]{1,0:T(1,128)}', space=vmem, size = 0x12000, scoped, tag = 'internal scratch']
  %s0 = inlined_call_operand.vmem [shape: f32[16,32], index: 0, kind: input, shape index: {}]
  %s1 = inlined_call_operand.vmem [shape: bf16[2,32,96], index: 1, kind: input, shape index: {}]
  %s2 = inlined_call_operand.vmem [shape: bf16[2,32,32], index: 2, kind: input, shape index: {}]
  %s3 = inlined_call_operand.vmem [shape: f32[2,1,32], index: 3, kind: input, shape index: {}]
  %s4 = inlined_call_operand.vmem [shape: f32[2,1,32], index: 4, kind: input, shape index: {}]
  %s5 = inlined_call_operand.vmem [shape: f32[2,1,32], index: 5, kind: input, shape index: {}]
  %s6 = inlined_call_operand.vmem [shape: bf16[2,32,128], index: 6, kind: input, shape index: {}]
  %s7 = inlined_call_operand.vmem [shape: f32[2,1,128], index: 7, kind: input, shape index: {}]
  %s8 = inlined_call_operand.vmem [shape: bf16[2,128,32], index: 8, kind: input, shape index: {}]
  %s9 = inlined_call_operand.vmem [shape: f32[2,1,32], index: 9, kind: input, shape index: {}]
  %s10 = inlined_call_operand.vmem [shape: f32[2,1,32], index: 10, kind: input, shape index: {}]
  %s11 = inlined_call_operand.vmem [shape: f32[2,1,32], index: 11, kind: input, shape index: {}]
  %s12 = inlined_call_operand.vmem [shape: bf16[32,128], index: 12, kind: input, shape index: {}]
  %s13 = inlined_call_operand.vmem [shape: f32[1,128], index: 13, kind: input, shape index: {}]
  %s14 = inlined_call_operand.hbm [shape: f32[2,128], index: 14, kind: output, shape index: {}]
  %s15 = sld [smem:[#allocation0]]
  $region66: #{tpu_custom_call.1} parent=0
    _
  %s17 = ssub.s32 1, %s15
  %s18 = scalar_select 0, %s17, %s15
  $region1: #{tpu_custom_call.1} parent=0
    #allocation2 [shape = 'u8[1024]{0}', space=vmem, size = 0x400, scoped, tag = 'output window, operand 0, single buffered']
    #allocation3 [shape = 's32[1]{0}', space=sflag, size = 0x4, scoped, tag = 'scoped memory for tpu_custom_call.1']
    %19 = vsyncpa [#allocation3], 0
    // Predicated region
    $region2: #{tpu_custom_call.1} parent=1 // pred_check
      _
    $region3: #{tpu_custom_call.1} parent=1 // pred_check_branch
      %21 = sbr.rel (0) target = $region5
    $region4: #{tpu_custom_call.1} parent=1 // pred_region
      _
    $region5: #{tpu_custom_call.1} parent=1 // pred_fallthru
      _
    // Predicated region
    $region6: #{tpu_custom_call.1} parent=1 // pred_check
      _
    $region7: #{tpu_custom_call.1} parent=1 // pred_check_branch
      %23 = sbr.rel (0) target = $region9
    $region8: #{tpu_custom_call.1} parent=1 // pred_region
      _
    $region9: #{tpu_custom_call.1} parent=1 // pred_fallthru
      _
    // Predicated region
    $region10: #{tpu_custom_call.1} parent=1 // pred_check
      _
    $region11: #{tpu_custom_call.1} parent=1 // pred_check_branch
      %25 = sbr.rel (0) target = $region13
    $region12: #{tpu_custom_call.1} parent=1 // pred_region
      _
    $region13: #{tpu_custom_call.1} parent=1 // pred_fallthru
      _
    // Predicated region
    $region14: #{tpu_custom_call.1} parent=1 // pred_check
      _
    $region15: #{tpu_custom_call.1} parent=1 // pred_check_branch
      %27 = sbr.rel (0) target = $region17
    $region16: #{tpu_custom_call.1} parent=1 // pred_region
      _
    $region17: #{tpu_custom_call.1} parent=1 // pred_fallthru
      _
    // Predicated region
    $region18: #{tpu_custom_call.1} parent=1 // pred_check
      _
    $region19: #{tpu_custom_call.1} parent=1 // pred_check_branch
      %29 = sbr.rel (0) target = $region21
    $region20: #{tpu_custom_call.1} parent=1 // pred_region
      _
    $region21: #{tpu_custom_call.1} parent=1 // pred_fallthru
      _
    // Predicated region
    $region22: #{tpu_custom_call.1} parent=1 // pred_check
      _
    $region23: #{tpu_custom_call.1} parent=1 // pred_check_branch
      %31 = sbr.rel (0) target = $region25
    $region24: #{tpu_custom_call.1} parent=1 // pred_region
      _
    $region25: #{tpu_custom_call.1} parent=1 // pred_fallthru
      _
    // Predicated region
    $region26: #{tpu_custom_call.1} parent=1 // pred_check
      _
    $region27: #{tpu_custom_call.1} parent=1 // pred_check_branch
      %33 = sbr.rel (0) target = $region29
    $region28: #{tpu_custom_call.1} parent=1 // pred_region
      _
    $region29: #{tpu_custom_call.1} parent=1 // pred_fallthru
      _
    // Predicated region
    $region30: #{tpu_custom_call.1} parent=1 // pred_check
      _
    $region31: #{tpu_custom_call.1} parent=1 // pred_check_branch
      %35 = sbr.rel (0) target = $region33
    $region32: #{tpu_custom_call.1} parent=1 // pred_region
      _
    $region33: #{tpu_custom_call.1} parent=1 // pred_fallthru
      _
    // Predicated region
    $region34: #{tpu_custom_call.1} parent=1 // pred_check
      _
    $region35: #{tpu_custom_call.1} parent=1 // pred_check_branch
      %37 = sbr.rel (0) target = $region37
    $region36: #{tpu_custom_call.1} parent=1 // pred_region
      _
    $region37: #{tpu_custom_call.1} parent=1 // pred_fallthru
      _
    // Predicated region
    $region38: #{tpu_custom_call.1} parent=1 // pred_check
      _
    $region39: #{tpu_custom_call.1} parent=1 // pred_check_branch
      %39 = sbr.rel (0) target = $region41
    $region40: #{tpu_custom_call.1} parent=1 // pred_region
      _
    $region41: #{tpu_custom_call.1} parent=1 // pred_fallthru
      _
    // Predicated region
    $region42: #{tpu_custom_call.1} parent=1 // pred_check
      _
    $region43: #{tpu_custom_call.1} parent=1 // pred_check_branch
      %41 = sbr.rel (0) target = $region45
    $region44: #{tpu_custom_call.1} parent=1 // pred_region
      _
    $region45: #{tpu_custom_call.1} parent=1 // pred_fallthru
      _
    // Predicated region
    $region46: #{tpu_custom_call.1} parent=1 // pred_check
      _
    $region47: #{tpu_custom_call.1} parent=1 // pred_check_branch
      %43 = sbr.rel (0) target = $region49
    $region48: #{tpu_custom_call.1} parent=1 // pred_region
      _
    $region49: #{tpu_custom_call.1} parent=1 // pred_fallthru
      _
    // Predicated region
    $region50: #{tpu_custom_call.1} parent=1 // pred_check
      _
    $region51: #{tpu_custom_call.1} parent=1 // pred_check_branch
      %45 = sbr.rel (0) target = $region53
    $region52: #{tpu_custom_call.1} parent=1 // pred_region
      _
    $region53: #{tpu_custom_call.1} parent=1 // pred_fallthru
      _
    // Predicated region
    $region54: #{tpu_custom_call.1} parent=1 // pred_check
      _
    $region55: #{tpu_custom_call.1} parent=1 // pred_check_branch
      %47 = sbr.rel (0) target = $region57
    $region56: #{tpu_custom_call.1} parent=1 // pred_region
      _
    $region57: #{tpu_custom_call.1} parent=1 // pred_fallthru
      _
    %v49 = vld [vmem:[%s0] sm:$0xff]
    %v50 = vld [vmem:[%s0 + $0x8] sm:$0xff]
    %v51 = vpack.c.bf16 %v50, %v49
    %v52 = vld [vmem:[%s1] sm:$0xf]
    %v53 = vld [vmem:[%s1 + $0x4] sm:$0xf]
    %v54 = vld [vmem:[%s1 + $0x8] sm:$0xf]
    %v55 = vld [vmem:[%s1 + $0xc] sm:$0xf]
    %v60 = vunpack.c.l.b16 %v52
    %v61 = vunpack.c.l.b16 %v53
    %v62 = vunpack.c.l.b16 %v54
    %v63 = vunpack.c.l.b16 %v55
    %v64 = vpack.c.b16 %v61, %v60
    %v65 = vpack.c.b16 %v63, %v62
    %vm68 = vcmask 261120
    %v70 = vsel %vm68, %v51, 0
    %72 = vmatprep.subr.bf16.mxu0 0
    %73 = vmatpush1.bf16.msra.mxu0 %v64
    %74 = vmatprep.subr.bf16.mxu0 0
    %75 = vmatpush1.bf16.msra.mxu0 %v65
    %76 = vmatprep.subr.bf16.mxu0 0
    %77 = vmatpush1.bf16.msra.mxu0 0
    %78 = vmatprep.subr.bf16.mxu0 0
    %79 = vmatpush1.bf16.msra.mxu0 0
    %80 = vmatprep.subr.bf16.mxu0 0
    %81 = vmatpush1.bf16.msra.mxu0 0
    %82 = vmatprep.subr.bf16.mxu0 0
    %83 = vmatpush1.bf16.msra.mxu0 0
    %84 = vmatprep.subr.bf16.mxu0 0
    %85 = vmatpush1.bf16.msra.mxu0 0
    %86 = vmatprep.subr.bf16.mxu0 0
    %87 = vmatpush1.bf16.msra.mxu0 0
    %88 = vmatprep.subr.bf16.mxu0 0
    %89 = vmatpush1.bf16.msra.mxu0 0
    %90 = vmatprep.subr.bf16.mxu0 0
    %91 = vmatpush1.bf16.msra.mxu0 0
    %92 = vmatprep.subr.bf16.mxu0 0
    %93 = vmatpush1.bf16.msra.mxu0 0
    %94 = vmatprep.subr.bf16.mxu0 0
    %95 = vmatpush1.bf16.msra.mxu0 0
    %96 = vmatprep.subr.bf16.mxu0 0
    %97 = vmatpush1.bf16.msra.mxu0 0
    %98 = vmatprep.subr.bf16.mxu0 0
    %99 = vmatpush1.bf16.msra.mxu0 0
    %100 = vmatprep.subr.bf16.mxu0 0
    %101 = vmatpush1.bf16.msra.mxu0 0
    %102 = vmatprep.subr.bf16.mxu0 0
    %103 = vmatpush1.bf16.msra.mxu0 0
    %104 = vmatprep.mubr.bf16.mxu0 0
    %105 = vmatmul.mubr.bf16.gmra.mrb[0].mxu0 %v70
    %v106 = vpop.f32.mrb[0].mxu0
    %v107 = vadd.f32 0.0, %v106
    %v108 = vpop.f32.mrb[0].mxu0
    %v109 = vpop.f32.mrb[0].mxu0
    %v110 = vadd.f32 0.0, %v109
    %v111 = vpop.f32.mrb[0].mxu0
    %112 = vdwg.mxu0
    %v113 = vpack.c.bf16 %v107, %v107
    %v114 = vpack.c.bf16 %v110, %v110
    %116 = vrot.lane.b32.xlu0 %v113, 96
    %v117 = vpop.permute.xlu0 %116
    %vm118 = vcmask 64512
    %v120 = vsel %vm118, %v113, 0
    %v123 = vsel %vm118, %v117, 0
    %125 = vmatprep.subr.bf16.mxu0 0
    %126 = vmatpush1.bf16.xpose.msra.mxu0 %v123
    %127 = vmatprep.subr.bf16.mxu0 0
    %128 = vmatpush1.bf16.xpose.msra.mxu0 0
    %129 = vmatprep.subr.bf16.mxu0 0
    %130 = vmatpush1.bf16.xpose.msra.mxu0 0
    %131 = vmatprep.subr.bf16.mxu0 0
    %132 = vmatpush1.bf16.xpose.msra.mxu0 0
    %133 = vmatprep.subr.bf16.mxu0 0
    %134 = vmatpush1.bf16.xpose.msra.mxu0 0
    %135 = vmatprep.subr.bf16.mxu0 0
    %136 = vmatpush1.bf16.xpose.msra.mxu0 0
    %137 = vmatprep.subr.bf16.mxu0 0
    %138 = vmatpush1.bf16.xpose.msra.mxu0 0
    %139 = vmatprep.subr.bf16.mxu0 0
    %140 = vmatpush1.bf16.xpose.msra.mxu0 0
    %141 = vmatprep.subr.bf16.mxu0 0
    %142 = vmatpush1.bf16.xpose.msra.mxu0 0
    %143 = vmatprep.subr.bf16.mxu0 0
    %144 = vmatpush1.bf16.xpose.msra.mxu0 0
    %145 = vmatprep.subr.bf16.mxu0 0
    %146 = vmatpush1.bf16.xpose.msra.mxu0 0
    %147 = vmatprep.subr.bf16.mxu0 0
    %148 = vmatpush1.bf16.xpose.msra.mxu0 0
    %149 = vmatprep.subr.bf16.mxu0 0
    %150 = vmatpush1.bf16.xpose.msra.mxu0 0
    %151 = vmatprep.subr.bf16.mxu0 0
    %152 = vmatpush1.bf16.xpose.msra.mxu0 0
    %153 = vmatprep.subr.bf16.mxu0 0
    %154 = vmatpush1.bf16.xpose.msra.mxu0 0
    %155 = vmatprep.subr.bf16.mxu0 0
    %156 = vmatpush1.bf16.xpose.msra.mxu0 0
    %157 = vmatprep.mubr.bf16.mxu0 0
    %158 = vmatmul.mubr.bf16.gmra.mrb[0].mxu0 %v120
    %v159 = vpop.f32.mrb[0].mxu0
    %v160 = vadd.f32 0.0, %v159
    %v161 = vpop.f32.mrb[0].mxu0
    %v162 = vpop.f32.mrb[0].mxu0
    %v163 = vpop.f32.mrb[0].mxu0
    %164 = vdwg.mxu0
    %166 = vrot.lane.b32.xlu0 %v114, 96
    %v167 = vpop.permute.xlu0 %166
    %v169 = vsel %vm118, %v114, 0
    %v172 = vsel %vm118, %v167, 0
    %174 = vmatprep.subr.bf16.mxu0 0
    %175 = vmatpush1.bf16.xpose.msra.mxu0 %v172
    %176 = vmatprep.subr.bf16.mxu0 0
    %177 = vmatpush1.bf16.xpose.msra.mxu0 0
    %178 = vmatprep.subr.bf16.mxu0 0
    %179 = vmatpush1.bf16.xpose.msra.mxu0 0
    %180 = vmatprep.subr.bf16.mxu0 0
    %181 = vmatpush1.bf16.xpose.msra.mxu0 0
    %182 = vmatprep.subr.bf16.mxu0 0
    %183 = vmatpush1.bf16.xpose.msra.mxu0 0
    %184 = vmatprep.subr.bf16.mxu0 0
    %185 = vmatpush1.bf16.xpose.msra.mxu0 0
    %186 = vmatprep.subr.bf16.mxu0 0
    %187 = vmatpush1.bf16.xpose.msra.mxu0 0
    %188 = vmatprep.subr.bf16.mxu0 0
    %189 = vmatpush1.bf16.xpose.msra.mxu0 0
    %190 = vmatprep.subr.bf16.mxu0 0
    %191 = vmatpush1.bf16.xpose.msra.mxu0 0
    %192 = vmatprep.subr.bf16.mxu0 0
    %193 = vmatpush1.bf16.xpose.msra.mxu0 0
    %194 = vmatprep.subr.bf16.mxu0 0
    %195 = vmatpush1.bf16.xpose.msra.mxu0 0
    %196 = vmatprep.subr.bf16.mxu0 0
    %197 = vmatpush1.bf16.xpose.msra.mxu0 0
    %198 = vmatprep.subr.bf16.mxu0 0
    %199 = vmatpush1.bf16.xpose.msra.mxu0 0
    %200 = vmatprep.subr.bf16.mxu0 0
    %201 = vmatpush1.bf16.xpose.msra.mxu0 0
    %202 = vmatprep.subr.bf16.mxu0 0
    %203 = vmatpush1.bf16.xpose.msra.mxu0 0
    %204 = vmatprep.subr.bf16.mxu0 0
    %205 = vmatpush1.bf16.xpose.msra.mxu0 0
    %206 = vmatprep.mubr.bf16.mxu0 0
    %207 = vmatmul.mubr.bf16.gmra.mrb[0].mxu0 %v169
    %v208 = vpop.f32.mrb[0].mxu0
    %v209 = vadd.f32 0.0, %v208
    %v210 = vpop.f32.mrb[0].mxu0
    %v211 = vpop.f32.mrb[0].mxu0
    %v212 = vpop.f32.mrb[0].mxu0
    %213 = vdwg.mxu0
    %v214 = vsel %vm118, %v160, -inf
    %215 = vmax.xlane.f32.xlu0 %v214
    %v216 = vpop.xlane.xlu0 %215
    %v217 = vsel %vm118, %v209, -inf
    %218 = vmax.xlane.f32.xlu0 %v217
    %v219 = vpop.xlane.xlu0 %218
    %v220 = vsub.f32 %v160, %v216
    %v221 = vsub.f32 %v209, %v219
    %v222 = vmul.f32 %v220, 1.442695
    %v223 = vpow.pop %v222
    %v224 = vmul.f32 %v221, 1.442695
    %v225 = vpow.pop %v224
    %v226 = vsel %vm118, %v223, 0.0
    %227 = vadd.xlane.f32.xlu0 %v226
    %v228 = vpop.xlane.xlu0 %227
    %v229 = vsel %vm118, %v225, 0.0
    %230 = vadd.xlane.f32.xlu0 %v229
    %v231 = vpop.xlane.xlu0 %230
    %v232 = vrcp.pop %v228
    %v233 = vrcp.pop %v231
    %v234 = vmul.f32 %v223, %v232
    %v235 = vmul.f32 %v225, %v233
    %v236 = vpack.c.bf16 %v234, %v234
    %v237 = vpack.c.bf16 %v235, %v235
    %238 = vrot.lane.b32.xlu0 %v113, 64
    %v239 = vpop.permute.xlu0 %238
    %v241 = vsel %vm118, %v236, 0
    %vm243 = vcmask 1043456
    %v245 = vsel %vm243, %v239, 0
    %247 = vmatprep.subr.bf16.mxu0 0
    %248 = vmatpush1.bf16.msra.mxu0 %v245
    %249 = vmatprep.subr.bf16.mxu0 0
    %250 = vmatpush1.bf16.msra.mxu0 0
    %251 = vmatprep.subr.bf16.mxu0 0
    %252 = vmatpush1.bf16.msra.mxu0 0
    %253 = vmatprep.subr.bf16.mxu0 0
    %254 = vmatpush1.bf16.msra.mxu0 0
    %255 = vmatprep.subr.bf16.mxu0 0
    %256 = vmatpush1.bf16.msra.mxu0 0
    %257 = vmatprep.subr.bf16.mxu0 0
    %258 = vmatpush1.bf16.msra.mxu0 0
    %259 = vmatprep.subr.bf16.mxu0 0
    %260 = vmatpush1.bf16.msra.mxu0 0
    %261 = vmatprep.subr.bf16.mxu0 0
    %262 = vmatpush1.bf16.msra.mxu0 0
    %263 = vmatprep.subr.bf16.mxu0 0
    %264 = vmatpush1.bf16.msra.mxu0 0
    %265 = vmatprep.subr.bf16.mxu0 0
    %266 = vmatpush1.bf16.msra.mxu0 0
    %267 = vmatprep.subr.bf16.mxu0 0
    %268 = vmatpush1.bf16.msra.mxu0 0
    %269 = vmatprep.subr.bf16.mxu0 0
    %270 = vmatpush1.bf16.msra.mxu0 0
    %271 = vmatprep.subr.bf16.mxu0 0
    %272 = vmatpush1.bf16.msra.mxu0 0
    %273 = vmatprep.subr.bf16.mxu0 0
    %274 = vmatpush1.bf16.msra.mxu0 0
    %275 = vmatprep.subr.bf16.mxu0 0
    %276 = vmatpush1.bf16.msra.mxu0 0
    %277 = vmatprep.subr.bf16.mxu0 0
    %278 = vmatpush1.bf16.msra.mxu0 0
    %279 = vmatprep.mubr.bf16.mxu0 0
    %280 = vmatmul.mubr.bf16.gmra.mrb[0].mxu0 %v241
    %v281 = vpop.f32.mrb[0].mxu0
    %v282 = vadd.f32 0.0, %v281
    %v283 = vpop.f32.mrb[0].mxu0
    %v284 = vpop.f32.mrb[0].mxu0
    %v285 = vpop.f32.mrb[0].mxu0
    %286 = vdwg.mxu0
    %287 = vrot.lane.b32.xlu0 %v114, 64
    %v288 = vpop.permute.xlu0 %287
    %v290 = vsel %vm118, %v237, 0
    %v293 = vsel %vm243, %v288, 0
    %295 = vmatprep.subr.bf16.mxu0 0
    %296 = vmatpush1.bf16.msra.mxu0 %v293
    %297 = vmatprep.subr.bf16.mxu0 0
    %298 = vmatpush1.bf16.msra.mxu0 0
    %299 = vmatprep.subr.bf16.mxu0 0
    %300 = vmatpush1.bf16.msra.mxu0 0
    %301 = vmatprep.subr.bf16.mxu0 0
    %302 = vmatpush1.bf16.msra.mxu0 0
    %303 = vmatprep.subr.bf16.mxu0 0
    %304 = vmatpush1.bf16.msra.mxu0 0
    %305 = vmatprep.subr.bf16.mxu0 0
    %306 = vmatpush1.bf16.msra.mxu0 0
    %307 = vmatprep.subr.bf16.mxu0 0
    %308 = vmatpush1.bf16.msra.mxu0 0
    %309 = vmatprep.subr.bf16.mxu0 0
    %310 = vmatpush1.bf16.msra.mxu0 0
    %311 = vmatprep.subr.bf16.mxu0 0
    %312 = vmatpush1.bf16.msra.mxu0 0
    %313 = vmatprep.subr.bf16.mxu0 0
    %314 = vmatpush1.bf16.msra.mxu0 0
    %315 = vmatprep.subr.bf16.mxu0 0
    %316 = vmatpush1.bf16.msra.mxu0 0
    %317 = vmatprep.subr.bf16.mxu0 0
    %318 = vmatpush1.bf16.msra.mxu0 0
    %319 = vmatprep.subr.bf16.mxu0 0
    %320 = vmatpush1.bf16.msra.mxu0 0
    %321 = vmatprep.subr.bf16.mxu0 0
    %322 = vmatpush1.bf16.msra.mxu0 0
    %323 = vmatprep.subr.bf16.mxu0 0
    %324 = vmatpush1.bf16.msra.mxu0 0
    %325 = vmatprep.subr.bf16.mxu0 0
    %326 = vmatpush1.bf16.msra.mxu0 0
    %327 = vmatprep.mubr.bf16.mxu0 0
    %328 = vmatmul.mubr.bf16.gmra.mrb[0].mxu0 %v290
    %v329 = vpop.f32.mrb[0].mxu0
    %v330 = vadd.f32 0.0, %v329
    %v331 = vpop.f32.mrb[0].mxu0
    %v332 = vpop.f32.mrb[0].mxu0
    %v333 = vpop.f32.mrb[0].mxu0
    %334 = vdwg.mxu0
    %335 = vrot.lane.b32.xlu0 %v113, 120
    %v336 = vpop.permute.xlu0 %335
    %337 = vrot.lane.b32.xlu0 %v113, 88
    %v338 = vpop.permute.xlu0 %337
    %v340 = vsel %vm118, %v336, 0
    %v343 = vsel %vm118, %v338, 0
    %345 = vmatprep.subr.bf16.mxu0 0
    %346 = vmatpush1.bf16.xpose.msra.mxu0 %v343
    %347 = vmatprep.subr.bf16.mxu0 0
    %348 = vmatpush1.bf16.xpose.msra.mxu0 0
    %349 = vmatprep.subr.bf16.mxu0 0
    %350 = vmatpush1.bf16.xpose.msra.mxu0 0
    %351 = vmatprep.subr.bf16.mxu0 0
    %352 = vmatpush1.bf16.xpose.msra.mxu0 0
    %353 = vmatprep.subr.bf16.mxu0 0
    %354 = vmatpush1.bf16.xpose.msra.mxu0 0
    %355 = vmatprep.subr.bf16.mxu0 0
    %356 = vmatpush1.bf16.xpose.msra.mxu0 0
    %357 = vmatprep.subr.bf16.mxu0 0
    %358 = vmatpush1.bf16.xpose.msra.mxu0 0
    %359 = vmatprep.subr.bf16.mxu0 0
    %360 = vmatpush1.bf16.xpose.msra.mxu0 0
    %361 = vmatprep.subr.bf16.mxu0 0
    %362 = vmatpush1.bf16.xpose.msra.mxu0 0
    %363 = vmatprep.subr.bf16.mxu0 0
    %364 = vmatpush1.bf16.xpose.msra.mxu0 0
    %365 = vmatprep.subr.bf16.mxu0 0
    %366 = vmatpush1.bf16.xpose.msra.mxu0 0
    %367 = vmatprep.subr.bf16.mxu0 0
    %368 = vmatpush1.bf16.xpose.msra.mxu0 0
    %369 = vmatprep.subr.bf16.mxu0 0
    %370 = vmatpush1.bf16.xpose.msra.mxu0 0
    %371 = vmatprep.subr.bf16.mxu0 0
    %372 = vmatpush1.bf16.xpose.msra.mxu0 0
    %373 = vmatprep.subr.bf16.mxu0 0
    %374 = vmatpush1.bf16.xpose.msra.mxu0 0
    %375 = vmatprep.subr.bf16.mxu0 0
    %376 = vmatpush1.bf16.xpose.msra.mxu0 0
    %377 = vmatprep.mubr.bf16.mxu0 0
    %378 = vmatmul.mubr.bf16.gmra.mrb[0].mxu0 %v340
    %v379 = vpop.f32.mrb[0].mxu0
    %v380 = vadd.f32 0.0, %v379
    %v381 = vpop.f32.mrb[0].mxu0
    %v382 = vpop.f32.mrb[0].mxu0
    %v383 = vpop.f32.mrb[0].mxu0
    %384 = vdwg.mxu0
    %385 = vrot.lane.b32.xlu0 %v114, 120
    %v386 = vpop.permute.xlu0 %385
    %387 = vrot.lane.b32.xlu0 %v114, 88
    %v388 = vpop.permute.xlu0 %387
    %v390 = vsel %vm118, %v386, 0
    %v393 = vsel %vm118, %v388, 0
    %395 = vmatprep.subr.bf16.mxu0 0
    %396 = vmatpush1.bf16.xpose.msra.mxu0 %v393
    %397 = vmatprep.subr.bf16.mxu0 0
    %398 = vmatpush1.bf16.xpose.msra.mxu0 0
    %399 = vmatprep.subr.bf16.mxu0 0
    %400 = vmatpush1.bf16.xpose.msra.mxu0 0
    %401 = vmatprep.subr.bf16.mxu0 0
    %402 = vmatpush1.bf16.xpose.msra.mxu0 0
    %403 = vmatprep.subr.bf16.mxu0 0
    %404 = vmatpush1.bf16.xpose.msra.mxu0 0
    %405 = vmatprep.subr.bf16.mxu0 0
    %406 = vmatpush1.bf16.xpose.msra.mxu0 0
    %407 = vmatprep.subr.bf16.mxu0 0
    %408 = vmatpush1.bf16.xpose.msra.mxu0 0
    %409 = vmatprep.subr.bf16.mxu0 0
    %410 = vmatpush1.bf16.xpose.msra.mxu0 0
    %411 = vmatprep.subr.bf16.mxu0 0
    %412 = vmatpush1.bf16.xpose.msra.mxu0 0
    %413 = vmatprep.subr.bf16.mxu0 0
    %414 = vmatpush1.bf16.xpose.msra.mxu0 0
    %415 = vmatprep.subr.bf16.mxu0 0
    %416 = vmatpush1.bf16.xpose.msra.mxu0 0
    %417 = vmatprep.subr.bf16.mxu0 0
    %418 = vmatpush1.bf16.xpose.msra.mxu0 0
    %419 = vmatprep.subr.bf16.mxu0 0
    %420 = vmatpush1.bf16.xpose.msra.mxu0 0
    %421 = vmatprep.subr.bf16.mxu0 0
    %422 = vmatpush1.bf16.xpose.msra.mxu0 0
    %423 = vmatprep.subr.bf16.mxu0 0
    %424 = vmatpush1.bf16.xpose.msra.mxu0 0
    %425 = vmatprep.subr.bf16.mxu0 0
    %426 = vmatpush1.bf16.xpose.msra.mxu0 0
    %427 = vmatprep.mubr.bf16.mxu0 0
    %428 = vmatmul.mubr.bf16.gmra.mrb[0].mxu0 %v390
    %v429 = vpop.f32.mrb[0].mxu0
    %v430 = vadd.f32 0.0, %v429
    %v431 = vpop.f32.mrb[0].mxu0
    %v432 = vpop.f32.mrb[0].mxu0
    %v433 = vpop.f32.mrb[0].mxu0
    %434 = vdwg.mxu0
    %v435 = vsel %vm118, %v380, -inf
    %436 = vmax.xlane.f32.xlu0 %v435
    %v437 = vpop.xlane.xlu0 %436
    %v438 = vsel %vm118, %v430, -inf
    %439 = vmax.xlane.f32.xlu0 %v438
    %v440 = vpop.xlane.xlu0 %439
    %v441 = vsub.f32 %v380, %v437
    %v442 = vsub.f32 %v430, %v440
    %v443 = vmul.f32 %v441, 1.442695
    %v444 = vpow.pop %v443
    %v445 = vmul.f32 %v442, 1.442695
    %v446 = vpow.pop %v445
    %v447 = vsel %vm118, %v444, 0.0
    %448 = vadd.xlane.f32.xlu0 %v447
    %v449 = vpop.xlane.xlu0 %448
    %v450 = vsel %vm118, %v446, 0.0
    %451 = vadd.xlane.f32.xlu0 %v450
    %v452 = vpop.xlane.xlu0 %451
    %v453 = vrcp.pop %v449
    %v454 = vrcp.pop %v452
    %v455 = vmul.f32 %v444, %v453
    %v456 = vmul.f32 %v446, %v454
    %v457 = vpack.c.bf16 %v455, %v455
    %v458 = vpack.c.bf16 %v456, %v456
    %459 = vrot.lane.b32.xlu0 %v113, 56
    %v460 = vpop.permute.xlu0 %459
    %v462 = vsel %vm118, %v457, 0
    %v465 = vsel %vm243, %v460, 0
    %467 = vmatprep.subr.bf16.mxu0 0
    %468 = vmatpush1.bf16.msra.mxu0 %v465
    %469 = vmatprep.subr.bf16.mxu0 0
    %470 = vmatpush1.bf16.msra.mxu0 0
    %471 = vmatprep.subr.bf16.mxu0 0
    %472 = vmatpush1.bf16.msra.mxu0 0
    %473 = vmatprep.subr.bf16.mxu0 0
    %474 = vmatpush1.bf16.msra.mxu0 0
    %475 = vmatprep.subr.bf16.mxu0 0
    %476 = vmatpush1.bf16.msra.mxu0 0
    %477 = vmatprep.subr.bf16.mxu0 0
    %478 = vmatpush1.bf16.msra.mxu0 0
    %479 = vmatprep.subr.bf16.mxu0 0
    %480 = vmatpush1.bf16.msra.mxu0 0
    %481 = vmatprep.subr.bf16.mxu0 0
    %482 = vmatpush1.bf16.msra.mxu0 0
    %483 = vmatprep.subr.bf16.mxu0 0
    %484 = vmatpush1.bf16.msra.mxu0 0
    %485 = vmatprep.subr.bf16.mxu0 0
    %486 = vmatpush1.bf16.msra.mxu0 0
    %487 = vmatprep.subr.bf16.mxu0 0
    %488 = vmatpush1.bf16.msra.mxu0 0
    %489 = vmatprep.subr.bf16.mxu0 0
    %490 = vmatpush1.bf16.msra.mxu0 0
    %491 = vmatprep.subr.bf16.mxu0 0
    %492 = vmatpush1.bf16.msra.mxu0 0
    %493 = vmatprep.subr.bf16.mxu0 0
    %494 = vmatpush1.bf16.msra.mxu0 0
    %495 = vmatprep.subr.bf16.mxu0 0
    %496 = vmatpush1.bf16.msra.mxu0 0
    %497 = vmatprep.subr.bf16.mxu0 0
    %498 = vmatpush1.bf16.msra.mxu0 0
    %499 = vmatprep.mubr.bf16.mxu0 0
    %500 = vmatmul.mubr.bf16.gmra.mrb[0].mxu0 %v462
    %v501 = vpop.f32.mrb[0].mxu0
    %v502 = vadd.f32 0.0, %v501
    %v503 = vpop.f32.mrb[0].mxu0
    %v504 = vpop.f32.mrb[0].mxu0
    %v505 = vpop.f32.mrb[0].mxu0
    %506 = vdwg.mxu0
    %507 = vrot.lane.b32.xlu0 %v114, 56
    %v508 = vpop.permute.xlu0 %507
    %v510 = vsel %vm118, %v458, 0
    %v513 = vsel %vm243, %v508, 0
    %515 = vmatprep.subr.bf16.mxu0 0
    %516 = vmatpush1.bf16.msra.mxu0 %v513
    %517 = vmatprep.subr.bf16.mxu0 0
    %518 = vmatpush1.bf16.msra.mxu0 0
    %519 = vmatprep.subr.bf16.mxu0 0
    %520 = vmatpush1.bf16.msra.mxu0 0
    %521 = vmatprep.subr.bf16.mxu0 0
    %522 = vmatpush1.bf16.msra.mxu0 0
    %523 = vmatprep.subr.bf16.mxu0 0
    %524 = vmatpush1.bf16.msra.mxu0 0
    %525 = vmatprep.subr.bf16.mxu0 0
    %526 = vmatpush1.bf16.msra.mxu0 0
    %527 = vmatprep.subr.bf16.mxu0 0
    %528 = vmatpush1.bf16.msra.mxu0 0
    %529 = vmatprep.subr.bf16.mxu0 0
    %530 = vmatpush1.bf16.msra.mxu0 0
    %531 = vmatprep.subr.bf16.mxu0 0
    %532 = vmatpush1.bf16.msra.mxu0 0
    %533 = vmatprep.subr.bf16.mxu0 0
    %534 = vmatpush1.bf16.msra.mxu0 0
    %535 = vmatprep.subr.bf16.mxu0 0
    %536 = vmatpush1.bf16.msra.mxu0 0
    %537 = vmatprep.subr.bf16.mxu0 0
    %538 = vmatpush1.bf16.msra.mxu0 0
    %539 = vmatprep.subr.bf16.mxu0 0
    %540 = vmatpush1.bf16.msra.mxu0 0
    %541 = vmatprep.subr.bf16.mxu0 0
    %542 = vmatpush1.bf16.msra.mxu0 0
    %543 = vmatprep.subr.bf16.mxu0 0
    %544 = vmatpush1.bf16.msra.mxu0 0
    %545 = vmatprep.subr.bf16.mxu0 0
    %546 = vmatpush1.bf16.msra.mxu0 0
    %547 = vmatprep.mubr.bf16.mxu0 0
    %548 = vmatmul.mubr.bf16.gmra.mrb[0].mxu0 %v510
    %v549 = vpop.f32.mrb[0].mxu0
    %v550 = vadd.f32 0.0, %v549
    %v551 = vpop.f32.mrb[0].mxu0
    %v552 = vpop.f32.mrb[0].mxu0
    %v553 = vpop.f32.mrb[0].mxu0
    %554 = vdwg.mxu0
    %555 = vrot.lane.b32.xlu0 %v113, 112
    %v556 = vpop.permute.xlu0 %555
    %557 = vrot.lane.b32.xlu0 %v113, 80
    %v558 = vpop.permute.xlu0 %557
    %v560 = vsel %vm118, %v556, 0
    %v563 = vsel %vm118, %v558, 0
    %565 = vmatprep.subr.bf16.mxu0 0
    %566 = vmatpush1.bf16.xpose.msra.mxu0 %v563
    %567 = vmatprep.subr.bf16.mxu0 0
    %568 = vmatpush1.bf16.xpose.msra.mxu0 0
    %569 = vmatprep.subr.bf16.mxu0 0
    %570 = vmatpush1.bf16.xpose.msra.mxu0 0
    %571 = vmatprep.subr.bf16.mxu0 0
    %572 = vmatpush1.bf16.xpose.msra.mxu0 0
    %573 = vmatprep.subr.bf16.mxu0 0
    %574 = vmatpush1.bf16.xpose.msra.mxu0 0
    %575 = vmatprep.subr.bf16.mxu0 0
    %576 = vmatpush1.bf16.xpose.msra.mxu0 0
    %577 = vmatprep.subr.bf16.mxu0 0
    %578 = vmatpush1.bf16.xpose.msra.mxu0 0
    %579 = vmatprep.subr.bf16.mxu0 0
    %580 = vmatpush1.bf16.xpose.msra.mxu0 0
    %581 = vmatprep.subr.bf16.mxu0 0
    %582 = vmatpush1.bf16.xpose.msra.mxu0 0
    %583 = vmatprep.subr.bf16.mxu0 0
    %584 = vmatpush1.bf16.xpose.msra.mxu0 0
    %585 = vmatprep.subr.bf16.mxu0 0
    %586 = vmatpush1.bf16.xpose.msra.mxu0 0
    %587 = vmatprep.subr.bf16.mxu0 0
    %588 = vmatpush1.bf16.xpose.msra.mxu0 0
    %589 = vmatprep.subr.bf16.mxu0 0
    %590 = vmatpush1.bf16.xpose.msra.mxu0 0
    %591 = vmatprep.subr.bf16.mxu0 0
    %592 = vmatpush1.bf16.xpose.msra.mxu0 0
    %593 = vmatprep.subr.bf16.mxu0 0
    %594 = vmatpush1.bf16.xpose.msra.mxu0 0
    %595 = vmatprep.subr.bf16.mxu0 0
    %596 = vmatpush1.bf16.xpose.msra.mxu0 0
    %597 = vmatprep.mubr.bf16.mxu0 0
    %598 = vmatmul.mubr.bf16.gmra.mrb[0].mxu0 %v560
    %v599 = vpop.f32.mrb[0].mxu0
    %v600 = vadd.f32 0.0, %v599
    %v601 = vpop.f32.mrb[0].mxu0
    %v602 = vpop.f32.mrb[0].mxu0
    %v603 = vpop.f32.mrb[0].mxu0
    %604 = vdwg.mxu0
    %605 = vrot.lane.b32.xlu0 %v114, 112
    %v606 = vpop.permute.xlu0 %605
    %607 = vrot.lane.b32.xlu0 %v114, 80
    %v608 = vpop.permute.xlu0 %607
    %v610 = vsel %vm118, %v606, 0
    %v613 = vsel %vm118, %v608, 0
    %615 = vmatprep.subr.bf16.mxu0 0
    %616 = vmatpush1.bf16.xpose.msra.mxu0 %v613
    %617 = vmatprep.subr.bf16.mxu0 0
    %618 = vmatpush1.bf16.xpose.msra.mxu0 0
    %619 = vmatprep.subr.bf16.mxu0 0
    %620 = vmatpush1.bf16.xpose.msra.mxu0 0
    %621 = vmatprep.subr.bf16.mxu0 0
    %622 = vmatpush1.bf16.xpose.msra.mxu0 0
    %623 = vmatprep.subr.bf16.mxu0 0
    %624 = vmatpush1.bf16.xpose.msra.mxu0 0
    %625 = vmatprep.subr.bf16.mxu0 0
    %626 = vmatpush1.bf16.xpose.msra.mxu0 0
    %627 = vmatprep.subr.bf16.mxu0 0
    %628 = vmatpush1.bf16.xpose.msra.mxu0 0
    %629 = vmatprep.subr.bf16.mxu0 0
    %630 = vmatpush1.bf16.xpose.msra.mxu0 0
    %631 = vmatprep.subr.bf16.mxu0 0
    %632 = vmatpush1.bf16.xpose.msra.mxu0 0
    %633 = vmatprep.subr.bf16.mxu0 0
    %634 = vmatpush1.bf16.xpose.msra.mxu0 0
    %635 = vmatprep.subr.bf16.mxu0 0
    %636 = vmatpush1.bf16.xpose.msra.mxu0 0
    %637 = vmatprep.subr.bf16.mxu0 0
    %638 = vmatpush1.bf16.xpose.msra.mxu0 0
    %639 = vmatprep.subr.bf16.mxu0 0
    %640 = vmatpush1.bf16.xpose.msra.mxu0 0
    %641 = vmatprep.subr.bf16.mxu0 0
    %642 = vmatpush1.bf16.xpose.msra.mxu0 0
    %643 = vmatprep.subr.bf16.mxu0 0
    %644 = vmatpush1.bf16.xpose.msra.mxu0 0
    %645 = vmatprep.subr.bf16.mxu0 0
    %646 = vmatpush1.bf16.xpose.msra.mxu0 0
    %647 = vmatprep.mubr.bf16.mxu0 0
    %648 = vmatmul.mubr.bf16.gmra.mrb[0].mxu0 %v610
    %v649 = vpop.f32.mrb[0].mxu0
    %v650 = vadd.f32 0.0, %v649
    %v651 = vpop.f32.mrb[0].mxu0
    %v652 = vpop.f32.mrb[0].mxu0
    %v653 = vpop.f32.mrb[0].mxu0
    %654 = vdwg.mxu0
    %v655 = vsel %vm118, %v600, -inf
    %656 = vmax.xlane.f32.xlu0 %v655
    %v657 = vpop.xlane.xlu0 %656
    %v658 = vsel %vm118, %v650, -inf
    %659 = vmax.xlane.f32.xlu0 %v658
    %v660 = vpop.xlane.xlu0 %659
    %v661 = vsub.f32 %v600, %v657
    %v662 = vsub.f32 %v650, %v660
    %v663 = vmul.f32 %v661, 1.442695
    %v664 = vpow.pop %v663
    %v665 = vmul.f32 %v662, 1.442695
    %v666 = vpow.pop %v665
    %v667 = vsel %vm118, %v664, 0.0
    %668 = vadd.xlane.f32.xlu0 %v667
    %v669 = vpop.xlane.xlu0 %668
    %v670 = vsel %vm118, %v666, 0.0
    %671 = vadd.xlane.f32.xlu0 %v670
    %v672 = vpop.xlane.xlu0 %671
    %v673 = vrcp.pop %v669
    %v674 = vrcp.pop %v672
    %v675 = vmul.f32 %v664, %v673
    %v676 = vmul.f32 %v666, %v674
    %v677 = vpack.c.bf16 %v675, %v675
    %v678 = vpack.c.bf16 %v676, %v676
    %679 = vrot.lane.b32.xlu0 %v113, 48
    %v680 = vpop.permute.xlu0 %679
    %v682 = vsel %vm118, %v677, 0
    %v685 = vsel %vm243, %v680, 0
    %687 = vmatprep.subr.bf16.mxu0 0
    %688 = vmatpush1.bf16.msra.mxu0 %v685
    %689 = vmatprep.subr.bf16.mxu0 0
    %690 = vmatpush1.bf16.msra.mxu0 0
    %691 = vmatprep.subr.bf16.mxu0 0
    %692 = vmatpush1.bf16.msra.mxu0 0
    %693 = vmatprep.subr.bf16.mxu0 0
    %694 = vmatpush1.bf16.msra.mxu0 0
    %695 = vmatprep.subr.bf16.mxu0 0
    %696 = vmatpush1.bf16.msra.mxu0 0
    %697 = vmatprep.subr.bf16.mxu0 0
    %698 = vmatpush1.bf16.msra.mxu0 0
    %699 = vmatprep.subr.bf16.mxu0 0
    %700 = vmatpush1.bf16.msra.mxu0 0
    %701 = vmatprep.subr.bf16.mxu0 0
    %702 = vmatpush1.bf16.msra.mxu0 0
    %703 = vmatprep.subr.bf16.mxu0 0
    %704 = vmatpush1.bf16.msra.mxu0 0
    %705 = vmatprep.subr.bf16.mxu0 0
    %706 = vmatpush1.bf16.msra.mxu0 0
    %707 = vmatprep.subr.bf16.mxu0 0
    %708 = vmatpush1.bf16.msra.mxu0 0
    %709 = vmatprep.subr.bf16.mxu0 0
    %710 = vmatpush1.bf16.msra.mxu0 0
    %711 = vmatprep.subr.bf16.mxu0 0
    %712 = vmatpush1.bf16.msra.mxu0 0
    %713 = vmatprep.subr.bf16.mxu0 0
    %714 = vmatpush1.bf16.msra.mxu0 0
    %715 = vmatprep.subr.bf16.mxu0 0
    %716 = vmatpush1.bf16.msra.mxu0 0
    %717 = vmatprep.subr.bf16.mxu0 0
    %718 = vmatpush1.bf16.msra.mxu0 0
    %719 = vmatprep.mubr.bf16.mxu0 0
    %720 = vmatmul.mubr.bf16.gmra.mrb[0].mxu0 %v682
    %v721 = vpop.f32.mrb[0].mxu0
    %v722 = vadd.f32 0.0, %v721
    %v723 = vpop.f32.mrb[0].mxu0
    %v724 = vpop.f32.mrb[0].mxu0
    %v725 = vpop.f32.mrb[0].mxu0
    %726 = vdwg.mxu0
    %727 = vrot.lane.b32.xlu0 %v114, 48
    %v728 = vpop.permute.xlu0 %727
    %v730 = vsel %vm118, %v678, 0
    %v733 = vsel %vm243, %v728, 0
    %735 = vmatprep.subr.bf16.mxu0 0
    %736 = vmatpush1.bf16.msra.mxu0 %v733
    %737 = vmatprep.subr.bf16.mxu0 0
    %738 = vmatpush1.bf16.msra.mxu0 0
    %739 = vmatprep.subr.bf16.mxu0 0
    %740 = vmatpush1.bf16.msra.mxu0 0
    %741 = vmatprep.subr.bf16.mxu0 0
    %742 = vmatpush1.bf16.msra.mxu0 0
    %743 = vmatprep.subr.bf16.mxu0 0
    %744 = vmatpush1.bf16.msra.mxu0 0
    %745 = vmatprep.subr.bf16.mxu0 0
    %746 = vmatpush1.bf16.msra.mxu0 0
    %747 = vmatprep.subr.bf16.mxu0 0
    %748 = vmatpush1.bf16.msra.mxu0 0
    %749 = vmatprep.subr.bf16.mxu0 0
    %750 = vmatpush1.bf16.msra.mxu0 0
    %751 = vmatprep.subr.bf16.mxu0 0
    %752 = vmatpush1.bf16.msra.mxu0 0
    %753 = vmatprep.subr.bf16.mxu0 0
    %754 = vmatpush1.bf16.msra.mxu0 0
    %755 = vmatprep.subr.bf16.mxu0 0
    %756 = vmatpush1.bf16.msra.mxu0 0
    %757 = vmatprep.subr.bf16.mxu0 0
    %758 = vmatpush1.bf16.msra.mxu0 0
    %759 = vmatprep.subr.bf16.mxu0 0
    %760 = vmatpush1.bf16.msra.mxu0 0
    %761 = vmatprep.subr.bf16.mxu0 0
    %762 = vmatpush1.bf16.msra.mxu0 0
    %763 = vmatprep.subr.bf16.mxu0 0
    %764 = vmatpush1.bf16.msra.mxu0 0
    %765 = vmatprep.subr.bf16.mxu0 0
    %766 = vmatpush1.bf16.msra.mxu0 0
    %767 = vmatprep.mubr.bf16.mxu0 0
    %768 = vmatmul.mubr.bf16.gmra.mrb[0].mxu0 %v730
    %v769 = vpop.f32.mrb[0].mxu0
    %v770 = vadd.f32 0.0, %v769
    %v771 = vpop.f32.mrb[0].mxu0
    %v772 = vpop.f32.mrb[0].mxu0
    %v773 = vpop.f32.mrb[0].mxu0
    %774 = vdwg.mxu0
    %775 = vrot.lane.b32.xlu0 %v113, 104
    %v776 = vpop.permute.xlu0 %775
    %777 = vrot.lane.b32.xlu0 %v113, 72
    %v778 = vpop.permute.xlu0 %777
    %v780 = vsel %vm118, %v776, 0
    %v783 = vsel %vm118, %v778, 0
    %785 = vmatprep.subr.bf16.mxu0 0
    %786 = vmatpush1.bf16.xpose.msra.mxu0 %v783
    %787 = vmatprep.subr.bf16.mxu0 0
    %788 = vmatpush1.bf16.xpose.msra.mxu0 0
    %789 = vmatprep.subr.bf16.mxu0 0
    %790 = vmatpush1.bf16.xpose.msra.mxu0 0
    %791 = vmatprep.subr.bf16.mxu0 0
    %792 = vmatpush1.bf16.xpose.msra.mxu0 0
    %793 = vmatprep.subr.bf16.mxu0 0
    %794 = vmatpush1.bf16.xpose.msra.mxu0 0
    %795 = vmatprep.subr.bf16.mxu0 0
    %796 = vmatpush1.bf16.xpose.msra.mxu0 0
    %797 = vmatprep.subr.bf16.mxu0 0
    %798 = vmatpush1.bf16.xpose.msra.mxu0 0
    %799 = vmatprep.subr.bf16.mxu0 0
    %800 = vmatpush1.bf16.xpose.msra.mxu0 0
    %801 = vmatprep.subr.bf16.mxu0 0
    %802 = vmatpush1.bf16.xpose.msra.mxu0 0
    %803 = vmatprep.subr.bf16.mxu0 0
    %804 = vmatpush1.bf16.xpose.msra.mxu0 0
    %805 = vmatprep.subr.bf16.mxu0 0
    %806 = vmatpush1.bf16.xpose.msra.mxu0 0
    %807 = vmatprep.subr.bf16.mxu0 0
    %808 = vmatpush1.bf16.xpose.msra.mxu0 0
    %809 = vmatprep.subr.bf16.mxu0 0
    %810 = vmatpush1.bf16.xpose.msra.mxu0 0
    %811 = vmatprep.subr.bf16.mxu0 0
    %812 = vmatpush1.bf16.xpose.msra.mxu0 0
    %813 = vmatprep.subr.bf16.mxu0 0
    %814 = vmatpush1.bf16.xpose.msra.mxu0 0
    %815 = vmatprep.subr.bf16.mxu0 0
    %816 = vmatpush1.bf16.xpose.msra.mxu0 0
    %817 = vmatprep.mubr.bf16.mxu0 0
    %818 = vmatmul.mubr.bf16.gmra.mrb[0].mxu0 %v780
    %v819 = vpop.f32.mrb[0].mxu0
    %v820 = vadd.f32 0.0, %v819
    %v821 = vpop.f32.mrb[0].mxu0
    %v822 = vpop.f32.mrb[0].mxu0
    %v823 = vpop.f32.mrb[0].mxu0
    %824 = vdwg.mxu0
    %825 = vrot.lane.b32.xlu0 %v114, 104
    %v826 = vpop.permute.xlu0 %825
    %827 = vrot.lane.b32.xlu0 %v114, 72
    %v828 = vpop.permute.xlu0 %827
    %v830 = vsel %vm118, %v826, 0
    %v833 = vsel %vm118, %v828, 0
    %835 = vmatprep.subr.bf16.mxu0 0
    %836 = vmatpush1.bf16.xpose.msra.mxu0 %v833
    %837 = vmatprep.subr.bf16.mxu0 0
    %838 = vmatpush1.bf16.xpose.msra.mxu0 0
    %839 = vmatprep.subr.bf16.mxu0 0
    %840 = vmatpush1.bf16.xpose.msra.mxu0 0
    %841 = vmatprep.subr.bf16.mxu0 0
    %842 = vmatpush1.bf16.xpose.msra.mxu0 0
    %843 = vmatprep.subr.bf16.mxu0 0
    %844 = vmatpush1.bf16.xpose.msra.mxu0 0
    %845 = vmatprep.subr.bf16.mxu0 0
    %846 = vmatpush1.bf16.xpose.msra.mxu0 0
    %847 = vmatprep.subr.bf16.mxu0 0
    %848 = vmatpush1.bf16.xpose.msra.mxu0 0
    %849 = vmatprep.subr.bf16.mxu0 0
    %850 = vmatpush1.bf16.xpose.msra.mxu0 0
    %851 = vmatprep.subr.bf16.mxu0 0
    %852 = vmatpush1.bf16.xpose.msra.mxu0 0
    %853 = vmatprep.subr.bf16.mxu0 0
    %854 = vmatpush1.bf16.xpose.msra.mxu0 0
    %855 = vmatprep.subr.bf16.mxu0 0
    %856 = vmatpush1.bf16.xpose.msra.mxu0 0
    %857 = vmatprep.subr.bf16.mxu0 0
    %858 = vmatpush1.bf16.xpose.msra.mxu0 0
    %859 = vmatprep.subr.bf16.mxu0 0
    %860 = vmatpush1.bf16.xpose.msra.mxu0 0
    %861 = vmatprep.subr.bf16.mxu0 0
    %862 = vmatpush1.bf16.xpose.msra.mxu0 0
    %863 = vmatprep.subr.bf16.mxu0 0
    %864 = vmatpush1.bf16.xpose.msra.mxu0 0
    %865 = vmatprep.subr.bf16.mxu0 0
    %866 = vmatpush1.bf16.xpose.msra.mxu0 0
    %867 = vmatprep.mubr.bf16.mxu0 0
    %868 = vmatmul.mubr.bf16.gmra.mrb[0].mxu0 %v830
    %v869 = vpop.f32.mrb[0].mxu0
    %v870 = vadd.f32 0.0, %v869
    %v871 = vpop.f32.mrb[0].mxu0
    %v872 = vpop.f32.mrb[0].mxu0
    %v873 = vpop.f32.mrb[0].mxu0
    %874 = vdwg.mxu0
    %v875 = vsel %vm118, %v820, -inf
    %876 = vmax.xlane.f32.xlu0 %v875
    %v877 = vpop.xlane.xlu0 %876
    %v878 = vsel %vm118, %v870, -inf
    %879 = vmax.xlane.f32.xlu0 %v878
    %v880 = vpop.xlane.xlu0 %879
    %v881 = vsub.f32 %v820, %v877
    %v882 = vsub.f32 %v870, %v880
    %v883 = vmul.f32 %v881, 1.442695
    %v884 = vpow.pop %v883
    %v885 = vmul.f32 %v882, 1.442695
    %v886 = vpow.pop %v885
    %v887 = vsel %vm118, %v884, 0.0
    %888 = vadd.xlane.f32.xlu0 %v887
    %v889 = vpop.xlane.xlu0 %888
    %v890 = vsel %vm118, %v886, 0.0
    %891 = vadd.xlane.f32.xlu0 %v890
    %v892 = vpop.xlane.xlu0 %891
    %v893 = vrcp.pop %v889
    %v894 = vrcp.pop %v892
    %v895 = vmul.f32 %v884, %v893
    %v896 = vmul.f32 %v886, %v894
    %v897 = vpack.c.bf16 %v895, %v895
    %v898 = vpack.c.bf16 %v896, %v896
    %899 = vrot.lane.b32.xlu0 %v113, 40
    %v900 = vpop.permute.xlu0 %899
    %v902 = vsel %vm118, %v897, 0
    %v905 = vsel %vm243, %v900, 0
    %907 = vmatprep.subr.bf16.mxu0 0
    %908 = vmatpush1.bf16.msra.mxu0 %v905
    %909 = vmatprep.subr.bf16.mxu0 0
    %910 = vmatpush1.bf16.msra.mxu0 0
    %911 = vmatprep.subr.bf16.mxu0 0
    %912 = vmatpush1.bf16.msra.mxu0 0
    %913 = vmatprep.subr.bf16.mxu0 0
    %914 = vmatpush1.bf16.msra.mxu0 0
    %915 = vmatprep.subr.bf16.mxu0 0
    %916 = vmatpush1.bf16.msra.mxu0 0
    %917 = vmatprep.subr.bf16.mxu0 0
    %918 = vmatpush1.bf16.msra.mxu0 0
    %919 = vmatprep.subr.bf16.mxu0 0
    %920 = vmatpush1.bf16.msra.mxu0 0
    %921 = vmatprep.subr.bf16.mxu0 0
    %922 = vmatpush1.bf16.msra.mxu0 0
    %923 = vmatprep.subr.bf16.mxu0 0
    %924 = vmatpush1.bf16.msra.mxu0 0
    %925 = vmatprep.subr.bf16.mxu0 0
    %926 = vmatpush1.bf16.msra.mxu0 0
    %927 = vmatprep.subr.bf16.mxu0 0
    %928 = vmatpush1.bf16.msra.mxu0 0
    %929 = vmatprep.subr.bf16.mxu0 0
    %930 = vmatpush1.bf16.msra.mxu0 0
    %931 = vmatprep.subr.bf16.mxu0 0
    %932 = vmatpush1.bf16.msra.mxu0 0
    %933 = vmatprep.subr.bf16.mxu0 0
    %934 = vmatpush1.bf16.msra.mxu0 0
    %935 = vmatprep.subr.bf16.mxu0 0
    %936 = vmatpush1.bf16.msra.mxu0 0
    %937 = vmatprep.subr.bf16.mxu0 0
    %938 = vmatpush1.bf16.msra.mxu0 0
    %939 = vmatprep.mubr.bf16.mxu0 0
    %940 = vmatmul.mubr.bf16.gmra.mrb[0].mxu0 %v902
    %v941 = vpop.f32.mrb[0].mxu0
    %v942 = vadd.f32 0.0, %v941
    %v943 = vpop.f32.mrb[0].mxu0
    %v944 = vpop.f32.mrb[0].mxu0
    %v945 = vpop.f32.mrb[0].mxu0
    %946 = vdwg.mxu0
    %947 = vrot.lane.b32.xlu0 %v114, 40
    %v948 = vpop.permute.xlu0 %947
    %v950 = vsel %vm118, %v898, 0
    %v953 = vsel %vm243, %v948, 0
    %955 = vmatprep.subr.bf16.mxu0 0
    %956 = vmatpush1.bf16.msra.mxu0 %v953
    %957 = vmatprep.subr.bf16.mxu0 0
    %958 = vmatpush1.bf16.msra.mxu0 0
    %959 = vmatprep.subr.bf16.mxu0 0
    %960 = vmatpush1.bf16.msra.mxu0 0
    %961 = vmatprep.subr.bf16.mxu0 0
    %962 = vmatpush1.bf16.msra.mxu0 0
    %963 = vmatprep.subr.bf16.mxu0 0
    %964 = vmatpush1.bf16.msra.mxu0 0
    %965 = vmatprep.subr.bf16.mxu0 0
    %966 = vmatpush1.bf16.msra.mxu0 0
    %967 = vmatprep.subr.bf16.mxu0 0
    %968 = vmatpush1.bf16.msra.mxu0 0
    %969 = vmatprep.subr.bf16.mxu0 0
    %970 = vmatpush1.bf16.msra.mxu0 0
    %971 = vmatprep.subr.bf16.mxu0 0
    %972 = vmatpush1.bf16.msra.mxu0 0
    %973 = vmatprep.subr.bf16.mxu0 0
    %974 = vmatpush1.bf16.msra.mxu0 0
    %975 = vmatprep.subr.bf16.mxu0 0
    %976 = vmatpush1.bf16.msra.mxu0 0
    %977 = vmatprep.subr.bf16.mxu0 0
    %978 = vmatpush1.bf16.msra.mxu0 0
    %979 = vmatprep.subr.bf16.mxu0 0
    %980 = vmatpush1.bf16.msra.mxu0 0
    %981 = vmatprep.subr.bf16.mxu0 0
    %982 = vmatpush1.bf16.msra.mxu0 0
    %983 = vmatprep.subr.bf16.mxu0 0
    %984 = vmatpush1.bf16.msra.mxu0 0
    %985 = vmatprep.subr.bf16.mxu0 0
    %986 = vmatpush1.bf16.msra.mxu0 0
    %987 = vmatprep.mubr.bf16.mxu0 0
    %988 = vmatmul.mubr.bf16.gmra.mrb[0].mxu0 %v950
    %v989 = vpop.f32.mrb[0].mxu0
    %v990 = vadd.f32 0.0, %v989
    %v991 = vpop.f32.mrb[0].mxu0
    %v992 = vpop.f32.mrb[0].mxu0
    %v993 = vpop.f32.mrb[0].mxu0
    %994 = vdwg.mxu0
    %997 = vrot.lane.b32.xlu0 %v502, 8
    %v998 = vpop.permute.xlu0 %997
    %999 = vrot.lane.b32.xlu0 %v550, 8
    %v1000 = vpop.permute.xlu0 %999
    %1005 = vrot.lane.b32.xlu0 %v722, 16
    %v1006 = vpop.permute.xlu0 %1005
    %1007 = vrot.lane.b32.xlu0 %v770, 16
    %v1008 = vpop.permute.xlu0 %1007
    %1013 = vrot.lane.b32.xlu0 %v942, 24
    %v1014 = vpop.permute.xlu0 %1013
    %1015 = vrot.lane.b32.xlu0 %v990, 24
    %v1016 = vpop.permute.xlu0 %1015
    %v1019 = vsel %vm118, %v282, %v998
    %v1020 = vsel %vm118, %v330, %v1000
    %vm1021 = vcmask 130048
    %v1022 = vsel %vm1021, %v1019, %v1006
    %v1023 = vsel %vm1021, %v1020, %v1008
    %vm1024 = vcmask 195584
    %v1025 = vsel %vm1024, %v1022, %v1014
    %v1026 = vsel %vm1024, %v1023, %v1016
    %v1027 = vpack.c.bf16 %v1026, %v1025
    %v1028 = vld [vmem:[%s2] sm:$0xf]
    %v1029 = vld [vmem:[%s2 + $0x4] sm:$0xf]
    %v1030 = vld [vmem:[%s2 + $0x8] sm:$0xf]
    %v1031 = vld [vmem:[%s2 + $0xc] sm:$0xf]
    %v1032 = vld [vmem:[%s3] sm:$0x1]
    %v1034 = vlaneseq
    %v1035 = vshrl.u32 %v1034, 7
    %v1036 = vsub.s32 0, %v1035
    %v1037 = vrot.slane %v1032, %v1036
    %v1043 = vunpack.c.l.b16 %v1028
    %v1044 = vunpack.c.l.b16 %v1029
    %v1045 = vunpack.c.l.b16 %v1030
    %v1046 = vunpack.c.l.b16 %v1031
    %v1047 = vpack.c.b16 %v1044, %v1043
    %v1048 = vpack.c.b16 %v1046, %v1045
    %v1052 = vsel %vm68, %v1027, 0
    %1054 = vmatprep.subr.bf16.mxu0 0
    %1055 = vmatpush1.bf16.msra.mxu0 %v1047
    %1056 = vmatprep.subr.bf16.mxu0 0
    %1057 = vmatpush1.bf16.msra.mxu0 %v1048
    %1058 = vmatprep.subr.bf16.mxu0 0
    %1059 = vmatpush1.bf16.msra.mxu0 0
    %1060 = vmatprep.subr.bf16.mxu0 0
    %1061 = vmatpush1.bf16.msra.mxu0 0
    %1062 = vmatprep.subr.bf16.mxu0 0
    %1063 = vmatpush1.bf16.msra.mxu0 0
    %1064 = vmatprep.subr.bf16.mxu0 0
    %1065 = vmatpush1.bf16.msra.mxu0 0
    %1066 = vmatprep.subr.bf16.mxu0 0
    %1067 = vmatpush1.bf16.msra.mxu0 0
    %1068 = vmatprep.subr.bf16.mxu0 0
    %1069 = vmatpush1.bf16.msra.mxu0 0
    %1070 = vmatprep.subr.bf16.mxu0 0
    %1071 = vmatpush1.bf16.msra.mxu0 0
    %1072 = vmatprep.subr.bf16.mxu0 0
    %1073 = vmatpush1.bf16.msra.mxu0 0
    %1074 = vmatprep.subr.bf16.mxu0 0
    %1075 = vmatpush1.bf16.msra.mxu0 0
    %1076 = vmatprep.subr.bf16.mxu0 0
    %1077 = vmatpush1.bf16.msra.mxu0 0
    %1078 = vmatprep.subr.bf16.mxu0 0
    %1079 = vmatpush1.bf16.msra.mxu0 0
    %1080 = vmatprep.subr.bf16.mxu0 0
    %1081 = vmatpush1.bf16.msra.mxu0 0
    %1082 = vmatprep.subr.bf16.mxu0 0
    %1083 = vmatpush1.bf16.msra.mxu0 0
    %1084 = vmatprep.subr.bf16.mxu0 0
    %1085 = vmatpush1.bf16.msra.mxu0 0
    %1086 = vmatprep.mubr.bf16.mxu0 0
    %1087 = vmatmul.mubr.bf16.gmra.mrb[0].mxu0 %v1052
    %v1088 = vpop.f32.mrb[0].mxu0
    %v1089 = vadd.f32 %v1037, %v1088
    %v1090 = vpop.f32.mrb[0].mxu0
    %v1091 = vpop.f32.mrb[0].mxu0
    %v1092 = vadd.f32 %v1037, %v1091
    %v1093 = vpop.f32.mrb[0].mxu0
    %1094 = vdwg.mxu0
    %v1095 = vadd.f32 %v1089, %v49
    %v1096 = vadd.f32 %v1092, %v50
    %v1097 = vld [vmem:[%s4] sm:$0x1]
    %v1098 = vld [vmem:[%s5] sm:$0x1]
    %v1099 = vsel %vm68, %v1095, 0.0
    %1100 = vadd.xlane.f32.xlu0 %v1099
    %v1101 = vpop.xlane.xlu0 %1100
    %v1102 = vsel %vm68, %v1096, 0.0
    %1103 = vadd.xlane.f32.xlu0 %v1102
    %v1104 = vpop.xlane.xlu0 %1103
    %v1105 = vrcp.pop 32.0
    %v1106 = vmul.f32 %v1101, %v1105
    %v1107 = vmul.f32 %v1104, %v1105
    %v1108 = vsub.f32 %v1095, %v1106
    %v1109 = vsub.f32 %v1096, %v1107
    %v1110 = vmul.f32 %v1108, %v1108
    %v1111 = vmul.f32 %v1109, %v1109
    %v1112 = vsel %vm68, %v1110, 0.0
    %1113 = vadd.xlane.f32.xlu0 %v1112
    %v1114 = vpop.xlane.xlu0 %1113
    %v1115 = vsel %vm68, %v1111, 0.0
    %1116 = vadd.xlane.f32.xlu0 %v1115
    %v1117 = vpop.xlane.xlu0 %1116
    %v1118 = vmul.f32 %v1114, %v1105
    %v1119 = vmul.f32 %v1117, %v1105
    %v1120 = vadd.f32 %v1118, 1e-05
    %v1121 = vadd.f32 %v1119, 1e-05
    %v1122 = vrsqrt.pop %v1120
    %v1123 = vrsqrt.pop %v1121
    %v1124 = vmul.f32 %v1108, %v1122
    %v1125 = vmul.f32 %v1109, %v1123
    %v1127 = vlaneseq
    %v1128 = vshrl.u32 %v1127, 7
    %v1129 = vsub.s32 0, %v1128
    %v1130 = vrot.slane %v1097, %v1129
    %v1132 = vmul.f32 %v1124, %v1130
    %v1133 = vmul.f32 %v1125, %v1130
    %v1135 = vlaneseq
    %v1136 = vshrl.u32 %v1135, 7
    %v1137 = vsub.s32 0, %v1136
    %v1138 = vrot.slane %v1098, %v1137
    %v1140 = vadd.f32 %v1132, %v1138
    %v1141 = vadd.f32 %v1133, %v1138
    %v1142 = vpack.c.bf16 %v1141, %v1140
    %v1143 = vld [vmem:[%s6] sm:$0xf]
    %v1144 = vld [vmem:[%s6 + $0x4] sm:$0xf]
    %v1145 = vld [vmem:[%s6 + $0x8] sm:$0xf]
    %v1146 = vld [vmem:[%s6 + $0xc] sm:$0xf]
    %v1147 = vld [vmem:[%s7] sm:$0x1]
    %v1149 = vlaneseq
    %v1150 = vshrl.u32 %v1149, 7
    %v1151 = vsub.s32 0, %v1150
    %v1152 = vrot.slane %v1147, %v1151
    %v1158 = vunpack.c.l.b16 %v1143
    %v1159 = vunpack.c.l.b16 %v1144
    %v1160 = vunpack.c.l.b16 %v1145
    %v1161 = vunpack.c.l.b16 %v1146
    %v1162 = vpack.c.b16 %v1159, %v1158
    %v1163 = vpack.c.b16 %v1161, %v1160
    %v1167 = vsel %vm68, %v1142, 0
    %1169 = vmatprep.subr.bf16.mxu0 0
    %1170 = vmatpush1.bf16.msra.mxu0 %v1162
    %1171 = vmatprep.subr.bf16.mxu0 0
    %1172 = vmatpush1.bf16.msra.mxu0 %v1163
    %1173 = vmatprep.subr.bf16.mxu0 0
    %1174 = vmatpush1.bf16.msra.mxu0 0
    %1175 = vmatprep.subr.bf16.mxu0 0
    %1176 = vmatpush1.bf16.msra.mxu0 0
    %1177 = vmatprep.subr.bf16.mxu0 0
    %1178 = vmatpush1.bf16.msra.mxu0 0
    %1179 = vmatprep.subr.bf16.mxu0 0
    %1180 = vmatpush1.bf16.msra.mxu0 0
    %1181 = vmatprep.subr.bf16.mxu0 0
    %1182 = vmatpush1.bf16.msra.mxu0 0
    %1183 = vmatprep.subr.bf16.mxu0 0
    %1184 = vmatpush1.bf16.msra.mxu0 0
    %1185 = vmatprep.subr.bf16.mxu0 0
    %1186 = vmatpush1.bf16.msra.mxu0 0
    %1187 = vmatprep.subr.bf16.mxu0 0
    %1188 = vmatpush1.bf16.msra.mxu0 0
    %1189 = vmatprep.subr.bf16.mxu0 0
    %1190 = vmatpush1.bf16.msra.mxu0 0
    %1191 = vmatprep.subr.bf16.mxu0 0
    %1192 = vmatpush1.bf16.msra.mxu0 0
    %1193 = vmatprep.subr.bf16.mxu0 0
    %1194 = vmatpush1.bf16.msra.mxu0 0
    %1195 = vmatprep.subr.bf16.mxu0 0
    %1196 = vmatpush1.bf16.msra.mxu0 0
    %1197 = vmatprep.subr.bf16.mxu0 0
    %1198 = vmatpush1.bf16.msra.mxu0 0
    %1199 = vmatprep.subr.bf16.mxu0 0
    %1200 = vmatpush1.bf16.msra.mxu0 0
    %1201 = vmatprep.mubr.bf16.mxu0 0
    %1202 = vmatmul.mubr.bf16.gmra.mrb[0].mxu0 %v1167
    %v1203 = vpop.f32.mrb[0].mxu0
    %v1204 = vadd.f32 %v1152, %v1203
    %v1205 = vpop.f32.mrb[0].mxu0
    %v1206 = vpop.f32.mrb[0].mxu0
    %v1207 = vadd.f32 %v1152, %v1206
    %v1208 = vpop.f32.mrb[0].mxu0
    %1209 = vdwg.mxu0
    %v1210 = vmax.f32 %v1204, 0.0
    %v1211 = vmax.f32 %v1207, 0.0
    %v1212 = vpack.c.bf16 %v1211, %v1210
    %v1213 = vld [vmem:[%s8] sm:$0xf]
    %v1214 = vld [vmem:[%s8 + $0x4] sm:$0xf]
    %v1215 = vld [vmem:[%s8 + $0x8] sm:$0xf]
    %v1216 = vld [vmem:[%s8 + $0xc] sm:$0xf]
    %v1217 = vld [vmem:[%s8 + $0x10] sm:$0xf]
    %v1218 = vld [vmem:[%s8 + $0x14] sm:$0xf]
    %v1219 = vld [vmem:[%s8 + $0x18] sm:$0xf]
    %v1220 = vld [vmem:[%s8 + $0x1c] sm:$0xf]
    %v1221 = vld [vmem:[%s8 + $0x20] sm:$0xf]
    %v1222 = vld [vmem:[%s8 + $0x24] sm:$0xf]
    %v1223 = vld [vmem:[%s8 + $0x28] sm:$0xf]
    %v1224 = vld [vmem:[%s8 + $0x2c] sm:$0xf]
    %v1225 = vld [vmem:[%s8 + $0x30] sm:$0xf]
    %v1226 = vld [vmem:[%s8 + $0x34] sm:$0xf]
    %v1227 = vld [vmem:[%s8 + $0x38] sm:$0xf]
    %v1228 = vld [vmem:[%s8 + $0x3c] sm:$0xf]
    %v1229 = vld [vmem:[%s9] sm:$0x1]
    %v1231 = vlaneseq
    %v1232 = vshrl.u32 %v1231, 7
    %v1233 = vsub.s32 0, %v1232
    %v1234 = vrot.slane %v1229, %v1233
    %v1252 = vunpack.c.l.b16 %v1213
    %v1253 = vunpack.c.l.b16 %v1214
    %v1254 = vunpack.c.l.b16 %v1215
    %v1255 = vunpack.c.l.b16 %v1216
    %v1256 = vunpack.c.l.b16 %v1217
    %v1257 = vunpack.c.l.b16 %v1218
    %v1258 = vunpack.c.l.b16 %v1219
    %v1259 = vunpack.c.l.b16 %v1220
    %v1260 = vunpack.c.l.b16 %v1221
    %v1261 = vunpack.c.l.b16 %v1222
    %v1262 = vunpack.c.l.b16 %v1223
    %v1263 = vunpack.c.l.b16 %v1224
    %v1264 = vunpack.c.l.b16 %v1225
    %v1265 = vunpack.c.l.b16 %v1226
    %v1266 = vunpack.c.l.b16 %v1227
    %v1267 = vunpack.c.l.b16 %v1228
    %v1268 = vpack.c.b16 %v1253, %v1252
    %v1269 = vpack.c.b16 %v1255, %v1254
    %v1270 = vpack.c.b16 %v1257, %v1256
    %v1271 = vpack.c.b16 %v1259, %v1258
    %v1272 = vpack.c.b16 %v1261, %v1260
    %v1273 = vpack.c.b16 %v1263, %v1262
    %v1274 = vpack.c.b16 %v1265, %v1264
    %v1275 = vpack.c.b16 %v1267, %v1266
    %1284 = vmatprep.subr.bf16.mxu0 0
    %1285 = vmatpush1.bf16.msra.mxu0 %v1268
    %1286 = vmatprep.subr.bf16.mxu0 0
    %1287 = vmatpush1.bf16.msra.mxu0 %v1269
    %1288 = vmatprep.subr.bf16.mxu0 0
    %1289 = vmatpush1.bf16.msra.mxu0 %v1270
    %1290 = vmatprep.subr.bf16.mxu0 0
    %1291 = vmatpush1.bf16.msra.mxu0 %v1271
    %1292 = vmatprep.subr.bf16.mxu0 0
    %1293 = vmatpush1.bf16.msra.mxu0 %v1272
    %1294 = vmatprep.subr.bf16.mxu0 0
    %1295 = vmatpush1.bf16.msra.mxu0 %v1273
    %1296 = vmatprep.subr.bf16.mxu0 0
    %1297 = vmatpush1.bf16.msra.mxu0 %v1274
    %1298 = vmatprep.subr.bf16.mxu0 0
    %1299 = vmatpush1.bf16.msra.mxu0 %v1275
    %1300 = vmatprep.subr.bf16.mxu0 0
    %1301 = vmatpush1.bf16.msra.mxu0 0
    %1302 = vmatprep.subr.bf16.mxu0 0
    %1303 = vmatpush1.bf16.msra.mxu0 0
    %1304 = vmatprep.subr.bf16.mxu0 0
    %1305 = vmatpush1.bf16.msra.mxu0 0
    %1306 = vmatprep.subr.bf16.mxu0 0
    %1307 = vmatpush1.bf16.msra.mxu0 0
    %1308 = vmatprep.subr.bf16.mxu0 0
    %1309 = vmatpush1.bf16.msra.mxu0 0
    %1310 = vmatprep.subr.bf16.mxu0 0
    %1311 = vmatpush1.bf16.msra.mxu0 0
    %1312 = vmatprep.subr.bf16.mxu0 0
    %1313 = vmatpush1.bf16.msra.mxu0 0
    %1314 = vmatprep.subr.bf16.mxu0 0
    %1315 = vmatpush1.bf16.msra.mxu0 0
    %1316 = vmatprep.mubr.bf16.mxu0 0
    %1317 = vmatmul.mubr.bf16.gmra.mrb[0].mxu0 %v1212
    %v1318 = vpop.f32.mrb[0].mxu0
    %v1319 = vadd.f32 %v1234, %v1318
    %v1320 = vpop.f32.mrb[0].mxu0
    %v1321 = vpop.f32.mrb[0].mxu0
    %v1322 = vadd.f32 %v1234, %v1321
    %v1323 = vpop.f32.mrb[0].mxu0
    %1324 = vdwg.mxu0
    %v1325 = vadd.f32 %v1319, %v1140
    %v1326 = vadd.f32 %v1322, %v1141
    %v1327 = vld [vmem:[%s10] sm:$0x1]
    %v1328 = vld [vmem:[%s11] sm:$0x1]
    %v1329 = vsel %vm68, %v1325, 0.0
    %1330 = vadd.xlane.f32.xlu0 %v1329
    %v1331 = vpop.xlane.xlu0 %1330
    %v1332 = vsel %vm68, %v1326, 0.0
    %1333 = vadd.xlane.f32.xlu0 %v1332
    %v1334 = vpop.xlane.xlu0 %1333
    %v1335 = vmul.f32 %v1331, %v1105
    %v1336 = vmul.f32 %v1334, %v1105
    %v1337 = vsub.f32 %v1325, %v1335
    %v1338 = vsub.f32 %v1326, %v1336
    %v1339 = vmul.f32 %v1337, %v1337
    %v1340 = vmul.f32 %v1338, %v1338
    %v1341 = vsel %vm68, %v1339, 0.0
    %1342 = vadd.xlane.f32.xlu0 %v1341
    %v1343 = vpop.xlane.xlu0 %1342
    %v1344 = vsel %vm68, %v1340, 0.0
    %1345 = vadd.xlane.f32.xlu0 %v1344
    %v1346 = vpop.xlane.xlu0 %1345
    %v1347 = vmul.f32 %v1343, %v1105
    %v1348 = vmul.f32 %v1346, %v1105
    %v1349 = vadd.f32 %v1347, 1e-05
    %v1350 = vadd.f32 %v1348, 1e-05
    %v1351 = vrsqrt.pop %v1349
    %v1352 = vrsqrt.pop %v1350
    %v1353 = vmul.f32 %v1337, %v1351
    %v1354 = vmul.f32 %v1338, %v1352
    %v1356 = vlaneseq
    %v1357 = vshrl.u32 %v1356, 7
    %v1358 = vsub.s32 0, %v1357
    %v1359 = vrot.slane %v1327, %v1358
    %v1361 = vmul.f32 %v1353, %v1359
    %v1362 = vmul.f32 %v1354, %v1359
    %v1364 = vlaneseq
    %v1365 = vshrl.u32 %v1364, 7
    %v1366 = vsub.s32 0, %v1365
    %v1367 = vrot.slane %v1328, %v1366
    %v1369 = vadd.f32 %v1361, %v1367
    %v1370 = vadd.f32 %v1362, %v1367
    %v1371 = vpack.c.bf16 %v1370, %v1369
    %s1372 = scalar_lea.vmem %s1, 16
    %v1373 = vld [vmem:[%s1372] sm:$0xf]
    %v1374 = vld [vmem:[%s1372 + $0x4] sm:$0xf]
    %v1375 = vld [vmem:[%s1372 + $0x8] sm:$0xf]
    %v1376 = vld [vmem:[%s1372 + $0xc] sm:$0xf]
    %v1381 = vunpack.c.l.b16 %v1373
    %v1382 = vunpack.c.l.b16 %v1374
    %v1383 = vunpack.c.l.b16 %v1375
    %v1384 = vunpack.c.l.b16 %v1376
    %v1385 = vpack.c.b16 %v1382, %v1381
    %v1386 = vpack.c.b16 %v1384, %v1383
    %v1390 = vsel %vm68, %v1371, 0
    %1392 = vmatprep.subr.bf16.mxu0 0
    %1393 = vmatpush1.bf16.msra.mxu0 %v1385
    %1394 = vmatprep.subr.bf16.mxu0 0
    %1395 = vmatpush1.bf16.msra.mxu0 %v1386
    %1396 = vmatprep.subr.bf16.mxu0 0
    %1397 = vmatpush1.bf16.msra.mxu0 0
    %1398 = vmatprep.subr.bf16.mxu0 0
    %1399 = vmatpush1.bf16.msra.mxu0 0
    %1400 = vmatprep.subr.bf16.mxu0 0
    %1401 = vmatpush1.bf16.msra.mxu0 0
    %1402 = vmatprep.subr.bf16.mxu0 0
    %1403 = vmatpush1.bf16.msra.mxu0 0
    %1404 = vmatprep.subr.bf16.mxu0 0
    %1405 = vmatpush1.bf16.msra.mxu0 0
    %1406 = vmatprep.subr.bf16.mxu0 0
    %1407 = vmatpush1.bf16.msra.mxu0 0
    %1408 = vmatprep.subr.bf16.mxu0 0
    %1409 = vmatpush1.bf16.msra.mxu0 0
    %1410 = vmatprep.subr.bf16.mxu0 0
    %1411 = vmatpush1.bf16.msra.mxu0 0
    %1412 = vmatprep.subr.bf16.mxu0 0
    %1413 = vmatpush1.bf16.msra.mxu0 0
    %1414 = vmatprep.subr.bf16.mxu0 0
    %1415 = vmatpush1.bf16.msra.mxu0 0
    %1416 = vmatprep.subr.bf16.mxu0 0
    %1417 = vmatpush1.bf16.msra.mxu0 0
    %1418 = vmatprep.subr.bf16.mxu0 0
    %1419 = vmatpush1.bf16.msra.mxu0 0
    %1420 = vmatprep.subr.bf16.mxu0 0
    %1421 = vmatpush1.bf16.msra.mxu0 0
    %1422 = vmatprep.subr.bf16.mxu0 0
    %1423 = vmatpush1.bf16.msra.mxu0 0
    %1424 = vmatprep.mubr.bf16.mxu0 0
    %1425 = vmatmul.mubr.bf16.gmra.mrb[0].mxu0 %v1390
    %v1426 = vpop.f32.mrb[0].mxu0
    %v1427 = vadd.f32 0.0, %v1426
    %v1428 = vpop.f32.mrb[0].mxu0
    %v1429 = vpop.f32.mrb[0].mxu0
    %v1430 = vadd.f32 0.0, %v1429
    %v1431 = vpop.f32.mrb[0].mxu0
    %1432 = vdwg.mxu0
    %v1433 = vpack.c.bf16 %v1427, %v1427
    %v1434 = vpack.c.bf16 %v1430, %v1430
    %1436 = vrot.lane.b32.xlu0 %v1433, 96
    %v1437 = vpop.permute.xlu0 %1436
    %v1439 = vsel %vm118, %v1433, 0
    %v1442 = vsel %vm118, %v1437, 0
    %1444 = vmatprep.subr.bf16.mxu0 0
    %1445 = vmatpush1.bf16.xpose.msra.mxu0 %v1442
    %1446 = vmatprep.subr.bf16.mxu0 0
    %1447 = vmatpush1.bf16.xpose.msra.mxu0 0
    %1448 = vmatprep.subr.bf16.mxu0 0
    %1449 = vmatpush1.bf16.xpose.msra.mxu0 0
    %1450 = vmatprep.subr.bf16.mxu0 0
    %1451 = vmatpush1.bf16.xpose.msra.mxu0 0
    %1452 = vmatprep.subr.bf16.mxu0 0
    %1453 = vmatpush1.bf16.xpose.msra.mxu0 0
    %1454 = vmatprep.subr.bf16.mxu0 0
    %1455 = vmatpush1.bf16.xpose.msra.mxu0 0
    %1456 = vmatprep.subr.bf16.mxu0 0
    %1457 = vmatpush1.bf16.xpose.msra.mxu0 0
    %1458 = vmatprep.subr.bf16.mxu0 0
    %1459 = vmatpush1.bf16.xpose.msra.mxu0 0
    %1460 = vmatprep.subr.bf16.mxu0 0
    %1461 = vmatpush1.bf16.xpose.msra.mxu0 0
    %1462 = vmatprep.subr.bf16.mxu0 0
    %1463 = vmatpush1.bf16.xpose.msra.mxu0 0
    %1464 = vmatprep.subr.bf16.mxu0 0
    %1465 = vmatpush1.bf16.xpose.msra.mxu0 0
    %1466 = vmatprep.subr.bf16.mxu0 0
    %1467 = vmatpush1.bf16.xpose.msra.mxu0 0
    %1468 = vmatprep.subr.bf16.mxu0 0
    %1469 = vmatpush1.bf16.xpose.msra.mxu0 0
    %1470 = vmatprep.subr.bf16.mxu0 0
    %1471 = vmatpush1.bf16.xpose.msra.mxu0 0
    %1472 = vmatprep.subr.bf16.mxu0 0
    %1473 = vmatpush1.bf16.xpose.msra.mxu0 0
    %1474 = vmatprep.subr.bf16.mxu0 0
    %1475 = vmatpush1.bf16.xpose.msra.mxu0 0
    %1476 = vmatprep.mubr.bf16.mxu0 0
    %1477 = vmatmul.mubr.bf16.gmra.mrb[0].mxu0 %v1439
    %v1478 = vpop.f32.mrb[0].mxu0
    %v1479 = vadd.f32 0.0, %v1478
    %v1480 = vpop.f32.mrb[0].mxu0
    %v1481 = vpop.f32.mrb[0].mxu0
    %v1482 = vpop.f32.mrb[0].mxu0
    %1483 = vdwg.mxu0
    %1485 = vrot.lane.b32.xlu0 %v1434, 96
    %v1486 = vpop.permute.xlu0 %1485
    %v1488 = vsel %vm118, %v1434, 0
    %v1491 = vsel %vm118, %v1486, 0
    %1493 = vmatprep.subr.bf16.mxu0 0
    %1494 = vmatpush1.bf16.xpose.msra.mxu0 %v1491
    %1495 = vmatprep.subr.bf16.mxu0 0
    %1496 = vmatpush1.bf16.xpose.msra.mxu0 0
    %1497 = vmatprep.subr.bf16.mxu0 0
    %1498 = vmatpush1.bf16.xpose.msra.mxu0 0
    %1499 = vmatprep.subr.bf16.mxu0 0
    %1500 = vmatpush1.bf16.xpose.msra.mxu0 0
    %1501 = vmatprep.subr.bf16.mxu0 0
    %1502 = vmatpush1.bf16.xpose.msra.mxu0 0
    %1503 = vmatprep.subr.bf16.mxu0 0
    %1504 = vmatpush1.bf16.xpose.msra.mxu0 0
    %1505 = vmatprep.subr.bf16.mxu0 0
    %1506 = vmatpush1.bf16.xpose.msra.mxu0 0
    %1507 = vmatprep.subr.bf16.mxu0 0
    %1508 = vmatpush1.bf16.xpose.msra.mxu0 0
    %1509 = vmatprep.subr.bf16.mxu0 0
    %1510 = vmatpush1.bf16.xpose.msra.mxu0 0
    %1511 = vmatprep.subr.bf16.mxu0 0
    %1512 = vmatpush1.bf16.xpose.msra.mxu0 0
    %1513 = vmatprep.subr.bf16.mxu0 0
    %1514 = vmatpush1.bf16.xpose.msra.mxu0 0
    %1515 = vmatprep.subr.bf16.mxu0 0
    %1516 = vmatpush1.bf16.xpose.msra.mxu0 0
    %1517 = vmatprep.subr.bf16.mxu0 0
    %1518 = vmatpush1.bf16.xpose.msra.mxu0 0
    %1519 = vmatprep.subr.bf16.mxu0 0
    %1520 = vmatpush1.bf16.xpose.msra.mxu0 0
    %1521 = vmatprep.subr.bf16.mxu0 0
    %1522 = vmatpush1.bf16.xpose.msra.mxu0 0
    %1523 = vmatprep.subr.bf16.mxu0 0
    %1524 = vmatpush1.bf16.xpose.msra.mxu0 0
    %1525 = vmatprep.mubr.bf16.mxu0 0
    %1526 = vmatmul.mubr.bf16.gmra.mrb[0].mxu0 %v1488
    %v1527 = vpop.f32.mrb[0].mxu0
    %v1528 = vadd.f32 0.0, %v1527
    %v1529 = vpop.f32.mrb[0].mxu0
    %v1530 = vpop.f32.mrb[0].mxu0
    %v1531 = vpop.f32.mrb[0].mxu0
    %1532 = vdwg.mxu0
    %v1533 = vsel %vm118, %v1479, -inf
    %1534 = vmax.xlane.f32.xlu0 %v1533
    %v1535 = vpop.xlane.xlu0 %1534
    %v1536 = vsel %vm118, %v1528, -inf
    %1537 = vmax.xlane.f32.xlu0 %v1536
    %v1538 = vpop.xlane.xlu0 %1537
    %v1539 = vsub.f32 %v1479, %v1535
    %v1540 = vsub.f32 %v1528, %v1538
    %v1541 = vmul.f32 %v1539, 1.442695
    %v1542 = vpow.pop %v1541
    %v1543 = vmul.f32 %v1540, 1.442695
    %v1544 = vpow.pop %v1543
    %v1545 = vsel %vm118, %v1542, 0.0
    %1546 = vadd.xlane.f32.xlu0 %v1545
    %v1547 = vpop.xlane.xlu0 %1546
    %v1548 = vsel %vm118, %v1544, 0.0
    %1549 = vadd.xlane.f32.xlu0 %v1548
    %v1550 = vpop.xlane.xlu0 %1549
    %v1551 = vrcp.pop %v1547
    %v1552 = vrcp.pop %v1550
    %v1553 = vmul.f32 %v1542, %v1551
    %v1554 = vmul.f32 %v1544, %v1552
    %v1555 = vpack.c.bf16 %v1553, %v1553
    %v1556 = vpack.c.bf16 %v1554, %v1554
    %1557 = vrot.lane.b32.xlu0 %v1433, 64
    %v1558 = vpop.permute.xlu0 %1557
    %v1560 = vsel %vm118, %v1555, 0
    %v1563 = vsel %vm243, %v1558, 0
    %1565 = vmatprep.subr.bf16.mxu0 0
    %1566 = vmatpush1.bf16.msra.mxu0 %v1563
    %1567 = vmatprep.subr.bf16.mxu0 0
    %1568 = vmatpush1.bf16.msra.mxu0 0
    %1569 = vmatprep.subr.bf16.mxu0 0
    %1570 = vmatpush1.bf16.msra.mxu0 0
    %1571 = vmatprep.subr.bf16.mxu0 0
    %1572 = vmatpush1.bf16.msra.mxu0 0
    %1573 = vmatprep.subr.bf16.mxu0 0
    %1574 = vmatpush1.bf16.msra.mxu0 0
    %1575 = vmatprep.subr.bf16.mxu0 0
    %1576 = vmatpush1.bf16.msra.mxu0 0
    %1577 = vmatprep.subr.bf16.mxu0 0
    %1578 = vmatpush1.bf16.msra.mxu0 0
    %1579 = vmatprep.subr.bf16.mxu0 0
    %1580 = vmatpush1.bf16.msra.mxu0 0
    %1581 = vmatprep.subr.bf16.mxu0 0
    %1582 = vmatpush1.bf16.msra.mxu0 0
    %1583 = vmatprep.subr.bf16.mxu0 0
    %1584 = vmatpush1.bf16.msra.mxu0 0
    %1585 = vmatprep.subr.bf16.mxu0 0
    %1586 = vmatpush1.bf16.msra.mxu0 0
    %1587 = vmatprep.subr.bf16.mxu0 0
    %1588 = vmatpush1.bf16.msra.mxu0 0
    %1589 = vmatprep.subr.bf16.mxu0 0
    %1590 = vmatpush1.bf16.msra.mxu0 0
    %1591 = vmatprep.subr.bf16.mxu0 0
    %1592 = vmatpush1.bf16.msra.mxu0 0
    %1593 = vmatprep.subr.bf16.mxu0 0
    %1594 = vmatpush1.bf16.msra.mxu0 0
    %1595 = vmatprep.subr.bf16.mxu0 0
    %1596 = vmatpush1.bf16.msra.mxu0 0
    %1597 = vmatprep.mubr.bf16.mxu0 0
    %1598 = vmatmul.mubr.bf16.gmra.mrb[0].mxu0 %v1560
    %v1599 = vpop.f32.mrb[0].mxu0
    %v1600 = vadd.f32 0.0, %v1599
    %v1601 = vpop.f32.mrb[0].mxu0
    %v1602 = vpop.f32.mrb[0].mxu0
    %v1603 = vpop.f32.mrb[0].mxu0
    %1604 = vdwg.mxu0
    %1605 = vrot.lane.b32.xlu0 %v1434, 64
    %v1606 = vpop.permute.xlu0 %1605
    %v1608 = vsel %vm118, %v1556, 0
    %v1611 = vsel %vm243, %v1606, 0
    %1613 = vmatprep.subr.bf16.mxu0 0
    %1614 = vmatpush1.bf16.msra.mxu0 %v1611
    %1615 = vmatprep.subr.bf16.mxu0 0
    %1616 = vmatpush1.bf16.msra.mxu0 0
    %1617 = vmatprep.subr.bf16.mxu0 0
    %1618 = vmatpush1.bf16.msra.mxu0 0
    %1619 = vmatprep.subr.bf16.mxu0 0
    %1620 = vmatpush1.bf16.msra.mxu0 0
    %1621 = vmatprep.subr.bf16.mxu0 0
    %1622 = vmatpush1.bf16.msra.mxu0 0
    %1623 = vmatprep.subr.bf16.mxu0 0
    %1624 = vmatpush1.bf16.msra.mxu0 0
    %1625 = vmatprep.subr.bf16.mxu0 0
    %1626 = vmatpush1.bf16.msra.mxu0 0
    %1627 = vmatprep.subr.bf16.mxu0 0
    %1628 = vmatpush1.bf16.msra.mxu0 0
    %1629 = vmatprep.subr.bf16.mxu0 0
    %1630 = vmatpush1.bf16.msra.mxu0 0
    %1631 = vmatprep.subr.bf16.mxu0 0
    %1632 = vmatpush1.bf16.msra.mxu0 0
    %1633 = vmatprep.subr.bf16.mxu0 0
    %1634 = vmatpush1.bf16.msra.mxu0 0
    %1635 = vmatprep.subr.bf16.mxu0 0
    %1636 = vmatpush1.bf16.msra.mxu0 0
    %1637 = vmatprep.subr.bf16.mxu0 0
    %1638 = vmatpush1.bf16.msra.mxu0 0
    %1639 = vmatprep.subr.bf16.mxu0 0
    %1640 = vmatpush1.bf16.msra.mxu0 0
    %1641 = vmatprep.subr.bf16.mxu0 0
    %1642 = vmatpush1.bf16.msra.mxu0 0
    %1643 = vmatprep.subr.bf16.mxu0 0
    %1644 = vmatpush1.bf16.msra.mxu0 0
    %1645 = vmatprep.mubr.bf16.mxu0 0
    %1646 = vmatmul.mubr.bf16.gmra.mrb[0].mxu0 %v1608
    %v1647 = vpop.f32.mrb[0].mxu0
    %v1648 = vadd.f32 0.0, %v1647
    %v1649 = vpop.f32.mrb[0].mxu0
    %v1650 = vpop.f32.mrb[0].mxu0
    %v1651 = vpop.f32.mrb[0].mxu0
    %1652 = vdwg.mxu0
    %1653 = vrot.lane.b32.xlu0 %v1433, 120
    %v1654 = vpop.permute.xlu0 %1653
    %1655 = vrot.lane.b32.xlu0 %v1433, 88
    %v1656 = vpop.permute.xlu0 %1655
    %v1658 = vsel %vm118, %v1654, 0
    %v1661 = vsel %vm118, %v1656, 0
    %1663 = vmatprep.subr.bf16.mxu0 0
    %1664 = vmatpush1.bf16.xpose.msra.mxu0 %v1661
    %1665 = vmatprep.subr.bf16.mxu0 0
    %1666 = vmatpush1.bf16.xpose.msra.mxu0 0
    %1667 = vmatprep.subr.bf16.mxu0 0
    %1668 = vmatpush1.bf16.xpose.msra.mxu0 0
    %1669 = vmatprep.subr.bf16.mxu0 0
    %1670 = vmatpush1.bf16.xpose.msra.mxu0 0
    %1671 = vmatprep.subr.bf16.mxu0 0
    %1672 = vmatpush1.bf16.xpose.msra.mxu0 0
    %1673 = vmatprep.subr.bf16.mxu0 0
    %1674 = vmatpush1.bf16.xpose.msra.mxu0 0
    %1675 = vmatprep.subr.bf16.mxu0 0
    %1676 = vmatpush1.bf16.xpose.msra.mxu0 0
    %1677 = vmatprep.subr.bf16.mxu0 0
    %1678 = vmatpush1.bf16.xpose.msra.mxu0 0
    %1679 = vmatprep.subr.bf16.mxu0 0
    %1680 = vmatpush1.bf16.xpose.msra.mxu0 0
    %1681 = vmatprep.subr.bf16.mxu0 0
    %1682 = vmatpush1.bf16.xpose.msra.mxu0 0
    %1683 = vmatprep.subr.bf16.mxu0 0
    %1684 = vmatpush1.bf16.xpose.msra.mxu0 0
    %1685 = vmatprep.subr.bf16.mxu0 0
    %1686 = vmatpush1.bf16.xpose.msra.mxu0 0
    %1687 = vmatprep.subr.bf16.mxu0 0
    %1688 = vmatpush1.bf16.xpose.msra.mxu0 0
    %1689 = vmatprep.subr.bf16.mxu0 0
    %1690 = vmatpush1.bf16.xpose.msra.mxu0 0
    %1691 = vmatprep.subr.bf16.mxu0 0
    %1692 = vmatpush1.bf16.xpose.msra.mxu0 0
    %1693 = vmatprep.subr.bf16.mxu0 0
    %1694 = vmatpush1.bf16.xpose.msra.mxu0 0
    %1695 = vmatprep.mubr.bf16.mxu0 0
    %1696 = vmatmul.mubr.bf16.gmra.mrb[0].mxu0 %v1658
    %v1697 = vpop.f32.mrb[0].mxu0
    %v1698 = vadd.f32 0.0, %v1697
    %v1699 = vpop.f32.mrb[0].mxu0
    %v1700 = vpop.f32.mrb[0].mxu0
    %v1701 = vpop.f32.mrb[0].mxu0
    %1702 = vdwg.mxu0
    %1703 = vrot.lane.b32.xlu0 %v1434, 120
    %v1704 = vpop.permute.xlu0 %1703
    %1705 = vrot.lane.b32.xlu0 %v1434, 88
    %v1706 = vpop.permute.xlu0 %1705
    %v1708 = vsel %vm118, %v1704, 0
    %v1711 = vsel %vm118, %v1706, 0
    %1713 = vmatprep.subr.bf16.mxu0 0
    %1714 = vmatpush1.bf16.xpose.msra.mxu0 %v1711
    %1715 = vmatprep.subr.bf16.mxu0 0
    %1716 = vmatpush1.bf16.xpose.msra.mxu0 0
    %1717 = vmatprep.subr.bf16.mxu0 0
    %1718 = vmatpush1.bf16.xpose.msra.mxu0 0
    %1719 = vmatprep.subr.bf16.mxu0 0
    %1720 = vmatpush1.bf16.xpose.msra.mxu0 0
    %1721 = vmatprep.subr.bf16.mxu0 0
    %1722 = vmatpush1.bf16.xpose.msra.mxu0 0
    %1723 = vmatprep.subr.bf16.mxu0 0
    %1724 = vmatpush1.bf16.xpose.msra.mxu0 0
    %1725 = vmatprep.subr.bf16.mxu0 0
    %1726 = vmatpush1.bf16.xpose.msra.mxu0 0
    %1727 = vmatprep.subr.bf16.mxu0 0
    %1728 = vmatpush1.bf16.xpose.msra.mxu0 0
    %1729 = vmatprep.subr.bf16.mxu0 0
    %1730 = vmatpush1.bf16.xpose.msra.mxu0 0
    %1731 = vmatprep.subr.bf16.mxu0 0
    %1732 = vmatpush1.bf16.xpose.msra.mxu0 0
    %1733 = vmatprep.subr.bf16.mxu0 0
    %1734 = vmatpush1.bf16.xpose.msra.mxu0 0
    %1735 = vmatprep.subr.bf16.mxu0 0
    %1736 = vmatpush1.bf16.xpose.msra.mxu0 0
    %1737 = vmatprep.subr.bf16.mxu0 0
    %1738 = vmatpush1.bf16.xpose.msra.mxu0 0
    %1739 = vmatprep.subr.bf16.mxu0 0
    %1740 = vmatpush1.bf16.xpose.msra.mxu0 0
    %1741 = vmatprep.subr.bf16.mxu0 0
    %1742 = vmatpush1.bf16.xpose.msra.mxu0 0
    %1743 = vmatprep.subr.bf16.mxu0 0
    %1744 = vmatpush1.bf16.xpose.msra.mxu0 0
    %1745 = vmatprep.mubr.bf16.mxu0 0
    %1746 = vmatmul.mubr.bf16.gmra.mrb[0].mxu0 %v1708
    %v1747 = vpop.f32.mrb[0].mxu0
    %v1748 = vadd.f32 0.0, %v1747
    %v1749 = vpop.f32.mrb[0].mxu0
    %v1750 = vpop.f32.mrb[0].mxu0
    %v1751 = vpop.f32.mrb[0].mxu0
    %1752 = vdwg.mxu0
    %v1753 = vsel %vm118, %v1698, -inf
    %1754 = vmax.xlane.f32.xlu0 %v1753
    %v1755 = vpop.xlane.xlu0 %1754
    %v1756 = vsel %vm118, %v1748, -inf
    %1757 = vmax.xlane.f32.xlu0 %v1756
    %v1758 = vpop.xlane.xlu0 %1757
    %v1759 = vsub.f32 %v1698, %v1755
    %v1760 = vsub.f32 %v1748, %v1758
    %v1761 = vmul.f32 %v1759, 1.442695
    %v1762 = vpow.pop %v1761
    %v1763 = vmul.f32 %v1760, 1.442695
    %v1764 = vpow.pop %v1763
    %v1765 = vsel %vm118, %v1762, 0.0
    %1766 = vadd.xlane.f32.xlu0 %v1765
    %v1767 = vpop.xlane.xlu0 %1766
    %v1768 = vsel %vm118, %v1764, 0.0
    %1769 = vadd.xlane.f32.xlu0 %v1768
    %v1770 = vpop.xlane.xlu0 %1769
    %v1771 = vrcp.pop %v1767
    %v1772 = vrcp.pop %v1770
    %v1773 = vmul.f32 %v1762, %v1771
    %v1774 = vmul.f32 %v1764, %v1772
    %v1775 = vpack.c.bf16 %v1773, %v1773
    %v1776 = vpack.c.bf16 %v1774, %v1774
    %1777 = vrot.lane.b32.xlu0 %v1433, 56
    %v1778 = vpop.permute.xlu0 %1777
    %v1780 = vsel %vm118, %v1775, 0
    %v1783 = vsel %vm243, %v1778, 0
    %1785 = vmatprep.subr.bf16.mxu0 0
    %1786 = vmatpush1.bf16.msra.mxu0 %v1783
    %1787 = vmatprep.subr.bf16.mxu0 0
    %1788 = vmatpush1.bf16.msra.mxu0 0
    %1789 = vmatprep.subr.bf16.mxu0 0
    %1790 = vmatpush1.bf16.msra.mxu0 0
    %1791 = vmatprep.subr.bf16.mxu0 0
    %1792 = vmatpush1.bf16.msra.mxu0 0
    %1793 = vmatprep.subr.bf16.mxu0 0
    %1794 = vmatpush1.bf16.msra.mxu0 0
    %1795 = vmatprep.subr.bf16.mxu0 0
    %1796 = vmatpush1.bf16.msra.mxu0 0
    %1797 = vmatprep.subr.bf16.mxu0 0
    %1798 = vmatpush1.bf16.msra.mxu0 0
    %1799 = vmatprep.subr.bf16.mxu0 0
    %1800 = vmatpush1.bf16.msra.mxu0 0
    %1801 = vmatprep.subr.bf16.mxu0 0
    %1802 = vmatpush1.bf16.msra.mxu0 0
    %1803 = vmatprep.subr.bf16.mxu0 0
    %1804 = vmatpush1.bf16.msra.mxu0 0
    %1805 = vmatprep.subr.bf16.mxu0 0
    %1806 = vmatpush1.bf16.msra.mxu0 0
    %1807 = vmatprep.subr.bf16.mxu0 0
    %1808 = vmatpush1.bf16.msra.mxu0 0
    %1809 = vmatprep.subr.bf16.mxu0 0
    %1810 = vmatpush1.bf16.msra.mxu0 0
    %1811 = vmatprep.subr.bf16.mxu0 0
    %1812 = vmatpush1.bf16.msra.mxu0 0
    %1813 = vmatprep.subr.bf16.mxu0 0
    %1814 = vmatpush1.bf16.msra.mxu0 0
    %1815 = vmatprep.subr.bf16.mxu0 0
    %1816 = vmatpush1.bf16.msra.mxu0 0
    %1817 = vmatprep.mubr.bf16.mxu0 0
    %1818 = vmatmul.mubr.bf16.gmra.mrb[0].mxu0 %v1780
    %v1819 = vpop.f32.mrb[0].mxu0
    %v1820 = vadd.f32 0.0, %v1819
    %v1821 = vpop.f32.mrb[0].mxu0
    %v1822 = vpop.f32.mrb[0].mxu0
    %v1823 = vpop.f32.mrb[0].mxu0
    %1824 = vdwg.mxu0
    %1825 = vrot.lane.b32.xlu0 %v1434, 56
    %v1826 = vpop.permute.xlu0 %1825
    %v1828 = vsel %vm118, %v1776, 0
    %v1831 = vsel %vm243, %v1826, 0
    %1833 = vmatprep.subr.bf16.mxu0 0
    %1834 = vmatpush1.bf16.msra.mxu0 %v1831
    %1835 = vmatprep.subr.bf16.mxu0 0
    %1836 = vmatpush1.bf16.msra.mxu0 0
    %1837 = vmatprep.subr.bf16.mxu0 0
    %1838 = vmatpush1.bf16.msra.mxu0 0
    %1839 = vmatprep.subr.bf16.mxu0 0
    %1840 = vmatpush1.bf16.msra.mxu0 0
    %1841 = vmatprep.subr.bf16.mxu0 0
    %1842 = vmatpush1.bf16.msra.mxu0 0
    %1843 = vmatprep.subr.bf16.mxu0 0
    %1844 = vmatpush1.bf16.msra.mxu0 0
    %1845 = vmatprep.subr.bf16.mxu0 0
    %1846 = vmatpush1.bf16.msra.mxu0 0
    %1847 = vmatprep.subr.bf16.mxu0 0
    %1848 = vmatpush1.bf16.msra.mxu0 0
    %1849 = vmatprep.subr.bf16.mxu0 0
    %1850 = vmatpush1.bf16.msra.mxu0 0
    %1851 = vmatprep.subr.bf16.mxu0 0
    %1852 = vmatpush1.bf16.msra.mxu0 0
    %1853 = vmatprep.subr.bf16.mxu0 0
    %1854 = vmatpush1.bf16.msra.mxu0 0
    %1855 = vmatprep.subr.bf16.mxu0 0
    %1856 = vmatpush1.bf16.msra.mxu0 0
    %1857 = vmatprep.subr.bf16.mxu0 0
    %1858 = vmatpush1.bf16.msra.mxu0 0
    %1859 = vmatprep.subr.bf16.mxu0 0
    %1860 = vmatpush1.bf16.msra.mxu0 0
    %1861 = vmatprep.subr.bf16.mxu0 0
    %1862 = vmatpush1.bf16.msra.mxu0 0
    %1863 = vmatprep.subr.bf16.mxu0 0
    %1864 = vmatpush1.bf16.msra.mxu0 0
    %1865 = vmatprep.mubr.bf16.mxu0 0
    %1866 = vmatmul.mubr.bf16.gmra.mrb[0].mxu0 %v1828
    %v1867 = vpop.f32.mrb[0].mxu0
    %v1868 = vadd.f32 0.0, %v1867
    %v1869 = vpop.f32.mrb[0].mxu0
    %v1870 = vpop.f32.mrb[0].mxu0
    %v1871 = vpop.f32.mrb[0].mxu0
    %1872 = vdwg.mxu0
    %1873 = vrot.lane.b32.xlu0 %v1433, 112
    %v1874 = vpop.permute.xlu0 %1873
    %1875 = vrot.lane.b32.xlu0 %v1433, 80
    %v1876 = vpop.permute.xlu0 %1875
    %v1878 = vsel %vm118, %v1874, 0
    %v1881 = vsel %vm118, %v1876, 0
    %1883 = vmatprep.subr.bf16.mxu0 0
    %1884 = vmatpush1.bf16.xpose.msra.mxu0 %v1881
    %1885 = vmatprep.subr.bf16.mxu0 0
    %1886 = vmatpush1.bf16.xpose.msra.mxu0 0
    %1887 = vmatprep.subr.bf16.mxu0 0
    %1888 = vmatpush1.bf16.xpose.msra.mxu0 0
    %1889 = vmatprep.subr.bf16.mxu0 0
    %1890 = vmatpush1.bf16.xpose.msra.mxu0 0
    %1891 = vmatprep.subr.bf16.mxu0 0
    %1892 = vmatpush1.bf16.xpose.msra.mxu0 0
    %1893 = vmatprep.subr.bf16.mxu0 0
    %1894 = vmatpush1.bf16.xpose.msra.mxu0 0
    %1895 = vmatprep.subr.bf16.mxu0 0
    %1896 = vmatpush1.bf16.xpose.msra.mxu0 0
    %1897 = vmatprep.subr.bf16.mxu0 0
    %1898 = vmatpush1.bf16.xpose.msra.mxu0 0
    %1899 = vmatprep.subr.bf16.mxu0 0
    %1900 = vmatpush1.bf16.xpose.msra.mxu0 0
    %1901 = vmatprep.subr.bf16.mxu0 0
    %1902 = vmatpush1.bf16.xpose.msra.mxu0 0
    %1903 = vmatprep.subr.bf16.mxu0 0
    %1904 = vmatpush1.bf16.xpose.msra.mxu0 0
    %1905 = vmatprep.subr.bf16.mxu0 0
    %1906 = vmatpush1.bf16.xpose.msra.mxu0 0
    %1907 = vmatprep.subr.bf16.mxu0 0
    %1908 = vmatpush1.bf16.xpose.msra.mxu0 0
    %1909 = vmatprep.subr.bf16.mxu0 0
    %1910 = vmatpush1.bf16.xpose.msra.mxu0 0
    %1911 = vmatprep.subr.bf16.mxu0 0
    %1912 = vmatpush1.bf16.xpose.msra.mxu0 0
    %1913 = vmatprep.subr.bf16.mxu0 0
    %1914 = vmatpush1.bf16.xpose.msra.mxu0 0
    %1915 = vmatprep.mubr.bf16.mxu0 0
    %1916 = vmatmul.mubr.bf16.gmra.mrb[0].mxu0 %v1878
    %v1917 = vpop.f32.mrb[0].mxu0
    %v1918 = vadd.f32 0.0, %v1917
    %v1919 = vpop.f32.mrb[0].mxu0
    %v1920 = vpop.f32.mrb[0].mxu0
    %v1921 = vpop.f32.mrb[0].mxu0
    %1922 = vdwg.mxu0
    %1923 = vrot.lane.b32.xlu0 %v1434, 112
    %v1924 = vpop.permute.xlu0 %1923
    %1925 = vrot.lane.b32.xlu0 %v1434, 80
    %v1926 = vpop.permute.xlu0 %1925
    %v1928 = vsel %vm118, %v1924, 0
    %v1931 = vsel %vm118, %v1926, 0
    %1933 = vmatprep.subr.bf16.mxu0 0
    %1934 = vmatpush1.bf16.xpose.msra.mxu0 %v1931
    %1935 = vmatprep.subr.bf16.mxu0 0
    %1936 = vmatpush1.bf16.xpose.msra.mxu0 0
    %1937 = vmatprep.subr.bf16.mxu0 0
    %1938 = vmatpush1.bf16.xpose.msra.mxu0 0
    %1939 = vmatprep.subr.bf16.mxu0 0
    %1940 = vmatpush1.bf16.xpose.msra.mxu0 0
    %1941 = vmatprep.subr.bf16.mxu0 0
    %1942 = vmatpush1.bf16.xpose.msra.mxu0 0
    %1943 = vmatprep.subr.bf16.mxu0 0
    %1944 = vmatpush1.bf16.xpose.msra.mxu0 0
    %1945 = vmatprep.subr.bf16.mxu0 0
    %1946 = vmatpush1.bf16.xpose.msra.mxu0 0
    %1947 = vmatprep.subr.bf16.mxu0 0
    %1948 = vmatpush1.bf16.xpose.msra.mxu0 0
    %1949 = vmatprep.subr.bf16.mxu0 0
    %1950 = vmatpush1.bf16.xpose.msra.mxu0 0
    %1951 = vmatprep.subr.bf16.mxu0 0
    %1952 = vmatpush1.bf16.xpose.msra.mxu0 0
    %1953 = vmatprep.subr.bf16.mxu0 0
    %1954 = vmatpush1.bf16.xpose.msra.mxu0 0
    %1955 = vmatprep.subr.bf16.mxu0 0
    %1956 = vmatpush1.bf16.xpose.msra.mxu0 0
    %1957 = vmatprep.subr.bf16.mxu0 0
    %1958 = vmatpush1.bf16.xpose.msra.mxu0 0
    %1959 = vmatprep.subr.bf16.mxu0 0
    %1960 = vmatpush1.bf16.xpose.msra.mxu0 0
    %1961 = vmatprep.subr.bf16.mxu0 0
    %1962 = vmatpush1.bf16.xpose.msra.mxu0 0
    %1963 = vmatprep.subr.bf16.mxu0 0
    %1964 = vmatpush1.bf16.xpose.msra.mxu0 0
    %1965 = vmatprep.mubr.bf16.mxu0 0
    %1966 = vmatmul.mubr.bf16.gmra.mrb[0].mxu0 %v1928
    %v1967 = vpop.f32.mrb[0].mxu0
    %v1968 = vadd.f32 0.0, %v1967
    %v1969 = vpop.f32.mrb[0].mxu0
    %v1970 = vpop.f32.mrb[0].mxu0
    %v1971 = vpop.f32.mrb[0].mxu0
    %1972 = vdwg.mxu0
    %v1973 = vsel %vm118, %v1918, -inf
    %1974 = vmax.xlane.f32.xlu0 %v1973
    %v1975 = vpop.xlane.xlu0 %1974
    %v1976 = vsel %vm118, %v1968, -inf
    %1977 = vmax.xlane.f32.xlu0 %v1976
    %v1978 = vpop.xlane.xlu0 %1977
    %v1979 = vsub.f32 %v1918, %v1975
    %v1980 = vsub.f32 %v1968, %v1978
    %v1981 = vmul.f32 %v1979, 1.442695
    %v1982 = vpow.pop %v1981
    %v1983 = vmul.f32 %v1980, 1.442695
    %v1984 = vpow.pop %v1983
    %v1985 = vsel %vm118, %v1982, 0.0
    %1986 = vadd.xlane.f32.xlu0 %v1985
    %v1987 = vpop.xlane.xlu0 %1986
    %v1988 = vsel %vm118, %v1984, 0.0
    %1989 = vadd.xlane.f32.xlu0 %v1988
    %v1990 = vpop.xlane.xlu0 %1989
    %v1991 = vrcp.pop %v1987
    %v1992 = vrcp.pop %v1990
    %v1993 = vmul.f32 %v1982, %v1991
    %v1994 = vmul.f32 %v1984, %v1992
    %v1995 = vpack.c.bf16 %v1993, %v1993
    %v1996 = vpack.c.bf16 %v1994, %v1994
    %1997 = vrot.lane.b32.xlu0 %v1433, 48
    %v1998 = vpop.permute.xlu0 %1997
    %v2000 = vsel %vm118, %v1995, 0
    %v2003 = vsel %vm243, %v1998, 0
    %2005 = vmatprep.subr.bf16.mxu0 0
    %2006 = vmatpush1.bf16.msra.mxu0 %v2003
    %2007 = vmatprep.subr.bf16.mxu0 0
    %2008 = vmatpush1.bf16.msra.mxu0 0
    %2009 = vmatprep.subr.bf16.mxu0 0
    %2010 = vmatpush1.bf16.msra.mxu0 0
    %2011 = vmatprep.subr.bf16.mxu0 0
    %2012 = vmatpush1.bf16.msra.mxu0 0
    %2013 = vmatprep.subr.bf16.mxu0 0
    %2014 = vmatpush1.bf16.msra.mxu0 0
    %2015 = vmatprep.subr.bf16.mxu0 0
    %2016 = vmatpush1.bf16.msra.mxu0 0
    %2017 = vmatprep.subr.bf16.mxu0 0
    %2018 = vmatpush1.bf16.msra.mxu0 0
    %2019 = vmatprep.subr.bf16.mxu0 0
    %2020 = vmatpush1.bf16.msra.mxu0 0
    %2021 = vmatprep.subr.bf16.mxu0 0
    %2022 = vmatpush1.bf16.msra.mxu0 0
    %2023 = vmatprep.subr.bf16.mxu0 0
    %2024 = vmatpush1.bf16.msra.mxu0 0
    %2025 = vmatprep.subr.bf16.mxu0 0
    %2026 = vmatpush1.bf16.msra.mxu0 0
    %2027 = vmatprep.subr.bf16.mxu0 0
    %2028 = vmatpush1.bf16.msra.mxu0 0
    %2029 = vmatprep.subr.bf16.mxu0 0
    %2030 = vmatpush1.bf16.msra.mxu0 0
    %2031 = vmatprep.subr.bf16.mxu0 0
    %2032 = vmatpush1.bf16.msra.mxu0 0
    %2033 = vmatprep.subr.bf16.mxu0 0
    %2034 = vmatpush1.bf16.msra.mxu0 0
    %2035 = vmatprep.subr.bf16.mxu0 0
    %2036 = vmatpush1.bf16.msra.mxu0 0
    %2037 = vmatprep.mubr.bf16.mxu0 0
    %2038 = vmatmul.mubr.bf16.gmra.mrb[0].mxu0 %v2000
    %v2039 = vpop.f32.mrb[0].mxu0
    %v2040 = vadd.f32 0.0, %v2039
    %v2041 = vpop.f32.mrb[0].mxu0
    %v2042 = vpop.f32.mrb[0].mxu0
    %v2043 = vpop.f32.mrb[0].mxu0
    %2044 = vdwg.mxu0
    %2045 = vrot.lane.b32.xlu0 %v1434, 48
    %v2046 = vpop.permute.xlu0 %2045
    %v2048 = vsel %vm118, %v1996, 0
    %v2051 = vsel %vm243, %v2046, 0
    %2053 = vmatprep.subr.bf16.mxu0 0
    %2054 = vmatpush1.bf16.msra.mxu0 %v2051
    %2055 = vmatprep.subr.bf16.mxu0 0
    %2056 = vmatpush1.bf16.msra.mxu0 0
    %2057 = vmatprep.subr.bf16.mxu0 0
    %2058 = vmatpush1.bf16.msra.mxu0 0
    %2059 = vmatprep.subr.bf16.mxu0 0
    %2060 = vmatpush1.bf16.msra.mxu0 0
    %2061 = vmatprep.subr.bf16.mxu0 0
    %2062 = vmatpush1.bf16.msra.mxu0 0
    %2063 = vmatprep.subr.bf16.mxu0 0
    %2064 = vmatpush1.bf16.msra.mxu0 0
    %2065 = vmatprep.subr.bf16.mxu0 0
    %2066 = vmatpush1.bf16.msra.mxu0 0
    %2067 = vmatprep.subr.bf16.mxu0 0
    %2068 = vmatpush1.bf16.msra.mxu0 0
    %2069 = vmatprep.subr.bf16.mxu0 0
    %2070 = vmatpush1.bf16.msra.mxu0 0
    %2071 = vmatprep.subr.bf16.mxu0 0
    %2072 = vmatpush1.bf16.msra.mxu0 0
    %2073 = vmatprep.subr.bf16.mxu0 0
    %2074 = vmatpush1.bf16.msra.mxu0 0
    %2075 = vmatprep.subr.bf16.mxu0 0
    %2076 = vmatpush1.bf16.msra.mxu0 0
    %2077 = vmatprep.subr.bf16.mxu0 0
    %2078 = vmatpush1.bf16.msra.mxu0 0
    %2079 = vmatprep.subr.bf16.mxu0 0
    %2080 = vmatpush1.bf16.msra.mxu0 0
    %2081 = vmatprep.subr.bf16.mxu0 0
    %2082 = vmatpush1.bf16.msra.mxu0 0
    %2083 = vmatprep.subr.bf16.mxu0 0
    %2084 = vmatpush1.bf16.msra.mxu0 0
    %2085 = vmatprep.mubr.bf16.mxu0 0
    %2086 = vmatmul.mubr.bf16.gmra.mrb[0].mxu0 %v2048
    %v2087 = vpop.f32.mrb[0].mxu0
    %v2088 = vadd.f32 0.0, %v2087
    %v2089 = vpop.f32.mrb[0].mxu0
    %v2090 = vpop.f32.mrb[0].mxu0
    %v2091 = vpop.f32.mrb[0].mxu0
    %2092 = vdwg.mxu0
    %2093 = vrot.lane.b32.xlu0 %v1433, 104
    %v2094 = vpop.permute.xlu0 %2093
    %2095 = vrot.lane.b32.xlu0 %v1433, 72
    %v2096 = vpop.permute.xlu0 %2095
    %v2098 = vsel %vm118, %v2094, 0
    %v2101 = vsel %vm118, %v2096, 0
    %2103 = vmatprep.subr.bf16.mxu0 0
    %2104 = vmatpush1.bf16.xpose.msra.mxu0 %v2101
    %2105 = vmatprep.subr.bf16.mxu0 0
    %2106 = vmatpush1.bf16.xpose.msra.mxu0 0
    %2107 = vmatprep.subr.bf16.mxu0 0
    %2108 = vmatpush1.bf16.xpose.msra.mxu0 0
    %2109 = vmatprep.subr.bf16.mxu0 0
    %2110 = vmatpush1.bf16.xpose.msra.mxu0 0
    %2111 = vmatprep.subr.bf16.mxu0 0
    %2112 = vmatpush1.bf16.xpose.msra.mxu0 0
    %2113 = vmatprep.subr.bf16.mxu0 0
    %2114 = vmatpush1.bf16.xpose.msra.mxu0 0
    %2115 = vmatprep.subr.bf16.mxu0 0
    %2116 = vmatpush1.bf16.xpose.msra.mxu0 0
    %2117 = vmatprep.subr.bf16.mxu0 0
    %2118 = vmatpush1.bf16.xpose.msra.mxu0 0
    %2119 = vmatprep.subr.bf16.mxu0 0
    %2120 = vmatpush1.bf16.xpose.msra.mxu0 0
    %2121 = vmatprep.subr.bf16.mxu0 0
    %2122 = vmatpush1.bf16.xpose.msra.mxu0 0
    %2123 = vmatprep.subr.bf16.mxu0 0
    %2124 = vmatpush1.bf16.xpose.msra.mxu0 0
    %2125 = vmatprep.subr.bf16.mxu0 0
    %2126 = vmatpush1.bf16.xpose.msra.mxu0 0
    %2127 = vmatprep.subr.bf16.mxu0 0
    %2128 = vmatpush1.bf16.xpose.msra.mxu0 0
    %2129 = vmatprep.subr.bf16.mxu0 0
    %2130 = vmatpush1.bf16.xpose.msra.mxu0 0
    %2131 = vmatprep.subr.bf16.mxu0 0
    %2132 = vmatpush1.bf16.xpose.msra.mxu0 0
    %2133 = vmatprep.subr.bf16.mxu0 0
    %2134 = vmatpush1.bf16.xpose.msra.mxu0 0
    %2135 = vmatprep.mubr.bf16.mxu0 0
    %2136 = vmatmul.mubr.bf16.gmra.mrb[0].mxu0 %v2098
    %v2137 = vpop.f32.mrb[0].mxu0
    %v2138 = vadd.f32 0.0, %v2137
    %v2139 = vpop.f32.mrb[0].mxu0
    %v2140 = vpop.f32.mrb[0].mxu0
    %v2141 = vpop.f32.mrb[0].mxu0
    %2142 = vdwg.mxu0
    %2143 = vrot.lane.b32.xlu0 %v1434, 104
    %v2144 = vpop.permute.xlu0 %2143
    %2145 = vrot.lane.b32.xlu0 %v1434, 72
    %v2146 = vpop.permute.xlu0 %2145
    %v2148 = vsel %vm118, %v2144, 0
    %v2151 = vsel %vm118, %v2146, 0
    %2153 = vmatprep.subr.bf16.mxu0 0
    %2154 = vmatpush1.bf16.xpose.msra.mxu0 %v2151
    %2155 = vmatprep.subr.bf16.mxu0 0
    %2156 = vmatpush1.bf16.xpose.msra.mxu0 0
    %2157 = vmatprep.subr.bf16.mxu0 0
    %2158 = vmatpush1.bf16.xpose.msra.mxu0 0
    %2159 = vmatprep.subr.bf16.mxu0 0
    %2160 = vmatpush1.bf16.xpose.msra.mxu0 0
    %2161 = vmatprep.subr.bf16.mxu0 0
    %2162 = vmatpush1.bf16.xpose.msra.mxu0 0
    %2163 = vmatprep.subr.bf16.mxu0 0
    %2164 = vmatpush1.bf16.xpose.msra.mxu0 0
    %2165 = vmatprep.subr.bf16.mxu0 0
    %2166 = vmatpush1.bf16.xpose.msra.mxu0 0
    %2167 = vmatprep.subr.bf16.mxu0 0
    %2168 = vmatpush1.bf16.xpose.msra.mxu0 0
    %2169 = vmatprep.subr.bf16.mxu0 0
    %2170 = vmatpush1.bf16.xpose.msra.mxu0 0
    %2171 = vmatprep.subr.bf16.mxu0 0
    %2172 = vmatpush1.bf16.xpose.msra.mxu0 0
    %2173 = vmatprep.subr.bf16.mxu0 0
    %2174 = vmatpush1.bf16.xpose.msra.mxu0 0
    %2175 = vmatprep.subr.bf16.mxu0 0
    %2176 = vmatpush1.bf16.xpose.msra.mxu0 0
    %2177 = vmatprep.subr.bf16.mxu0 0
    %2178 = vmatpush1.bf16.xpose.msra.mxu0 0
    %2179 = vmatprep.subr.bf16.mxu0 0
    %2180 = vmatpush1.bf16.xpose.msra.mxu0 0
    %2181 = vmatprep.subr.bf16.mxu0 0
    %2182 = vmatpush1.bf16.xpose.msra.mxu0 0
    %2183 = vmatprep.subr.bf16.mxu0 0
    %2184 = vmatpush1.bf16.xpose.msra.mxu0 0
    %2185 = vmatprep.mubr.bf16.mxu0 0
    %2186 = vmatmul.mubr.bf16.gmra.mrb[0].mxu0 %v2148
    %v2187 = vpop.f32.mrb[0].mxu0
    %v2188 = vadd.f32 0.0, %v2187
    %v2189 = vpop.f32.mrb[0].mxu0
    %v2190 = vpop.f32.mrb[0].mxu0
    %v2191 = vpop.f32.mrb[0].mxu0
    %2192 = vdwg.mxu0
    %v2193 = vsel %vm118, %v2138, -inf
    %2194 = vmax.xlane.f32.xlu0 %v2193
    %v2195 = vpop.xlane.xlu0 %2194
    %v2196 = vsel %vm118, %v2188, -inf
    %2197 = vmax.xlane.f32.xlu0 %v2196
    %v2198 = vpop.xlane.xlu0 %2197
    %v2199 = vsub.f32 %v2138, %v2195
    %v2200 = vsub.f32 %v2188, %v2198
    %v2201 = vmul.f32 %v2199, 1.442695
    %v2202 = vpow.pop %v2201
    %v2203 = vmul.f32 %v2200, 1.442695
    %v2204 = vpow.pop %v2203
    %v2205 = vsel %vm118, %v2202, 0.0
    %2206 = vadd.xlane.f32.xlu0 %v2205
    %v2207 = vpop.xlane.xlu0 %2206
    %v2208 = vsel %vm118, %v2204, 0.0
    %2209 = vadd.xlane.f32.xlu0 %v2208
    %v2210 = vpop.xlane.xlu0 %2209
    %v2211 = vrcp.pop %v2207
    %v2212 = vrcp.pop %v2210
    %v2213 = vmul.f32 %v2202, %v2211
    %v2214 = vmul.f32 %v2204, %v2212
    %v2215 = vpack.c.bf16 %v2213, %v2213
    %v2216 = vpack.c.bf16 %v2214, %v2214
    %2217 = vrot.lane.b32.xlu0 %v1433, 40
    %v2218 = vpop.permute.xlu0 %2217
    %v2220 = vsel %vm118, %v2215, 0
    %v2223 = vsel %vm243, %v2218, 0
    %2225 = vmatprep.subr.bf16.mxu0 0
    %2226 = vmatpush1.bf16.msra.mxu0 %v2223
    %2227 = vmatprep.subr.bf16.mxu0 0
    %2228 = vmatpush1.bf16.msra.mxu0 0
    %2229 = vmatprep.subr.bf16.mxu0 0
    %2230 = vmatpush1.bf16.msra.mxu0 0
    %2231 = vmatprep.subr.bf16.mxu0 0
    %2232 = vmatpush1.bf16.msra.mxu0 0
    %2233 = vmatprep.subr.bf16.mxu0 0
    %2234 = vmatpush1.bf16.msra.mxu0 0
    %2235 = vmatprep.subr.bf16.mxu0 0
    %2236 = vmatpush1.bf16.msra.mxu0 0
    %2237 = vmatprep.subr.bf16.mxu0 0
    %2238 = vmatpush1.bf16.msra.mxu0 0
    %2239 = vmatprep.subr.bf16.mxu0 0
    %2240 = vmatpush1.bf16.msra.mxu0 0
    %2241 = vmatprep.subr.bf16.mxu0 0
    %2242 = vmatpush1.bf16.msra.mxu0 0
    %2243 = vmatprep.subr.bf16.mxu0 0
    %2244 = vmatpush1.bf16.msra.mxu0 0
    %2245 = vmatprep.subr.bf16.mxu0 0
    %2246 = vmatpush1.bf16.msra.mxu0 0
    %2247 = vmatprep.subr.bf16.mxu0 0
    %2248 = vmatpush1.bf16.msra.mxu0 0
    %2249 = vmatprep.subr.bf16.mxu0 0
    %2250 = vmatpush1.bf16.msra.mxu0 0
    %2251 = vmatprep.subr.bf16.mxu0 0
    %2252 = vmatpush1.bf16.msra.mxu0 0
    %2253 = vmatprep.subr.bf16.mxu0 0
    %2254 = vmatpush1.bf16.msra.mxu0 0
    %2255 = vmatprep.subr.bf16.mxu0 0
    %2256 = vmatpush1.bf16.msra.mxu0 0
    %2257 = vmatprep.mubr.bf16.mxu0 0
    %2258 = vmatmul.mubr.bf16.gmra.mrb[0].mxu0 %v2220
    %v2259 = vpop.f32.mrb[0].mxu0
    %v2260 = vadd.f32 0.0, %v2259
    %v2261 = vpop.f32.mrb[0].mxu0
    %v2262 = vpop.f32.mrb[0].mxu0
    %v2263 = vpop.f32.mrb[0].mxu0
    %2264 = vdwg.mxu0
    %2265 = vrot.lane.b32.xlu0 %v1434, 40
    %v2266 = vpop.permute.xlu0 %2265
    %v2268 = vsel %vm118, %v2216, 0
    %v2271 = vsel %vm243, %v2266, 0
    %2273 = vmatprep.subr.bf16.mxu0 0
    %2274 = vmatpush1.bf16.msra.mxu0 %v2271
    %2275 = vmatprep.subr.bf16.mxu0 0
    %2276 = vmatpush1.bf16.msra.mxu0 0
    %2277 = vmatprep.subr.bf16.mxu0 0
    %2278 = vmatpush1.bf16.msra.mxu0 0
    %2279 = vmatprep.subr.bf16.mxu0 0
    %2280 = vmatpush1.bf16.msra.mxu0 0
    %2281 = vmatprep.subr.bf16.mxu0 0
    %2282 = vmatpush1.bf16.msra.mxu0 0
    %2283 = vmatprep.subr.bf16.mxu0 0
    %2284 = vmatpush1.bf16.msra.mxu0 0
    %2285 = vmatprep.subr.bf16.mxu0 0
    %2286 = vmatpush1.bf16.msra.mxu0 0
    %2287 = vmatprep.subr.bf16.mxu0 0
    %2288 = vmatpush1.bf16.msra.mxu0 0
    %2289 = vmatprep.subr.bf16.mxu0 0
    %2290 = vmatpush1.bf16.msra.mxu0 0
    %2291 = vmatprep.subr.bf16.mxu0 0
    %2292 = vmatpush1.bf16.msra.mxu0 0
    %2293 = vmatprep.subr.bf16.mxu0 0
    %2294 = vmatpush1.bf16.msra.mxu0 0
    %2295 = vmatprep.subr.bf16.mxu0 0
    %2296 = vmatpush1.bf16.msra.mxu0 0
    %2297 = vmatprep.subr.bf16.mxu0 0
    %2298 = vmatpush1.bf16.msra.mxu0 0
    %2299 = vmatprep.subr.bf16.mxu0 0
    %2300 = vmatpush1.bf16.msra.mxu0 0
    %2301 = vmatprep.subr.bf16.mxu0 0
    %2302 = vmatpush1.bf16.msra.mxu0 0
    %2303 = vmatprep.subr.bf16.mxu0 0
    %2304 = vmatpush1.bf16.msra.mxu0 0
    %2305 = vmatprep.mubr.bf16.mxu0 0
    %2306 = vmatmul.mubr.bf16.gmra.mrb[0].mxu0 %v2268
    %v2307 = vpop.f32.mrb[0].mxu0
    %v2308 = vadd.f32 0.0, %v2307
    %v2309 = vpop.f32.mrb[0].mxu0
    %v2310 = vpop.f32.mrb[0].mxu0
    %v2311 = vpop.f32.mrb[0].mxu0
    %2312 = vdwg.mxu0
    %2315 = vrot.lane.b32.xlu0 %v1820, 8
    %v2316 = vpop.permute.xlu0 %2315
    %2317 = vrot.lane.b32.xlu0 %v1868, 8
    %v2318 = vpop.permute.xlu0 %2317
    %2323 = vrot.lane.b32.xlu0 %v2040, 16
    %v2324 = vpop.permute.xlu0 %2323
    %2325 = vrot.lane.b32.xlu0 %v2088, 16
    %v2326 = vpop.permute.xlu0 %2325
    %2331 = vrot.lane.b32.xlu0 %v2260, 24
    %v2332 = vpop.permute.xlu0 %2331
    %2333 = vrot.lane.b32.xlu0 %v2308, 24
    %v2334 = vpop.permute.xlu0 %2333
    %v2337 = vsel %vm118, %v1600, %v2316
    %v2338 = vsel %vm118, %v1648, %v2318
    %v2339 = vsel %vm1021, %v2337, %v2324
    %v2340 = vsel %vm1021, %v2338, %v2326
    %v2341 = vsel %vm1024, %v2339, %v2332
    %v2342 = vsel %vm1024, %v2340, %v2334
    %v2343 = vpack.c.bf16 %v2342, %v2341
    %s2344 = scalar_lea.vmem %s2, 16
    %v2345 = vld [vmem:[%s2344] sm:$0xf]
    %v2346 = vld [vmem:[%s2344 + $0x4] sm:$0xf]
    %v2347 = vld [vmem:[%s2344 + $0x8] sm:$0xf]
    %v2348 = vld [vmem:[%s2344 + $0xc] sm:$0xf]
    %s2349 = scalar_lea.vmem %s3, 1
    %v2350 = vld [vmem:[%s2349] sm:$0x1]
    %v2352 = vlaneseq
    %v2353 = vshrl.u32 %v2352, 7
    %v2354 = vsub.s32 0, %v2353
    %v2355 = vrot.slane %v2350, %v2354
    %v2361 = vunpack.c.l.b16 %v2345
    %v2362 = vunpack.c.l.b16 %v2346
    %v2363 = vunpack.c.l.b16 %v2347
    %v2364 = vunpack.c.l.b16 %v2348
    %v2365 = vpack.c.b16 %v2362, %v2361
    %v2366 = vpack.c.b16 %v2364, %v2363
    %v2370 = vsel %vm68, %v2343, 0
    %2372 = vmatprep.subr.bf16.mxu0 0
    %2373 = vmatpush1.bf16.msra.mxu0 %v2365
    %2374 = vmatprep.subr.bf16.mxu0 0
    %2375 = vmatpush1.bf16.msra.mxu0 %v2366
    %2376 = vmatprep.subr.bf16.mxu0 0
    %2377 = vmatpush1.bf16.msra.mxu0 0
    %2378 = vmatprep.subr.bf16.mxu0 0
    %2379 = vmatpush1.bf16.msra.mxu0 0
    %2380 = vmatprep.subr.bf16.mxu0 0
    %2381 = vmatpush1.bf16.msra.mxu0 0
    %2382 = vmatprep.subr.bf16.mxu0 0
    %2383 = vmatpush1.bf16.msra.mxu0 0
    %2384 = vmatprep.subr.bf16.mxu0 0
    %2385 = vmatpush1.bf16.msra.mxu0 0
    %2386 = vmatprep.subr.bf16.mxu0 0
    %2387 = vmatpush1.bf16.msra.mxu0 0
    %2388 = vmatprep.subr.bf16.mxu0 0
    %2389 = vmatpush1.bf16.msra.mxu0 0
    %2390 = vmatprep.subr.bf16.mxu0 0
    %2391 = vmatpush1.bf16.msra.mxu0 0
    %2392 = vmatprep.subr.bf16.mxu0 0
    %2393 = vmatpush1.bf16.msra.mxu0 0
    %2394 = vmatprep.subr.bf16.mxu0 0
    %2395 = vmatpush1.bf16.msra.mxu0 0
    %2396 = vmatprep.subr.bf16.mxu0 0
    %2397 = vmatpush1.bf16.msra.mxu0 0
    %2398 = vmatprep.subr.bf16.mxu0 0
    %2399 = vmatpush1.bf16.msra.mxu0 0
    %2400 = vmatprep.subr.bf16.mxu0 0
    %2401 = vmatpush1.bf16.msra.mxu0 0
    %2402 = vmatprep.subr.bf16.mxu0 0
    %2403 = vmatpush1.bf16.msra.mxu0 0
    %2404 = vmatprep.mubr.bf16.mxu0 0
    %2405 = vmatmul.mubr.bf16.gmra.mrb[0].mxu0 %v2370
    %v2406 = vpop.f32.mrb[0].mxu0
    %v2407 = vadd.f32 %v2355, %v2406
    %v2408 = vpop.f32.mrb[0].mxu0
    %v2409 = vpop.f32.mrb[0].mxu0
    %v2410 = vadd.f32 %v2355, %v2409
    %v2411 = vpop.f32.mrb[0].mxu0
    %2412 = vdwg.mxu0
    %v2413 = vadd.f32 %v2407, %v1369
    %v2414 = vadd.f32 %v2410, %v1370
    %s2415 = scalar_lea.vmem %s4, 1
    %v2416 = vld [vmem:[%s2415] sm:$0x1]
    %s2417 = scalar_lea.vmem %s5, 1
    %v2418 = vld [vmem:[%s2417] sm:$0x1]
    %v2419 = vsel %vm68, %v2413, 0.0
    %2420 = vadd.xlane.f32.xlu0 %v2419
    %v2421 = vpop.xlane.xlu0 %2420
    %v2422 = vsel %vm68, %v2414, 0.0
    %2423 = vadd.xlane.f32.xlu0 %v2422
    %v2424 = vpop.xlane.xlu0 %2423
    %v2425 = vmul.f32 %v2421, %v1105
    %v2426 = vmul.f32 %v2424, %v1105
    %v2427 = vsub.f32 %v2413, %v2425
    %v2428 = vsub.f32 %v2414, %v2426
    %v2429 = vmul.f32 %v2427, %v2427
    %v2430 = vmul.f32 %v2428, %v2428
    %v2431 = vsel %vm68, %v2429, 0.0
    %2432 = vadd.xlane.f32.xlu0 %v2431
    %v2433 = vpop.xlane.xlu0 %2432
    %v2434 = vsel %vm68, %v2430, 0.0
    %2435 = vadd.xlane.f32.xlu0 %v2434
    %v2436 = vpop.xlane.xlu0 %2435
    %v2437 = vmul.f32 %v2433, %v1105
    %v2438 = vmul.f32 %v2436, %v1105
    %v2439 = vadd.f32 %v2437, 1e-05
    %v2440 = vadd.f32 %v2438, 1e-05
    %v2441 = vrsqrt.pop %v2439
    %v2442 = vrsqrt.pop %v2440
    %v2443 = vmul.f32 %v2427, %v2441
    %v2444 = vmul.f32 %v2428, %v2442
    %v2446 = vlaneseq
    %v2447 = vshrl.u32 %v2446, 7
    %v2448 = vsub.s32 0, %v2447
    %v2449 = vrot.slane %v2416, %v2448
    %v2451 = vmul.f32 %v2443, %v2449
    %v2452 = vmul.f32 %v2444, %v2449
    %v2454 = vlaneseq
    %v2455 = vshrl.u32 %v2454, 7
    %v2456 = vsub.s32 0, %v2455
    %v2457 = vrot.slane %v2418, %v2456
    %v2459 = vadd.f32 %v2451, %v2457
    %v2460 = vadd.f32 %v2452, %v2457
    %v2461 = vpack.c.bf16 %v2460, %v2459
    %s2462 = scalar_lea.vmem %s6, 16
    %v2463 = vld [vmem:[%s2462] sm:$0xf]
    %v2464 = vld [vmem:[%s2462 + $0x4] sm:$0xf]
    %v2465 = vld [vmem:[%s2462 + $0x8] sm:$0xf]
    %v2466 = vld [vmem:[%s2462 + $0xc] sm:$0xf]
    %s2467 = scalar_lea.vmem %s7, 1
    %v2468 = vld [vmem:[%s2467] sm:$0x1]
    %v2470 = vlaneseq
    %v2471 = vshrl.u32 %v2470, 7
    %v2472 = vsub.s32 0, %v2471
    %v2473 = vrot.slane %v2468, %v2472
    %v2479 = vunpack.c.l.b16 %v2463
    %v2480 = vunpack.c.l.b16 %v2464
    %v2481 = vunpack.c.l.b16 %v2465
    %v2482 = vunpack.c.l.b16 %v2466
    %v2483 = vpack.c.b16 %v2480, %v2479
    %v2484 = vpack.c.b16 %v2482, %v2481
    %v2488 = vsel %vm68, %v2461, 0
    %2490 = vmatprep.subr.bf16.mxu0 0
    %2491 = vmatpush1.bf16.msra.mxu0 %v2483
    %2492 = vmatprep.subr.bf16.mxu0 0
    %2493 = vmatpush1.bf16.msra.mxu0 %v2484
    %2494 = vmatprep.subr.bf16.mxu0 0
    %2495 = vmatpush1.bf16.msra.mxu0 0
    %2496 = vmatprep.subr.bf16.mxu0 0
    %2497 = vmatpush1.bf16.msra.mxu0 0
    %2498 = vmatprep.subr.bf16.mxu0 0
    %2499 = vmatpush1.bf16.msra.mxu0 0
    %2500 = vmatprep.subr.bf16.mxu0 0
    %2501 = vmatpush1.bf16.msra.mxu0 0
    %2502 = vmatprep.subr.bf16.mxu0 0
    %2503 = vmatpush1.bf16.msra.mxu0 0
    %2504 = vmatprep.subr.bf16.mxu0 0
    %2505 = vmatpush1.bf16.msra.mxu0 0
    %2506 = vmatprep.subr.bf16.mxu0 0
    %2507 = vmatpush1.bf16.msra.mxu0 0
    %2508 = vmatprep.subr.bf16.mxu0 0
    %2509 = vmatpush1.bf16.msra.mxu0 0
    %2510 = vmatprep.subr.bf16.mxu0 0
    %2511 = vmatpush1.bf16.msra.mxu0 0
    %2512 = vmatprep.subr.bf16.mxu0 0
    %2513 = vmatpush1.bf16.msra.mxu0 0
    %2514 = vmatprep.subr.bf16.mxu0 0
    %2515 = vmatpush1.bf16.msra.mxu0 0
    %2516 = vmatprep.subr.bf16.mxu0 0
    %2517 = vmatpush1.bf16.msra.mxu0 0
    %2518 = vmatprep.subr.bf16.mxu0 0
    %2519 = vmatpush1.bf16.msra.mxu0 0
    %2520 = vmatprep.subr.bf16.mxu0 0
    %2521 = vmatpush1.bf16.msra.mxu0 0
    %2522 = vmatprep.mubr.bf16.mxu0 0
    %2523 = vmatmul.mubr.bf16.gmra.mrb[0].mxu0 %v2488
    %v2524 = vpop.f32.mrb[0].mxu0
    %v2525 = vadd.f32 %v2473, %v2524
    %v2526 = vpop.f32.mrb[0].mxu0
    %v2527 = vpop.f32.mrb[0].mxu0
    %v2528 = vadd.f32 %v2473, %v2527
    %v2529 = vpop.f32.mrb[0].mxu0
    %2530 = vdwg.mxu0
    %v2531 = vmax.f32 %v2525, 0.0
    %v2532 = vmax.f32 %v2528, 0.0
    %v2533 = vpack.c.bf16 %v2532, %v2531
    %s2534 = scalar_lea.vmem %s8, 64
    %v2535 = vld [vmem:[%s2534] sm:$0xf]
    %v2536 = vld [vmem:[%s2534 + $0x4] sm:$0xf]
    %v2537 = vld [vmem:[%s2534 + $0x8] sm:$0xf]
    %v2538 = vld [vmem:[%s2534 + $0xc] sm:$0xf]
    %v2539 = vld [vmem:[%s2534 + $0x10] sm:$0xf]
    %v2540 = vld [vmem:[%s2534 + $0x14] sm:$0xf]
    %v2541 = vld [vmem:[%s2534 + $0x18] sm:$0xf]
    %v2542 = vld [vmem:[%s2534 + $0x1c] sm:$0xf]
    %v2543 = vld [vmem:[%s2534 + $0x20] sm:$0xf]
    %v2544 = vld [vmem:[%s2534 + $0x24] sm:$0xf]
    %v2545 = vld [vmem:[%s2534 + $0x28] sm:$0xf]
    %v2546 = vld [vmem:[%s2534 + $0x2c] sm:$0xf]
    %v2547 = vld [vmem:[%s2534 + $0x30] sm:$0xf]
    %v2548 = vld [vmem:[%s2534 + $0x34] sm:$0xf]
    %v2549 = vld [vmem:[%s2534 + $0x38] sm:$0xf]
    %v2550 = vld [vmem:[%s2534 + $0x3c] sm:$0xf]
    %s2551 = scalar_lea.vmem %s9, 1
    %v2552 = vld [vmem:[%s2551] sm:$0x1]
    %v2554 = vlaneseq
    %v2555 = vshrl.u32 %v2554, 7
    %v2556 = vsub.s32 0, %v2555
    %v2557 = vrot.slane %v2552, %v2556
    %v2575 = vunpack.c.l.b16 %v2535
    %v2576 = vunpack.c.l.b16 %v2536
    %v2577 = vunpack.c.l.b16 %v2537
    %v2578 = vunpack.c.l.b16 %v2538
    %v2579 = vunpack.c.l.b16 %v2539
    %v2580 = vunpack.c.l.b16 %v2540
    %v2581 = vunpack.c.l.b16 %v2541
    %v2582 = vunpack.c.l.b16 %v2542
    %v2583 = vunpack.c.l.b16 %v2543
    %v2584 = vunpack.c.l.b16 %v2544
    %v2585 = vunpack.c.l.b16 %v2545
    %v2586 = vunpack.c.l.b16 %v2546
    %v2587 = vunpack.c.l.b16 %v2547
    %v2588 = vunpack.c.l.b16 %v2548
    %v2589 = vunpack.c.l.b16 %v2549
    %v2590 = vunpack.c.l.b16 %v2550
    %v2591 = vpack.c.b16 %v2576, %v2575
    %v2592 = vpack.c.b16 %v2578, %v2577
    %v2593 = vpack.c.b16 %v2580, %v2579
    %v2594 = vpack.c.b16 %v2582, %v2581
    %v2595 = vpack.c.b16 %v2584, %v2583
    %v2596 = vpack.c.b16 %v2586, %v2585
    %v2597 = vpack.c.b16 %v2588, %v2587
    %v2598 = vpack.c.b16 %v2590, %v2589
    %2607 = vmatprep.subr.bf16.mxu0 0
    %2608 = vmatpush1.bf16.msra.mxu0 %v2591
    %2609 = vmatprep.subr.bf16.mxu0 0
    %2610 = vmatpush1.bf16.msra.mxu0 %v2592
    %2611 = vmatprep.subr.bf16.mxu0 0
    %2612 = vmatpush1.bf16.msra.mxu0 %v2593
    %2613 = vmatprep.subr.bf16.mxu0 0
    %2614 = vmatpush1.bf16.msra.mxu0 %v2594
    %2615 = vmatprep.subr.bf16.mxu0 0
    %2616 = vmatpush1.bf16.msra.mxu0 %v2595
    %2617 = vmatprep.subr.bf16.mxu0 0
    %2618 = vmatpush1.bf16.msra.mxu0 %v2596
    %2619 = vmatprep.subr.bf16.mxu0 0
    %2620 = vmatpush1.bf16.msra.mxu0 %v2597
    %2621 = vmatprep.subr.bf16.mxu0 0
    %2622 = vmatpush1.bf16.msra.mxu0 %v2598
    %2623 = vmatprep.subr.bf16.mxu0 0
    %2624 = vmatpush1.bf16.msra.mxu0 0
    %2625 = vmatprep.subr.bf16.mxu0 0
    %2626 = vmatpush1.bf16.msra.mxu0 0
    %2627 = vmatprep.subr.bf16.mxu0 0
    %2628 = vmatpush1.bf16.msra.mxu0 0
    %2629 = vmatprep.subr.bf16.mxu0 0
    %2630 = vmatpush1.bf16.msra.mxu0 0
    %2631 = vmatprep.subr.bf16.mxu0 0
    %2632 = vmatpush1.bf16.msra.mxu0 0
    %2633 = vmatprep.subr.bf16.mxu0 0
    %2634 = vmatpush1.bf16.msra.mxu0 0
    %2635 = vmatprep.subr.bf16.mxu0 0
    %2636 = vmatpush1.bf16.msra.mxu0 0
    %2637 = vmatprep.subr.bf16.mxu0 0
    %2638 = vmatpush1.bf16.msra.mxu0 0
    %2639 = vmatprep.mubr.bf16.mxu0 0
    %2640 = vmatmul.mubr.bf16.gmra.mrb[0].mxu0 %v2533
    %v2641 = vpop.f32.mrb[0].mxu0
    %v2642 = vadd.f32 %v2557, %v2641
    %v2643 = vpop.f32.mrb[0].mxu0
    %v2644 = vpop.f32.mrb[0].mxu0
    %v2645 = vadd.f32 %v2557, %v2644
    %v2646 = vpop.f32.mrb[0].mxu0
    %2647 = vdwg.mxu0
    %v2648 = vadd.f32 %v2642, %v2459
    %v2649 = vadd.f32 %v2645, %v2460
    %s2650 = scalar_lea.vmem %s10, 1
    %v2651 = vld [vmem:[%s2650] sm:$0x1]
    %s2652 = scalar_lea.vmem %s11, 1
    %v2653 = vld [vmem:[%s2652] sm:$0x1]
    %v2654 = vsel %vm68, %v2648, 0.0
    %2655 = vadd.xlane.f32.xlu0 %v2654
    %v2656 = vpop.xlane.xlu0 %2655
    %v2657 = vsel %vm68, %v2649, 0.0
    %2658 = vadd.xlane.f32.xlu0 %v2657
    %v2659 = vpop.xlane.xlu0 %2658
    %v2660 = vmul.f32 %v2656, %v1105
    %v2661 = vmul.f32 %v2659, %v1105
    %v2662 = vsub.f32 %v2648, %v2660
    %v2663 = vsub.f32 %v2649, %v2661
    %v2664 = vmul.f32 %v2662, %v2662
    %v2665 = vmul.f32 %v2663, %v2663
    %v2666 = vsel %vm68, %v2664, 0.0
    %2667 = vadd.xlane.f32.xlu0 %v2666
    %v2668 = vpop.xlane.xlu0 %2667
    %v2669 = vsel %vm68, %v2665, 0.0
    %2670 = vadd.xlane.f32.xlu0 %v2669
    %v2671 = vpop.xlane.xlu0 %2670
    %v2672 = vmul.f32 %v2668, %v1105
    %v2673 = vmul.f32 %v2671, %v1105
    %v2674 = vadd.f32 %v2672, 1e-05
    %v2675 = vadd.f32 %v2673, 1e-05
    %v2676 = vrsqrt.pop %v2674
    %v2677 = vrsqrt.pop %v2675
    %v2678 = vmul.f32 %v2662, %v2676
    %v2679 = vmul.f32 %v2663, %v2677
    %v2681 = vlaneseq
    %v2682 = vshrl.u32 %v2681, 7
    %v2683 = vsub.s32 0, %v2682
    %v2684 = vrot.slane %v2651, %v2683
    %v2686 = vmul.f32 %v2678, %v2684
    %v2687 = vmul.f32 %v2679, %v2684
    %v2689 = vlaneseq
    %v2690 = vshrl.u32 %v2689, 7
    %v2691 = vsub.s32 0, %v2690
    %v2692 = vrot.slane %v2653, %v2691
    %v2694 = vadd.f32 %v2686, %v2692
    %v2695 = vadd.f32 %v2687, %v2692
    %v2696 = vsel %vm68, %v2694, 0.0
    %v2697 = vrot.slane %v2696, 4
    %v2698 = vadd.f32 %v2696, %v2697
    %v2699 = vrot.slane %v2698, 2
    %v2700 = vadd.f32 %v2698, %v2699
    %v2701 = vrot.slane %v2700, 1
    %v2702 = vadd.f32 %v2700, %v2701
    %v2703 = vsel %vm68, %v2695, 0.0
    %v2704 = vrot.slane %v2703, 4
    %v2705 = vadd.f32 %v2703, %v2704
    %v2706 = vrot.slane %v2705, 2
    %v2707 = vadd.f32 %v2705, %v2706
    %v2708 = vrot.slane %v2707, 1
    %v2709 = vadd.f32 %v2707, %v2708
    %v2710 = vmul.f32 %v2702, 0.125
    %v2711 = vmul.f32 %v2709, 0.125
    %v2712 = vpack.c.bf16 %v2710, %v2710
    %v2713 = vpack.c.bf16 %v2711, %v2711
    %v2714 = vld [vmem:[%s12] sm:$0xf]
    %v2715 = vld [vmem:[%s12 + $0x4] sm:$0xf]
    %v2716 = vld [vmem:[%s12 + $0x8] sm:$0xf]
    %v2717 = vld [vmem:[%s12 + $0xc] sm:$0xf]
    %v2718 = vld [vmem:[%s13] sm:$0x1]
    %v2720 = vlaneseq
    %v2721 = vshrl.u32 %v2720, 7
    %v2722 = vsub.s32 0, %v2721
    %v2723 = vrot.slane %v2718, %v2722
    %v2727 = vunpack.c.l.b16 %v2712
    %v2728 = vunpack.c.l.b16 %v2713
    %vm2729 = vcmask 1041409
    %v2730 = vsel %vm2729, %v2728, %v2727
    %v2731 = vpack.c.b16 %v2730, %v2730
    %v2736 = vunpack.c.l.b16 %v2714
    %v2737 = vunpack.c.l.b16 %v2715
    %v2738 = vunpack.c.l.b16 %v2716
    %v2739 = vunpack.c.l.b16 %v2717
    %v2740 = vpack.c.b16 %v2737, %v2736
    %v2741 = vpack.c.b16 %v2739, %v2738
    %v2745 = vsel %vm68, %v2731, 0
    %2747 = vmatprep.subr.bf16.mxu0 0
    %2748 = vmatpush1.bf16.msra.mxu0 %v2740
    %2749 = vmatprep.subr.bf16.mxu0 0
    %2750 = vmatpush1.bf16.msra.mxu0 %v2741
    %2751 = vmatprep.subr.bf16.mxu0 0
    %2752 = vmatpush1.bf16.msra.mxu0 0
    %2753 = vmatprep.subr.bf16.mxu0 0
    %2754 = vmatpush1.bf16.msra.mxu0 0
    %2755 = vmatprep.subr.bf16.mxu0 0
    %2756 = vmatpush1.bf16.msra.mxu0 0
    %2757 = vmatprep.subr.bf16.mxu0 0
    %2758 = vmatpush1.bf16.msra.mxu0 0
    %2759 = vmatprep.subr.bf16.mxu0 0
    %2760 = vmatpush1.bf16.msra.mxu0 0
    %2761 = vmatprep.subr.bf16.mxu0 0
    %2762 = vmatpush1.bf16.msra.mxu0 0
    %2763 = vmatprep.subr.bf16.mxu0 0
    %2764 = vmatpush1.bf16.msra.mxu0 0
    %2765 = vmatprep.subr.bf16.mxu0 0
    %2766 = vmatpush1.bf16.msra.mxu0 0
    %2767 = vmatprep.subr.bf16.mxu0 0
    %2768 = vmatpush1.bf16.msra.mxu0 0
    %2769 = vmatprep.subr.bf16.mxu0 0
    %2770 = vmatpush1.bf16.msra.mxu0 0
    %2771 = vmatprep.subr.bf16.mxu0 0
    %2772 = vmatpush1.bf16.msra.mxu0 0
    %2773 = vmatprep.subr.bf16.mxu0 0
    %2774 = vmatpush1.bf16.msra.mxu0 0
    %2775 = vmatprep.subr.bf16.mxu0 0
    %2776 = vmatpush1.bf16.msra.mxu0 0
    %2777 = vmatprep.subr.bf16.mxu0 0
    %2778 = vmatpush1.bf16.msra.mxu0 0
    %2779 = vmatprep.mubr.bf16.mxu0 0
    %2780 = vmatmul.mubr.bf16.gmra.mrb[0].mxu0 %v2745
    %v2781 = vpop.f32.mrb[0].mxu0
    %v2782 = vadd.f32 %v2723, %v2781
    %v2783 = vpop.f32.mrb[0].mxu0
    %v2784 = vpop.f32.mrb[0].mxu0
    %v2785 = vpop.f32.mrb[0].mxu0
    %2786 = vdwg.mxu0
    %vm2787 = vcmask 1041408
    %v2788 = vsel %vm2787, %v2782, -inf
    %2789 = vmax.xlane.f32.xlu0 %v2788
    %v2790 = vpop.xlane.xlu0 %2789
    %v2791 = vsub.f32 %v2782, %v2790
    %v2792 = vmul.f32 %v2791, 1.442695
    %v2793 = vpow.pop %v2792
    %v2794 = vsel %vm2787, %v2793, 0.0
    %2795 = vadd.xlane.f32.xlu0 %v2794
    %v2796 = vpop.xlane.xlu0 %2795
    %v2797 = vrcp.pop %v2796
    %v2798 = vmul.f32 %v2793, %v2797
    %2799 = vst [vmem:[#allocation2] sm:$0x3] %v2798
    // Predicated region
    $region58: #{tpu_custom_call.1} parent=1 // pred_check
      _
    $region59: #{tpu_custom_call.1} parent=1 // pred_check_branch
      %2801 = sbr.rel (0) target = $region61
    $region60: #{tpu_custom_call.1} parent=1 // pred_region
      %s2803 = ssub.s32 32, 32
      %2804 = vsyncadd [#allocation3], %s2803
      %s2806 = sshll.u32 [#allocation2], 4
      %s2807 = int_to_ptr.vmem [resolvable:$true] %s2806
      %2809 = dma.vmem_to_hbm [thread:$0]  %s2807, 32, %s14, [#allocation3]
    $region61: #{tpu_custom_call.1} parent=1 // pred_fallthru
      _
    // Predicated region
    $region62: #{tpu_custom_call.1} parent=1 // pred_check
      _
    $region63: #{tpu_custom_call.1} parent=1 // pred_check_branch
      %2811 = sbr.rel (0) target = $region65
    $region64: #{tpu_custom_call.1} parent=1 // pred_region
      %2812 = dma.done [#allocation3], 32
    $region65: #{tpu_custom_call.1} parent=1 // pred_fallthru
      _
    %2813 = vsyncpa [#allocation3], 1

</llo_original>
